<compile_context>
chip_gen: v6e
topology: v6e:2x2x1
jax: 0.10.0
libtpu: 0.0.40
codegen_flags: <defaults>
</compile_context>

<pallas_src>
import functools

import jax
import jax.numpy as jnp
from jax.experimental import pallas as pl
from jax.experimental.pallas import tpu as pltpu

# --- config (matches the PyTorch module) -----------------------------------
EMB_DIM = 64
NUM_CATE = 72
VOCAB = NUM_CATE + 1            # 73
VAE = 256
DIM1 = 1024
DIM2 = 256
N_CAT = 11                      # x[:, 0:11]  -> category indices
N_LEAF = 10                     # x[:, 11:]   -> 10 * 256 VAE features
EMB_COLS = N_CAT * EMB_DIM      # 704
VAE_COLS = N_LEAF * EMB_DIM     # 640
LEAF_COLS = N_LEAF * VAE        # 2560
FC1_IN = EMB_COLS + VAE_COLS    # 1344
PAIR_COLS = 2 * VAE             # 512  leaf columns consumed per paired dot
PAIR_OUT = 2 * EMB_DIM          # 128  output columns per paired dot (1 vreg)
N_PAIR = N_LEAF // 2            # 5


def _round_up(n, m):
    return ((n + m - 1) // m) * m


def _device_defaults():
    """(batch-tile cap, vmem_limit_bytes) per TPU generation."""
    try:
        kind = jax.devices()[0].device_kind.lower()
    except Exception:
        kind = ""
    if "v7" in kind:
        # v7x: 64 MiB physical VMEM, 2 TCs -> smaller per-TC tile, default scoped budget.
        return 256, 32 << 20
    if "v5" in kind or "v6" in kind:
        # v5e / v6e: 128 MiB VMEM -> larger tiles amortize per-step overhead.
        return 512, 64 << 20
    return 256, 32 << 20        # conservative default for anything else


def _default_bm(B):
    cap, _ = _device_defaults()
    B8 = _round_up(max(B, 1), 8)
    if B >= 16:
        # At least two batch tiles so dual-TC chips (v7x) split work across cores.
        return min(cap, _round_up(-(-B8 // 2), 8))
    return min(cap, B8)


def _forward_kernel(emb_ref, leaf_ref, wv2_ref, w1a_ref, w1b_ref, b1_ref,
                    w2_ref, b2_ref, w3_ref, b3_ref, o_ref):
    # emb_ref : [Bm, 704]  bf16    flattened embedding of the 11 categories
    # leaf_ref: [Bm, 2560] bf16    10 VAE slots, 256 cols each (lane aligned)
    # wv2_ref : [512, 128] bf16    block_diag(wv, wv)  (bias folded into b1)
    # w1a_ref : [704, 1024] bf16   fc1 weight, embedding half
    # w1b_ref : [640, 1024] bf16   fc1 weight, vae half (flattened)
    # b1_ref  : [1, 1024]  f32     fc1 bias + folded vaeencoder bias
    # w2_ref  : [1024, 256] bf16   b2_ref: [1, 256] f32
    # w3_ref  : [1, 256]   f32     linear_out weight as a row
    # b3_ref  : [1, 1]     f32
    # o_ref   : [Bm, 1]    f32

    # fc1 contribution from the embedding half of the concat (K=704).
    h1 = jnp.dot(emb_ref[...], w1a_ref[...], preferred_element_type=jnp.float32)

    # vaeencoder: 5 paired dots against block_diag(wv, wv) -> each output is a
    # full 128-lane vreg; concat at 128-column boundaries, then one K=640 dot
    # against the flattened fc1 vae-half weight.
    leaf = leaf_ref[...]
    parts = [
        jnp.dot(leaf[:, g * PAIR_COLS:(g + 1) * PAIR_COLS], wv2_ref[...],
                preferred_element_type=jnp.float32)
        for g in range(N_PAIR)
    ]
    vae = jnp.concatenate(parts, axis=-1).astype(jnp.bfloat16)       # [Bm, 640]
    h1 = h1 + jnp.dot(vae, w1b_ref[...], preferred_element_type=jnp.float32)

    h1 = jnp.maximum(h1 + b1_ref[...], 0.0)                          # relu(fc1), f32

    h2 = jnp.dot(h1.astype(jnp.bfloat16), w2_ref[...],
                 preferred_element_type=jnp.float32) + b2_ref[...]
    h2 = jnp.maximum(h2, 0.0)                                        # relu(fc2), f32

    # linear_out (N=1): VPU multiply + lane reduce instead of an MXU matmul.
    o_ref[...] = jnp.sum(h2 * w3_ref[...], axis=-1, keepdims=True) + b3_ref[...]


@functools.partial(jax.jit, static_argnames=("bm",))
def user_preference_estimator_forward(x, kparams, bm=None):
    """x: [B, 11 + 10*256] f32 (first 11 columns hold integer category ids)."""
    B = x.shape[0]

    Bm = bm if bm is not None else _default_bm(B)
    B_pad = _round_up(max(B, 1), Bm)
    pad = B_pad - B
    _, vmem_limit = _device_defaults()

    # glue: embedding gather (pure indexing) — kernel does everything else.
    # Pad the tiny int id array BEFORE the gather so emb_flat is produced
    # padded & bf16 in one shot (padded rows read table row 0; sliced off).
    cat = x[:, :N_CAT].astype(jnp.int32)
    if pad:
        cat = jnp.pad(cat, ((0, pad), (0, 0)))
    emb_flat = kparams["embedding"][cat].reshape(B_pad, EMB_COLS)     # bf16 [B_pad, 704]

    # leaf: single slice + bf16 cast (+ pad) producer expression — streamed bf16.
    if pad:
        leaf = jnp.pad(x[:, N_CAT:].astype(jnp.bfloat16), ((0, pad), (0, 0)))
    else:
        leaf = x[:, N_CAT:].astype(jnp.bfloat16)                      # [B_pad, 2560]

    grid = (B_pad // Bm,)

    def batched(cols):                       # blocked along batch
        return pl.BlockSpec((Bm, cols), lambda i: (i, 0))

    def resident(shape):                     # same block every step -> stays in VMEM
        return pl.BlockSpec(shape, lambda i: (0, 0))

    out = pl.pallas_call(
        _forward_kernel,
        out_shape=jax.ShapeDtypeStruct((B_pad, 1), jnp.float32),
        grid=grid,
        in_specs=[
            batched(EMB_COLS),               # emb_flat (bf16)
            batched(LEAF_COLS),              # leaf (bf16)
            resident((PAIR_COLS, PAIR_OUT)), # wv2 = block_diag(wv, wv)
            resident((EMB_COLS, DIM1)),      # w1a
            resident((VAE_COLS, DIM1)),      # w1b (flattened)
            resident((1, DIM1)),             # b1 (folded)
            resident((DIM1, DIM2)),          # w2
            resident((1, DIM2)),             # b2
            resident((1, DIM2)),             # w3 row
            resident((1, 1)),                # b3
        ],
        out_specs=pl.BlockSpec((Bm, 1), lambda i: (i, 0)),
        compiler_params=pltpu.CompilerParams(
            dimension_semantics=("parallel",),
            vmem_limit_bytes=vmem_limit,
        ),
    )(emb_flat, leaf,
      kparams["wv2"], kparams["w1a"], kparams["w1b"], kparams["b1"],
      kparams["w2"], kparams["b2"], kparams["w3"], kparams["b3"])
    return out[:B]


# --- parameters -------------------------------------------------------------
def init_params(key):
    """f32 parameters in math layout: y = x @ W + b (mirrors the PyTorch module)."""
    ks = jax.random.split(key, 9)

    def w(k, shape, scale=0.02):
        return (scale * jax.random.normal(k, shape)).astype(jnp.float32)

    return dict(
        embedding=w(ks[0], (VOCAB, EMB_DIM), 0.1),     # nn.Embedding(73, 64)
        wv=w(ks[1], (VAE, EMB_DIM)), bv=w(ks[2], (1, EMB_DIM)),   # vaeencoder
        w1=w(ks[3], (FC1_IN, DIM1)), b1=w(ks[4], (1, DIM1)),      # fc1
        w2=w(ks[5], (DIM1, DIM2)), b2=w(ks[6], (1, DIM2)),        # fc2
        w3=w(ks[7], (DIM2, 1)), b3=w(ks[8], (1, 1)),              # linear_out
    )


def prepare_kernel_params(p):
    """Kernel-ready params: bf16 weights/table, paired block-diag vae weight,
    split/flattened fc1, folded vae bias."""
    bf = lambda a: a.astype(jnp.bfloat16)
    w1a = p["w1"][:EMB_COLS]                 # [704, 1024]
    w1b = p["w1"][EMB_COLS:]                 # [640, 1024]
    # fold vaeencoder bias into fc1 bias: bias contribution of slot i is
    # bv @ w1b[i*64:(i+1)*64], i.e. tile(bv, 10) @ w1b_flat.
    b1_folded = p["b1"] + jnp.tile(p["bv"], (1, N_LEAF)) @ w1b
    # paired block-diagonal vae weight: [512, 128] so each dot fills a 128-lane
    # output vreg (two slots per dot, 5 dots total).
    wv = p["wv"]
    z = jnp.zeros_like(wv)
    wv2 = jnp.concatenate(
        [jnp.concatenate([wv, z], axis=1),
         jnp.concatenate([z, wv], axis=1)], axis=0)                  # [512, 128]
    return dict(
        embedding=bf(p["embedding"]),        # bf16 table -> bf16 gather output
        wv2=bf(wv2),
        w1a=bf(w1a),
        w1b=bf(w1b),
        b1=b1_folded.astype(jnp.float32),
        w2=bf(p["w2"]),
        b2=p["b2"].astype(jnp.float32),
        w3=p["w3"].reshape(1, DIM2).astype(jnp.float32),
        b3=p["b3"].astype(jnp.float32),
    )


def reference_forward(x, p):
    """Pure-JAX f32 reference mirroring the PyTorch module exactly."""
    B = x.shape[0]
    cat = x[:, :N_CAT].astype(jnp.int32)
    leaf = x[:, N_CAT:].reshape(B, N_LEAF, VAE)
    out = p["embedding"][cat].reshape(B, EMB_COLS)
    out2 = (leaf @ p["wv"] + p["bv"][0]).reshape(B, VAE_COLS)
    h = jnp.concatenate([out, out2], axis=1)
    h = jax.nn.relu(h @ p["w1"] + p["b1"][0])
    h = jax.nn.relu(h @ p["w2"] + p["b2"][0])
    return h @ p["w3"] + p["b3"][0]


if __name__ == "__main__":
    key = jax.random.PRNGKey(0)
    k_param, k_cat, k_leaf, k_cat2, k_leaf2 = jax.random.split(key, 5)

    params = init_params(k_param)
    kparams = prepare_kernel_params(params)

    def make_x(kc, kl, B):
        cat_ids = jax.random.randint(kc, (B, N_CAT), 0, VOCAB)
        leaf_feats = jax.random.normal(kl, (B, N_LEAF * VAE), dtype=jnp.float32)
        return jnp.concatenate([cat_ids.astype(jnp.float32), leaf_feats], axis=1)

    # single-tile case (B=8 -> Bm=8, grid=(1,))
    x = make_x(k_cat, k_leaf, 8)                       # [8, 2571]
    y = jax.block_until_ready(user_preference_estimator_forward(x, kparams))
    y_ref = reference_forward(x, params)
    assert y.shape == (8, 1)
    assert jnp.all(jnp.isfinite(y))
    assert jnp.allclose(y, y_ref, rtol=2e-2, atol=2e-2), (y, y_ref)

    # multi-tile + padding case (B=20, bm=8 -> B_pad=24, grid=(3,))
    x2 = make_x(k_cat2, k_leaf2, 20)
    y2 = jax.block_until_ready(user_preference_estimator_forward(x2, kparams, bm=8))
    y2_ref = reference_forward(x2, params)
    assert y2.shape == (20, 1)
    assert jnp.all(jnp.isfinite(y2))
    assert jnp.allclose(y2, y2_ref, rtol=2e-2, atol=2e-2), (y2, y2_ref)

    print("KERNEL_OK")
</pallas_src>

<mosaic_0001>
module attributes {stable_mosaic.version = 11 : i64} {
  func.func @_forward_kernel(%arg0: i32, %arg1: memref<8x704xbf16, #tpu.memory_space<vmem>>, %arg2: memref<8x2560xbf16, #tpu.memory_space<vmem>>, %arg3: memref<512x128xbf16, #tpu.memory_space<vmem>>, %arg4: memref<704x1024xbf16, #tpu.memory_space<vmem>>, %arg5: memref<640x1024xbf16, #tpu.memory_space<vmem>>, %arg6: memref<1x1024xf32, #tpu.memory_space<vmem>>, %arg7: memref<1024x256xbf16, #tpu.memory_space<vmem>>, %arg8: memref<1x256xf32, #tpu.memory_space<vmem>>, %arg9: memref<1x256xf32, #tpu.memory_space<vmem>>, %arg10: memref<1x1xf32, #tpu.memory_space<vmem>>, %arg11: memref<8x1xf32, #tpu.memory_space<vmem>>) attributes {dimension_semantics = [#tpu.dimension_semantics<parallel>], iteration_bounds = array<i64: 1>, scalar_prefetch = 0 : i64, scratch_operands = 0 : i64, tpu.core_type = #tpu.core_type<tc>, window_params = [{transform_indices = @transform_0, window_bounds = array<i64: 8, 704>}, {transform_indices = @transform_1, window_bounds = array<i64: 8, 2560>}, {pipeline_mode = #tpu.pipeline_mode<synchronous>, transform_indices = @transform_2, window_bounds = array<i64: 512, 128>}, {pipeline_mode = #tpu.pipeline_mode<synchronous>, transform_indices = @transform_3, window_bounds = array<i64: 704, 1024>}, {pipeline_mode = #tpu.pipeline_mode<synchronous>, transform_indices = @transform_4, window_bounds = array<i64: 640, 1024>}, {pipeline_mode = #tpu.pipeline_mode<synchronous>, transform_indices = @transform_5, window_bounds = array<i64: 1, 1024>}, {pipeline_mode = #tpu.pipeline_mode<synchronous>, transform_indices = @transform_6, window_bounds = array<i64: 1024, 256>}, {pipeline_mode = #tpu.pipeline_mode<synchronous>, transform_indices = @transform_7, window_bounds = array<i64: 1, 256>}, {pipeline_mode = #tpu.pipeline_mode<synchronous>, transform_indices = @transform_8, window_bounds = array<i64: 1, 256>}, {pipeline_mode = #tpu.pipeline_mode<synchronous>, transform_indices = @transform_9, window_bounds = array<i64: 1, 1>}, {transform_indices = @transform_10, window_bounds = array<i64: 8, 1>}]} {
    %c0 = arith.constant 0 : index
    %c0_0 = arith.constant 0 : index
    %0 = vector.load %arg1[%c0, %c0_0] : memref<8x704xbf16, #tpu.memory_space<vmem>>, vector<8x704xbf16>
    %c0_1 = arith.constant 0 : index
    %c0_2 = arith.constant 0 : index
    %1 = vector.load %arg4[%c0_1, %c0_2] : memref<704x1024xbf16, #tpu.memory_space<vmem>>, vector<704x1024xbf16>
    %cst = arith.constant dense<0.000000e+00> : vector<8x1024xf32>
    %2 = tpu.matmul %0, %1, %cst {dimension_numbers = #tpu.dot_dimension_numbers<[1], [0], [0], [1], [0, 0, 1, 1], [], []>} : vector<8x704xbf16>, vector<704x1024xbf16>, vector<8x1024xf32> -> vector<8x1024xf32>
    %c0_3 = arith.constant 0 : index
    %c0_4 = arith.constant 0 : index
    %3 = vector.load %arg2[%c0_3, %c0_4] : memref<8x2560xbf16, #tpu.memory_space<vmem>>, vector<8x2560xbf16>
    %4 = vector.extract_strided_slice %3 {offsets = [0, 0], sizes = [8, 512], strides = [1, 1]} : vector<8x2560xbf16> to vector<8x512xbf16>
    %c0_5 = arith.constant 0 : index
    %c0_6 = arith.constant 0 : index
    %5 = vector.load %arg3[%c0_5, %c0_6] : memref<512x128xbf16, #tpu.memory_space<vmem>>, vector<512x128xbf16>
    %cst_7 = arith.constant dense<0.000000e+00> : vector<8x128xf32>
    %6 = tpu.matmul %4, %5, %cst_7 {dimension_numbers = #tpu.dot_dimension_numbers<[1], [0], [0], [1], [0, 0, 1, 1], [], []>} : vector<8x512xbf16>, vector<512x128xbf16>, vector<8x128xf32> -> vector<8x128xf32>
    %7 = vector.extract_strided_slice %3 {offsets = [0, 512], sizes = [8, 512], strides = [1, 1]} : vector<8x2560xbf16> to vector<8x512xbf16>
    %c0_8 = arith.constant 0 : index
    %c0_9 = arith.constant 0 : index
    %8 = vector.load %arg3[%c0_8, %c0_9] : memref<512x128xbf16, #tpu.memory_space<vmem>>, vector<512x128xbf16>
    %cst_10 = arith.constant dense<0.000000e+00> : vector<8x128xf32>
    %9 = tpu.matmul %7, %8, %cst_10 {dimension_numbers = #tpu.dot_dimension_numbers<[1], [0], [0], [1], [0, 0, 1, 1], [], []>} : vector<8x512xbf16>, vector<512x128xbf16>, vector<8x128xf32> -> vector<8x128xf32>
    %10 = vector.extract_strided_slice %3 {offsets = [0, 1024], sizes = [8, 512], strides = [1, 1]} : vector<8x2560xbf16> to vector<8x512xbf16>
    %c0_11 = arith.constant 0 : index
    %c0_12 = arith.constant 0 : index
    %11 = vector.load %arg3[%c0_11, %c0_12] : memref<512x128xbf16, #tpu.memory_space<vmem>>, vector<512x128xbf16>
    %cst_13 = arith.constant dense<0.000000e+00> : vector<8x128xf32>
    %12 = tpu.matmul %10, %11, %cst_13 {dimension_numbers = #tpu.dot_dimension_numbers<[1], [0], [0], [1], [0, 0, 1, 1], [], []>} : vector<8x512xbf16>, vector<512x128xbf16>, vector<8x128xf32> -> vector<8x128xf32>
    %13 = vector.extract_strided_slice %3 {offsets = [0, 1536], sizes = [8, 512], strides = [1, 1]} : vector<8x2560xbf16> to vector<8x512xbf16>
    %c0_14 = arith.constant 0 : index
    %c0_15 = arith.constant 0 : index
    %14 = vector.load %arg3[%c0_14, %c0_15] : memref<512x128xbf16, #tpu.memory_space<vmem>>, vector<512x128xbf16>
    %cst_16 = arith.constant dense<0.000000e+00> : vector<8x128xf32>
    %15 = tpu.matmul %13, %14, %cst_16 {dimension_numbers = #tpu.dot_dimension_numbers<[1], [0], [0], [1], [0, 0, 1, 1], [], []>} : vector<8x512xbf16>, vector<512x128xbf16>, vector<8x128xf32> -> vector<8x128xf32>
    %16 = vector.extract_strided_slice %3 {offsets = [0, 2048], sizes = [8, 512], strides = [1, 1]} : vector<8x2560xbf16> to vector<8x512xbf16>
    %c0_17 = arith.constant 0 : index
    %c0_18 = arith.constant 0 : index
    %17 = vector.load %arg3[%c0_17, %c0_18] : memref<512x128xbf16, #tpu.memory_space<vmem>>, vector<512x128xbf16>
    %cst_19 = arith.constant dense<0.000000e+00> : vector<8x128xf32>
    %18 = tpu.matmul %16, %17, %cst_19 {dimension_numbers = #tpu.dot_dimension_numbers<[1], [0], [0], [1], [0, 0, 1, 1], [], []>} : vector<8x512xbf16>, vector<512x128xbf16>, vector<8x128xf32> -> vector<8x128xf32>
    %19 = tpu.concatenate %6, %9, %12, %15, %18 in 1 : vector<8x128xf32>, vector<8x128xf32>, vector<8x128xf32>, vector<8x128xf32>, vector<8x128xf32> -> vector<8x640xf32>
    %20 = arith.truncf %19 : vector<8x640xf32> to vector<8x640xbf16>
    %c0_20 = arith.constant 0 : index
    %c0_21 = arith.constant 0 : index
    %21 = vector.load %arg5[%c0_20, %c0_21] : memref<640x1024xbf16, #tpu.memory_space<vmem>>, vector<640x1024xbf16>
    %cst_22 = arith.constant dense<0.000000e+00> : vector<8x1024xf32>
    %22 = tpu.matmul %20, %21, %cst_22 {dimension_numbers = #tpu.dot_dimension_numbers<[1], [0], [0], [1], [0, 0, 1, 1], [], []>} : vector<8x640xbf16>, vector<640x1024xbf16>, vector<8x1024xf32> -> vector<8x1024xf32>
    %23 = arith.addf %2, %22 : vector<8x1024xf32>
    %c0_23 = arith.constant 0 : index
    %c0_24 = arith.constant 0 : index
    %24 = vector.load %arg6[%c0_23, %c0_24] : memref<1x1024xf32, #tpu.memory_space<vmem>>, vector<1x1024xf32>
    %25 = vector.broadcast %24 : vector<1x1024xf32> to vector<8x1024xf32>
    %26 = arith.addf %23, %25 : vector<8x1024xf32>
    %cst_25 = arith.constant 0.000000e+00 : f32
    %27 = vector.broadcast %cst_25 : f32 to vector<8x1024xf32>
    %28 = arith.maximumf %26, %27 : vector<8x1024xf32>
    %29 = arith.truncf %28 : vector<8x1024xf32> to vector<8x1024xbf16>
    %c0_26 = arith.constant 0 : index
    %c0_27 = arith.constant 0 : index
    %30 = vector.load %arg7[%c0_26, %c0_27] : memref<1024x256xbf16, #tpu.memory_space<vmem>>, vector<1024x256xbf16>
    %cst_28 = arith.constant dense<0.000000e+00> : vector<8x256xf32>
    %31 = tpu.matmul %29, %30, %cst_28 {dimension_numbers = #tpu.dot_dimension_numbers<[1], [0], [0], [1], [0, 0, 1, 1], [], []>} : vector<8x1024xbf16>, vector<1024x256xbf16>, vector<8x256xf32> -> vector<8x256xf32>
    %c0_29 = arith.constant 0 : index
    %c0_30 = arith.constant 0 : index
    %32 = vector.load %arg8[%c0_29, %c0_30] : memref<1x256xf32, #tpu.memory_space<vmem>>, vector<1x256xf32>
    %33 = vector.broadcast %32 : vector<1x256xf32> to vector<8x256xf32>
    %34 = arith.addf %31, %33 : vector<8x256xf32>
    %cst_31 = arith.constant 0.000000e+00 : f32
    %35 = vector.broadcast %cst_31 : f32 to vector<8x256xf32>
    %36 = arith.maximumf %34, %35 : vector<8x256xf32>
    %c0_32 = arith.constant 0 : index
    %c0_33 = arith.constant 0 : index
    %37 = vector.load %arg9[%c0_32, %c0_33] : memref<1x256xf32, #tpu.memory_space<vmem>>, vector<1x256xf32>
    %38 = vector.broadcast %37 : vector<1x256xf32> to vector<8x256xf32>
    %39 = arith.mulf %36, %38 : vector<8x256xf32>
    %cst_34 = arith.constant dense<0.000000e+00> : vector<8xf32>
    %40 = vector.multi_reduction <add>, %39, %cst_34 [1] : vector<8x256xf32> to vector<8xf32>
    %41 = vector.shape_cast %40 : vector<8xf32> to vector<8x1xf32>
    %c0_35 = arith.constant 0 : index
    %c0_36 = arith.constant 0 : index
    %42 = vector.load %arg10[%c0_35, %c0_36] : memref<1x1xf32, #tpu.memory_space<vmem>>, vector<1x1xf32>
    %43 = vector.broadcast %42 : vector<1x1xf32> to vector<8x1xf32>
    %44 = arith.addf %41, %43 : vector<8x1xf32>
    %c0_37 = arith.constant 0 : index
    %c0_38 = arith.constant 0 : index
    %45 = vector.load %arg11[%c0_37, %c0_38] : memref<8x1xf32, #tpu.memory_space<vmem>>, vector<8x1xf32>
    tpu.vector_store %arg11[%c0_37, %c0_38], %44 {strides = array<i32>} : memref<8x1xf32, #tpu.memory_space<vmem>>, vector<8x1xf32>,
    return
  }
  func.func @transform_0(%arg0: i32) -> (i32, i32) {
    %c0_i32 = arith.constant 0 : i32
    %c0_i32_0 = arith.constant 0 : i32
    return %arg0, %c0_i32 : i32, i32
  }
  func.func @transform_1(%arg0: i32) -> (i32, i32) {
    %c0_i32 = arith.constant 0 : i32
    %c0_i32_0 = arith.constant 0 : i32
    return %arg0, %c0_i32 : i32, i32
  }
  func.func @transform_2(%arg0: i32) -> (i32, i32) {
    %c0_i32 = arith.constant 0 : i32
    %c0_i32_0 = arith.constant 0 : i32
    %c0_i32_1 = arith.constant 0 : i32
    return %c0_i32, %c0_i32_0 : i32, i32
  }
  func.func @transform_3(%arg0: i32) -> (i32, i32) {
    %c0_i32 = arith.constant 0 : i32
    %c0_i32_0 = arith.constant 0 : i32
    %c0_i32_1 = arith.constant 0 : i32
    return %c0_i32, %c0_i32_0 : i32, i32
  }
  func.func @transform_4(%arg0: i32) -> (i32, i32) {
    %c0_i32 = arith.constant 0 : i32
    %c0_i32_0 = arith.constant 0 : i32
    %c0_i32_1 = arith.constant 0 : i32
    return %c0_i32, %c0_i32_0 : i32, i32
  }
  func.func @transform_5(%arg0: i32) -> (i32, i32) {
    %c0_i32 = arith.constant 0 : i32
    %c0_i32_0 = arith.constant 0 : i32
    %c0_i32_1 = arith.constant 0 : i32
    return %c0_i32, %c0_i32_0 : i32, i32
  }
  func.func @transform_6(%arg0: i32) -> (i32, i32) {
    %c0_i32 = arith.constant 0 : i32
    %c0_i32_0 = arith.constant 0 : i32
    %c0_i32_1 = arith.constant 0 : i32
    return %c0_i32, %c0_i32_0 : i32, i32
  }
  func.func @transform_7(%arg0: i32) -> (i32, i32) {
    %c0_i32 = arith.constant 0 : i32
    %c0_i32_0 = arith.constant 0 : i32
    %c0_i32_1 = arith.constant 0 : i32
    return %c0_i32, %c0_i32_0 : i32, i32
  }
  func.func @transform_8(%arg0: i32) -> (i32, i32) {
    %c0_i32 = arith.constant 0 : i32
    %c0_i32_0 = arith.constant 0 : i32
    %c0_i32_1 = arith.constant 0 : i32
    return %c0_i32, %c0_i32_0 : i32, i32
  }
  func.func @transform_9(%arg0: i32) -> (i32, i32) {
    %c0_i32 = arith.constant 0 : i32
    %c0_i32_0 = arith.constant 0 : i32
    %c0_i32_1 = arith.constant 0 : i32
    return %c0_i32, %c0_i32_0 : i32, i32
  }
  func.func @transform_10(%arg0: i32) -> (i32, i32) {
    %c0_i32 = arith.constant 0 : i32
    %c0_i32_0 = arith.constant 0 : i32
    return %arg0, %c0_i32 : i32, i32
  }
}

</mosaic_0001>

<llo_original>
// kernel: user_preference_estimator_forward.1
$region0: #{user_preference_estimator_forward.1}
  #allocation0 [shape = 'u32[]', space=smem, size = 0x4, offset = 0x4, fixed_abs, tag = 'smem constant byte address 0x4 - core index']
  #allocation1 [shape = 'u32[144,128]{1,0:T(1,128)}', space=vmem, size = 0x12000, scoped, tag = 'internal scratch']
  #allocation2 [shape = 'f32[1,1]{1,0:T(1,128)S(1)}', space=vmem, size = 0x200, scoped, tag = 'scoped memory for user_preference_estimator_forward.1']
  %s0 = inlined_call_operand.vmem [shape: bf16[8,704], index: 0, kind: input, shape index: {}]
  %s1 = inlined_call_operand.vmem [shape: bf16[8,2560], index: 1, kind: input, shape index: {}]
  %s2 = inlined_call_operand.hbm [shape: bf16[512,128], index: 2, kind: input, shape index: {}]
  %s3 = inlined_call_operand.hbm [shape: bf16[704,1024], index: 3, kind: input, shape index: {}]
  %s4 = inlined_call_operand.hbm [shape: bf16[640,1024], index: 4, kind: input, shape index: {}]
  %s5 = inlined_call_operand.hbm [shape: f32[1,1024], index: 5, kind: input, shape index: {}]
  %s6 = inlined_call_operand.hbm [shape: bf16[1024,256], index: 6, kind: input, shape index: {}]
  %s7 = inlined_call_operand.hbm [shape: f32[1,256], index: 7, kind: input, shape index: {}]
  %s8 = inlined_call_operand.hbm [shape: f32[1,256], index: 8, kind: input, shape index: {}]
  %s9 = inlined_call_operand.<no memory space> [shape: f32[1,1], index: 9, kind: input, shape index: {}]
  %s10 = inlined_call_operand.vmem [shape: f32[8,1], index: 10, kind: output, shape index: {}]
  %s11 = sld [smem:[#allocation0]]
  $region78: #{user_preference_estimator_forward.1} parent=0
    _
  %s13 = ssub.s32 1, %s11
  %s14 = scalar_select 0, %s13, %s11
  %v15 = vstv %s9
  %16 = vst [vmem:[#allocation2] sm:$0x1] %v15
  $region1: #{user_preference_estimator_forward.1} parent=0
    #allocation3 [shape = 'u8[131072]{0}', space=vmem, size = 0x20000, scoped, tag = 'input window, operand 2, single buffered']
    #allocation4 [shape = 's32[1]{0}', space=sflag, size = 0x4, scoped, tag = 'scoped memory for user_preference_estimator_forward.1']
    #allocation5 [shape = 'u8[1441792]{0}', space=vmem, size = 0x160000, scoped, tag = 'input window, operand 3, single buffered']
    #allocation6 [shape = 's32[1]{0}', space=sflag, size = 0x4, scoped, tag = 'scoped memory for user_preference_estimator_forward.1']
    #allocation7 [shape = 'u8[1310720]{0}', space=vmem, size = 0x140000, scoped, tag = 'input window, operand 4, single buffered']
    #allocation8 [shape = 'u8[4096]{0}', space=vmem, size = 0x1000, scoped, tag = 'input window, operand 5, single buffered']
    #allocation9 [shape = 's32[1]{0}', space=sflag, size = 0x4, scoped, tag = 'scoped memory for user_preference_estimator_forward.1']
    #allocation10 [shape = 'u8[524288]{0}', space=vmem, size = 0x80000, scoped, tag = 'input window, operand 6, single buffered']
    #allocation11 [shape = 'u8[1024]{0}', space=vmem, size = 0x400, scoped, tag = 'input window, operand 7, single buffered']
    #allocation12 [shape = 's32[1]{0}', space=sflag, size = 0x4, scoped, tag = 'scoped memory for user_preference_estimator_forward.1']
    #allocation13 [shape = 'u8[1024]{0}', space=vmem, size = 0x400, scoped, tag = 'input window, operand 8, single buffered']
    %17 = vsyncpa [#allocation4], 0
    %18 = vsyncpa [#allocation6], 0
    %19 = vsyncpa [#allocation9], 0
    %20 = vsyncpa [#allocation12], 0
    // Predicated region
    $region2: #{user_preference_estimator_forward.1} parent=1 // pred_check
      _
    $region3: #{user_preference_estimator_forward.1} parent=1 // pred_check_branch
      %22 = sbr.rel (0) target = $region5
    $region4: #{user_preference_estimator_forward.1} parent=1 // pred_region
      _
    $region5: #{user_preference_estimator_forward.1} parent=1 // pred_fallthru
      _
    // Predicated region
    $region6: #{user_preference_estimator_forward.1} parent=1 // pred_check
      _
    $region7: #{user_preference_estimator_forward.1} parent=1 // pred_check_branch
      %24 = sbr.rel (0) target = $region9
    $region8: #{user_preference_estimator_forward.1} parent=1 // pred_region
      _
    $region9: #{user_preference_estimator_forward.1} parent=1 // pred_fallthru
      _
    // Predicated region
    $region10: #{user_preference_estimator_forward.1} parent=1 // pred_check
      _
    $region11: #{user_preference_estimator_forward.1} parent=1 // pred_check_branch
      %26 = sbr.rel (0) target = $region13
    $region12: #{user_preference_estimator_forward.1} parent=1 // pred_region
      %s28 = ssub.s32 4096, 4096
      %29 = vsyncadd [#allocation4], %s28
      %s30 = sshll.u32 [#allocation3], 4
      %s31 = int_to_ptr.vmem [resolvable:$true] %s30
      %36 = dma.hbm_to_vmem [thread:$0]  %s2, 4096, %s31, [#allocation4], 64, 64, 4
    $region13: #{user_preference_estimator_forward.1} parent=1 // pred_fallthru
      _
    // Predicated region
    $region14: #{user_preference_estimator_forward.1} parent=1 // pred_check
      _
    $region15: #{user_preference_estimator_forward.1} parent=1 // pred_check_branch
      %38 = sbr.rel (0) target = $region17
    $region16: #{user_preference_estimator_forward.1} parent=1 // pred_region
      %s40 = ssub.s32 45056, 45056
      %41 = vsyncadd [#allocation6], %s40
      %s42 = sshll.u32 [#allocation5], 4
      %s43 = int_to_ptr.vmem [resolvable:$true] %s42
      %48 = dma.hbm_to_vmem [thread:$0]  %s3, 45056, %s43, [#allocation6], 512, 512, 32
    $region17: #{user_preference_estimator_forward.1} parent=1 // pred_fallthru
      _
    // Predicated region
    $region18: #{user_preference_estimator_forward.1} parent=1 // pred_check
      _
    $region19: #{user_preference_estimator_forward.1} parent=1 // pred_check_branch
      %50 = sbr.rel (0) target = $region21
    $region20: #{user_preference_estimator_forward.1} parent=1 // pred_region
      %s52 = ssub.s32 40960, 40960
      %53 = vsyncadd [#allocation6], %s52
      %s54 = sshll.u32 [#allocation7], 4
      %s55 = int_to_ptr.vmem [resolvable:$true] %s54
      %60 = dma.hbm_to_vmem [thread:$0]  %s4, 40960, %s55, [#allocation6], 512, 512, 32
    $region21: #{user_preference_estimator_forward.1} parent=1 // pred_fallthru
      _
    // Predicated region
    $region22: #{user_preference_estimator_forward.1} parent=1 // pred_check
      _
    $region23: #{user_preference_estimator_forward.1} parent=1 // pred_check_branch
      %62 = sbr.rel (0) target = $region25
    $region24: #{user_preference_estimator_forward.1} parent=1 // pred_region
      %s64 = ssub.s32 128, 128
      %65 = vsyncadd [#allocation9], %s64
      %s67 = sshll.u32 [#allocation8], 4
      %s68 = int_to_ptr.vmem [resolvable:$true] %s67
      %70 = dma.hbm_to_vmem [thread:$0]  %s5, 128, %s68, [#allocation9]
    $region25: #{user_preference_estimator_forward.1} parent=1 // pred_fallthru
      _
    // Predicated region
    $region26: #{user_preference_estimator_forward.1} parent=1 // pred_check
      _
    $region27: #{user_preference_estimator_forward.1} parent=1 // pred_check_branch
      %72 = sbr.rel (0) target = $region29
    $region28: #{user_preference_estimator_forward.1} parent=1 // pred_region
      %s74 = ssub.s32 16384, 16384
      %75 = vsyncadd [#allocation9], %s74
      %s76 = sshll.u32 [#allocation10], 4
      %s77 = int_to_ptr.vmem [resolvable:$true] %s76
      %82 = dma.hbm_to_vmem [thread:$0]  %s6, 16384, %s77, [#allocation9], 128, 128, 8
    $region29: #{user_preference_estimator_forward.1} parent=1 // pred_fallthru
      _
    // Predicated region
    $region30: #{user_preference_estimator_forward.1} parent=1 // pred_check
      _
    $region31: #{user_preference_estimator_forward.1} parent=1 // pred_check_branch
      %84 = sbr.rel (0) target = $region33
    $region32: #{user_preference_estimator_forward.1} parent=1 // pred_region
      %s86 = ssub.s32 32, 32
      %87 = vsyncadd [#allocation12], %s86
      %s89 = sshll.u32 [#allocation11], 4
      %s90 = int_to_ptr.vmem [resolvable:$true] %s89
      %92 = dma.hbm_to_vmem [thread:$0]  %s7, 32, %s90, [#allocation12]
    $region33: #{user_preference_estimator_forward.1} parent=1 // pred_fallthru
      _
    // Predicated region
    $region34: #{user_preference_estimator_forward.1} parent=1 // pred_check
      _
    $region35: #{user_preference_estimator_forward.1} parent=1 // pred_check_branch
      %94 = sbr.rel (0) target = $region37
    $region36: #{user_preference_estimator_forward.1} parent=1 // pred_region
      %s96 = ssub.s32 32, 32
      %97 = vsyncadd [#allocation12], %s96
      %s99 = sshll.u32 [#allocation13], 4
      %s100 = int_to_ptr.vmem [resolvable:$true] %s99
      %102 = dma.hbm_to_vmem [thread:$0]  %s8, 32, %s100, [#allocation12]
    $region37: #{user_preference_estimator_forward.1} parent=1 // pred_fallthru
      _
    // Predicated region
    $region38: #{user_preference_estimator_forward.1} parent=1 // pred_check
      _
    $region39: #{user_preference_estimator_forward.1} parent=1 // pred_check_branch
      %104 = sbr.rel (0) target = $region41
    $region40: #{user_preference_estimator_forward.1} parent=1 // pred_region
      _
    $region41: #{user_preference_estimator_forward.1} parent=1 // pred_fallthru
      _
    // Predicated region
    $region42: #{user_preference_estimator_forward.1} parent=1 // pred_check
      _
    $region43: #{user_preference_estimator_forward.1} parent=1 // pred_check_branch
      %106 = sbr.rel (0) target = $region45
    $region44: #{user_preference_estimator_forward.1} parent=1 // pred_region
      %107 = dma.done [#allocation4], 4096
    $region45: #{user_preference_estimator_forward.1} parent=1 // pred_fallthru
      _
    // Predicated region
    $region46: #{user_preference_estimator_forward.1} parent=1 // pred_check
      _
    $region47: #{user_preference_estimator_forward.1} parent=1 // pred_check_branch
      %109 = sbr.rel (0) target = $region49
    $region48: #{user_preference_estimator_forward.1} parent=1 // pred_region
      %110 = dma.done [#allocation6], 45056
    $region49: #{user_preference_estimator_forward.1} parent=1 // pred_fallthru
      _
    // Predicated region
    $region50: #{user_preference_estimator_forward.1} parent=1 // pred_check
      _
    $region51: #{user_preference_estimator_forward.1} parent=1 // pred_check_branch
      %112 = sbr.rel (0) target = $region53
    $region52: #{user_preference_estimator_forward.1} parent=1 // pred_region
      %113 = dma.done [#allocation6], 40960
    $region53: #{user_preference_estimator_forward.1} parent=1 // pred_fallthru
      _
    // Predicated region
    $region54: #{user_preference_estimator_forward.1} parent=1 // pred_check
      _
    $region55: #{user_preference_estimator_forward.1} parent=1 // pred_check_branch
      %115 = sbr.rel (0) target = $region57
    $region56: #{user_preference_estimator_forward.1} parent=1 // pred_region
      %116 = dma.done [#allocation9], 128
    $region57: #{user_preference_estimator_forward.1} parent=1 // pred_fallthru
      _
    // Predicated region
    $region58: #{user_preference_estimator_forward.1} parent=1 // pred_check
      _
    $region59: #{user_preference_estimator_forward.1} parent=1 // pred_check_branch
      %118 = sbr.rel (0) target = $region61
    $region60: #{user_preference_estimator_forward.1} parent=1 // pred_region
      %119 = dma.done [#allocation9], 16384
    $region61: #{user_preference_estimator_forward.1} parent=1 // pred_fallthru
      _
    // Predicated region
    $region62: #{user_preference_estimator_forward.1} parent=1 // pred_check
      _
    $region63: #{user_preference_estimator_forward.1} parent=1 // pred_check_branch
      %121 = sbr.rel (0) target = $region65
    $region64: #{user_preference_estimator_forward.1} parent=1 // pred_region
      %122 = dma.done [#allocation12], 32
    $region65: #{user_preference_estimator_forward.1} parent=1 // pred_fallthru
      _
    // Predicated region
    $region66: #{user_preference_estimator_forward.1} parent=1 // pred_check
      _
    $region67: #{user_preference_estimator_forward.1} parent=1 // pred_check_branch
      %124 = sbr.rel (0) target = $region69
    $region68: #{user_preference_estimator_forward.1} parent=1 // pred_region
      %125 = dma.done [#allocation12], 32
    $region69: #{user_preference_estimator_forward.1} parent=1 // pred_fallthru
      _
    %v127 = vld [vmem:[%s0] sm:$0xff]
    %v128 = vld [vmem:[%s0 + $0x8] sm:$0xff]
    %v129 = vld [vmem:[%s0 + $0x10] sm:$0xff]
    %v130 = vld [vmem:[#allocation5] sm:$0xff]
    %v131 = vld [vmem:[#allocation5 + $0x8] sm:$0xff]
    %v132 = vld [vmem:[#allocation5 + $0x10] sm:$0xff]
    %v133 = vld [vmem:[#allocation5 + $0x18] sm:$0xff]
    %v134 = vld [vmem:[#allocation5 + $0x20] sm:$0xff]
    %v135 = vld [vmem:[#allocation5 + $0x28] sm:$0xff]
    %v136 = vld [vmem:[#allocation5 + $0x30] sm:$0xff]
    %v137 = vld [vmem:[#allocation5 + $0x38] sm:$0xff]
    %v138 = vld [vmem:[#allocation5 + $0x40] sm:$0xff]
    %v139 = vld [vmem:[#allocation5 + $0x48] sm:$0xff]
    %v140 = vld [vmem:[#allocation5 + $0x50] sm:$0xff]
    %v141 = vld [vmem:[#allocation5 + $0x58] sm:$0xff]
    %v142 = vld [vmem:[#allocation5 + $0x60] sm:$0xff]
    %v143 = vld [vmem:[#allocation5 + $0x68] sm:$0xff]
    %v144 = vld [vmem:[#allocation5 + $0x70] sm:$0xff]
    %v145 = vld [vmem:[#allocation5 + $0x78] sm:$0xff]
    %v146 = vld [vmem:[#allocation5 + $0x80] sm:$0xff]
    %v147 = vld [vmem:[#allocation5 + $0x88] sm:$0xff]
    %v148 = vld [vmem:[#allocation5 + $0x90] sm:$0xff]
    %v149 = vld [vmem:[#allocation5 + $0x98] sm:$0xff]
    %v150 = vld [vmem:[#allocation5 + $0xa0] sm:$0xff]
    %v151 = vld [vmem:[#allocation5 + $0xa8] sm:$0xff]
    %v152 = vld [vmem:[#allocation5 + $0xb0] sm:$0xff]
    %v153 = vld [vmem:[#allocation5 + $0xb8] sm:$0xff]
    %v154 = vld [vmem:[#allocation5 + $0xc0] sm:$0xff]
    %v155 = vld [vmem:[#allocation5 + $0xc8] sm:$0xff]
    %v156 = vld [vmem:[#allocation5 + $0xd0] sm:$0xff]
    %v157 = vld [vmem:[#allocation5 + $0xd8] sm:$0xff]
    %v158 = vld [vmem:[#allocation5 + $0xe0] sm:$0xff]
    %v159 = vld [vmem:[#allocation5 + $0xe8] sm:$0xff]
    %v160 = vld [vmem:[#allocation5 + $0xf0] sm:$0xff]
    %v161 = vld [vmem:[#allocation5 + $0xf8] sm:$0xff]
    %v162 = vld [vmem:[#allocation5 + $0x100] sm:$0xff]
    %v163 = vld [vmem:[#allocation5 + $0x108] sm:$0xff]
    %v164 = vld [vmem:[#allocation5 + $0x110] sm:$0xff]
    %v165 = vld [vmem:[#allocation5 + $0x118] sm:$0xff]
    %v166 = vld [vmem:[#allocation5 + $0x120] sm:$0xff]
    %v167 = vld [vmem:[#allocation5 + $0x128] sm:$0xff]
    %v168 = vld [vmem:[#allocation5 + $0x130] sm:$0xff]
    %v169 = vld [vmem:[#allocation5 + $0x138] sm:$0xff]
    %v170 = vld [vmem:[#allocation5 + $0x140] sm:$0xff]
    %v171 = vld [vmem:[#allocation5 + $0x148] sm:$0xff]
    %v172 = vld [vmem:[#allocation5 + $0x150] sm:$0xff]
    %v173 = vld [vmem:[#allocation5 + $0x158] sm:$0xff]
    %v174 = vld [vmem:[#allocation5 + $0x160] sm:$0xff]
    %v175 = vld [vmem:[#allocation5 + $0x168] sm:$0xff]
    %v176 = vld [vmem:[#allocation5 + $0x170] sm:$0xff]
    %v177 = vld [vmem:[#allocation5 + $0x178] sm:$0xff]
    %v178 = vld [vmem:[#allocation5 + $0x180] sm:$0xff]
    %v179 = vld [vmem:[#allocation5 + $0x188] sm:$0xff]
    %v180 = vld [vmem:[#allocation5 + $0x190] sm:$0xff]
    %v181 = vld [vmem:[#allocation5 + $0x198] sm:$0xff]
    %v182 = vld [vmem:[#allocation5 + $0x1a0] sm:$0xff]
    %v183 = vld [vmem:[#allocation5 + $0x1a8] sm:$0xff]
    %v184 = vld [vmem:[#allocation5 + $0x1b0] sm:$0xff]
    %v185 = vld [vmem:[#allocation5 + $0x1b8] sm:$0xff]
    %v186 = vld [vmem:[#allocation5 + $0x1c0] sm:$0xff]
    %v187 = vld [vmem:[#allocation5 + $0x1c8] sm:$0xff]
    %v188 = vld [vmem:[#allocation5 + $0x1d0] sm:$0xff]
    %v189 = vld [vmem:[#allocation5 + $0x1d8] sm:$0xff]
    %v190 = vld [vmem:[#allocation5 + $0x1e0] sm:$0xff]
    %v191 = vld [vmem:[#allocation5 + $0x1e8] sm:$0xff]
    %v192 = vld [vmem:[#allocation5 + $0x1f0] sm:$0xff]
    %v193 = vld [vmem:[#allocation5 + $0x1f8] sm:$0xff]
    %v194 = vld [vmem:[#allocation5 + $0x200] sm:$0xff]
    %v195 = vld [vmem:[#allocation5 + $0x208] sm:$0xff]
    %v196 = vld [vmem:[#allocation5 + $0x210] sm:$0xff]
    %v197 = vld [vmem:[#allocation5 + $0x218] sm:$0xff]
    %v198 = vld [vmem:[#allocation5 + $0x220] sm:$0xff]
    %v199 = vld [vmem:[#allocation5 + $0x228] sm:$0xff]
    %v200 = vld [vmem:[#allocation5 + $0x230] sm:$0xff]
    %v201 = vld [vmem:[#allocation5 + $0x238] sm:$0xff]
    %v202 = vld [vmem:[#allocation5 + $0x240] sm:$0xff]
    %v203 = vld [vmem:[#allocation5 + $0x248] sm:$0xff]
    %v204 = vld [vmem:[#allocation5 + $0x250] sm:$0xff]
    %v205 = vld [vmem:[#allocation5 + $0x258] sm:$0xff]
    %v206 = vld [vmem:[#allocation5 + $0x260] sm:$0xff]
    %v207 = vld [vmem:[#allocation5 + $0x268] sm:$0xff]
    %v208 = vld [vmem:[#allocation5 + $0x270] sm:$0xff]
    %v209 = vld [vmem:[#allocation5 + $0x278] sm:$0xff]
    %v210 = vld [vmem:[#allocation5 + $0x280] sm:$0xff]
    %v211 = vld [vmem:[#allocation5 + $0x288] sm:$0xff]
    %v212 = vld [vmem:[#allocation5 + $0x290] sm:$0xff]
    %v213 = vld [vmem:[#allocation5 + $0x298] sm:$0xff]
    %v214 = vld [vmem:[#allocation5 + $0x2a0] sm:$0xff]
    %v215 = vld [vmem:[#allocation5 + $0x2a8] sm:$0xff]
    %v216 = vld [vmem:[#allocation5 + $0x2b0] sm:$0xff]
    %v217 = vld [vmem:[#allocation5 + $0x2b8] sm:$0xff]
    %v218 = vld [vmem:[#allocation5 + $0x2c0] sm:$0xff]
    %v219 = vld [vmem:[#allocation5 + $0x2c8] sm:$0xff]
    %v220 = vld [vmem:[#allocation5 + $0x2d0] sm:$0xff]
    %v221 = vld [vmem:[#allocation5 + $0x2d8] sm:$0xff]
    %v222 = vld [vmem:[#allocation5 + $0x2e0] sm:$0xff]
    %v223 = vld [vmem:[#allocation5 + $0x2e8] sm:$0xff]
    %v224 = vld [vmem:[#allocation5 + $0x2f0] sm:$0xff]
    %v225 = vld [vmem:[#allocation5 + $0x2f8] sm:$0xff]
    %v226 = vld [vmem:[#allocation5 + $0x300] sm:$0xff]
    %v227 = vld [vmem:[#allocation5 + $0x308] sm:$0xff]
    %v228 = vld [vmem:[#allocation5 + $0x310] sm:$0xff]
    %v229 = vld [vmem:[#allocation5 + $0x318] sm:$0xff]
    %v230 = vld [vmem:[#allocation5 + $0x320] sm:$0xff]
    %v231 = vld [vmem:[#allocation5 + $0x328] sm:$0xff]
    %v232 = vld [vmem:[#allocation5 + $0x330] sm:$0xff]
    %v233 = vld [vmem:[#allocation5 + $0x338] sm:$0xff]
    %v234 = vld [vmem:[#allocation5 + $0x340] sm:$0xff]
    %v235 = vld [vmem:[#allocation5 + $0x348] sm:$0xff]
    %v236 = vld [vmem:[#allocation5 + $0x350] sm:$0xff]
    %v237 = vld [vmem:[#allocation5 + $0x358] sm:$0xff]
    %v238 = vld [vmem:[#allocation5 + $0x360] sm:$0xff]
    %v239 = vld [vmem:[#allocation5 + $0x368] sm:$0xff]
    %v240 = vld [vmem:[#allocation5 + $0x370] sm:$0xff]
    %v241 = vld [vmem:[#allocation5 + $0x378] sm:$0xff]
    %v242 = vld [vmem:[#allocation5 + $0x380] sm:$0xff]
    %v243 = vld [vmem:[#allocation5 + $0x388] sm:$0xff]
    %v244 = vld [vmem:[#allocation5 + $0x390] sm:$0xff]
    %v245 = vld [vmem:[#allocation5 + $0x398] sm:$0xff]
    %v246 = vld [vmem:[#allocation5 + $0x3a0] sm:$0xff]
    %v247 = vld [vmem:[#allocation5 + $0x3a8] sm:$0xff]
    %v248 = vld [vmem:[#allocation5 + $0x3b0] sm:$0xff]
    %v249 = vld [vmem:[#allocation5 + $0x3b8] sm:$0xff]
    %v250 = vld [vmem:[#allocation5 + $0x3c0] sm:$0xff]
    %v251 = vld [vmem:[#allocation5 + $0x3c8] sm:$0xff]
    %v252 = vld [vmem:[#allocation5 + $0x3d0] sm:$0xff]
    %v253 = vld [vmem:[#allocation5 + $0x3d8] sm:$0xff]
    %v254 = vld [vmem:[#allocation5 + $0x3e0] sm:$0xff]
    %v255 = vld [vmem:[#allocation5 + $0x3e8] sm:$0xff]
    %v256 = vld [vmem:[#allocation5 + $0x3f0] sm:$0xff]
    %v257 = vld [vmem:[#allocation5 + $0x3f8] sm:$0xff]
    %v258 = vld [vmem:[#allocation5 + $0x400] sm:$0xff]
    %v259 = vld [vmem:[#allocation5 + $0x408] sm:$0xff]
    %v260 = vld [vmem:[#allocation5 + $0x410] sm:$0xff]
    %v261 = vld [vmem:[#allocation5 + $0x418] sm:$0xff]
    %v262 = vld [vmem:[#allocation5 + $0x420] sm:$0xff]
    %v263 = vld [vmem:[#allocation5 + $0x428] sm:$0xff]
    %v264 = vld [vmem:[#allocation5 + $0x430] sm:$0xff]
    %v265 = vld [vmem:[#allocation5 + $0x438] sm:$0xff]
    %v266 = vld [vmem:[#allocation5 + $0x440] sm:$0xff]
    %v267 = vld [vmem:[#allocation5 + $0x448] sm:$0xff]
    %v268 = vld [vmem:[#allocation5 + $0x450] sm:$0xff]
    %v269 = vld [vmem:[#allocation5 + $0x458] sm:$0xff]
    %v270 = vld [vmem:[#allocation5 + $0x460] sm:$0xff]
    %v271 = vld [vmem:[#allocation5 + $0x468] sm:$0xff]
    %v272 = vld [vmem:[#allocation5 + $0x470] sm:$0xff]
    %v273 = vld [vmem:[#allocation5 + $0x478] sm:$0xff]
    %v274 = vld [vmem:[#allocation5 + $0x480] sm:$0xff]
    %v275 = vld [vmem:[#allocation5 + $0x488] sm:$0xff]
    %v276 = vld [vmem:[#allocation5 + $0x490] sm:$0xff]
    %v277 = vld [vmem:[#allocation5 + $0x498] sm:$0xff]
    %v278 = vld [vmem:[#allocation5 + $0x4a0] sm:$0xff]
    %v279 = vld [vmem:[#allocation5 + $0x4a8] sm:$0xff]
    %v280 = vld [vmem:[#allocation5 + $0x4b0] sm:$0xff]
    %v281 = vld [vmem:[#allocation5 + $0x4b8] sm:$0xff]
    %v282 = vld [vmem:[#allocation5 + $0x4c0] sm:$0xff]
    %v283 = vld [vmem:[#allocation5 + $0x4c8] sm:$0xff]
    %v284 = vld [vmem:[#allocation5 + $0x4d0] sm:$0xff]
    %v285 = vld [vmem:[#allocation5 + $0x4d8] sm:$0xff]
    %v286 = vld [vmem:[#allocation5 + $0x4e0] sm:$0xff]
    %v287 = vld [vmem:[#allocation5 + $0x4e8] sm:$0xff]
    %v288 = vld [vmem:[#allocation5 + $0x4f0] sm:$0xff]
    %v289 = vld [vmem:[#allocation5 + $0x4f8] sm:$0xff]
    %v290 = vld [vmem:[#allocation5 + $0x500] sm:$0xff]
    %v291 = vld [vmem:[#allocation5 + $0x508] sm:$0xff]
    %v292 = vld [vmem:[#allocation5 + $0x510] sm:$0xff]
    %v293 = vld [vmem:[#allocation5 + $0x518] sm:$0xff]
    %v294 = vld [vmem:[#allocation5 + $0x520] sm:$0xff]
    %v295 = vld [vmem:[#allocation5 + $0x528] sm:$0xff]
    %v296 = vld [vmem:[#allocation5 + $0x530] sm:$0xff]
    %v297 = vld [vmem:[#allocation5 + $0x538] sm:$0xff]
    %v298 = vld [vmem:[#allocation5 + $0x540] sm:$0xff]
    %v299 = vld [vmem:[#allocation5 + $0x548] sm:$0xff]
    %v300 = vld [vmem:[#allocation5 + $0x550] sm:$0xff]
    %v301 = vld [vmem:[#allocation5 + $0x558] sm:$0xff]
    %v302 = vld [vmem:[#allocation5 + $0x560] sm:$0xff]
    %v303 = vld [vmem:[#allocation5 + $0x568] sm:$0xff]
    %v304 = vld [vmem:[#allocation5 + $0x570] sm:$0xff]
    %v305 = vld [vmem:[#allocation5 + $0x578] sm:$0xff]
    %v306 = vld [vmem:[#allocation5 + $0x580] sm:$0xff]
    %v307 = vld [vmem:[#allocation5 + $0x588] sm:$0xff]
    %v308 = vld [vmem:[#allocation5 + $0x590] sm:$0xff]
    %v309 = vld [vmem:[#allocation5 + $0x598] sm:$0xff]
    %v310 = vld [vmem:[#allocation5 + $0x5a0] sm:$0xff]
    %v311 = vld [vmem:[#allocation5 + $0x5a8] sm:$0xff]
    %v312 = vld [vmem:[#allocation5 + $0x5b0] sm:$0xff]
    %v313 = vld [vmem:[#allocation5 + $0x5b8] sm:$0xff]
    %v314 = vld [vmem:[#allocation5 + $0x5c0] sm:$0xff]
    %v315 = vld [vmem:[#allocation5 + $0x5c8] sm:$0xff]
    %v316 = vld [vmem:[#allocation5 + $0x5d0] sm:$0xff]
    %v317 = vld [vmem:[#allocation5 + $0x5d8] sm:$0xff]
    %v318 = vld [vmem:[#allocation5 + $0x5e0] sm:$0xff]
    %v319 = vld [vmem:[#allocation5 + $0x5e8] sm:$0xff]
    %v320 = vld [vmem:[#allocation5 + $0x5f0] sm:$0xff]
    %v321 = vld [vmem:[#allocation5 + $0x5f8] sm:$0xff]
    %v322 = vld [vmem:[#allocation5 + $0x600] sm:$0xff]
    %v323 = vld [vmem:[#allocation5 + $0x608] sm:$0xff]
    %v324 = vld [vmem:[#allocation5 + $0x610] sm:$0xff]
    %v325 = vld [vmem:[#allocation5 + $0x618] sm:$0xff]
    %v326 = vld [vmem:[#allocation5 + $0x620] sm:$0xff]
    %v327 = vld [vmem:[#allocation5 + $0x628] sm:$0xff]
    %v328 = vld [vmem:[#allocation5 + $0x630] sm:$0xff]
    %v329 = vld [vmem:[#allocation5 + $0x638] sm:$0xff]
    %v330 = vld [vmem:[#allocation5 + $0x640] sm:$0xff]
    %v331 = vld [vmem:[#allocation5 + $0x648] sm:$0xff]
    %v332 = vld [vmem:[#allocation5 + $0x650] sm:$0xff]
    %v333 = vld [vmem:[#allocation5 + $0x658] sm:$0xff]
    %v334 = vld [vmem:[#allocation5 + $0x660] sm:$0xff]
    %v335 = vld [vmem:[#allocation5 + $0x668] sm:$0xff]
    %v336 = vld [vmem:[#allocation5 + $0x670] sm:$0xff]
    %v337 = vld [vmem:[#allocation5 + $0x678] sm:$0xff]
    %v338 = vld [vmem:[#allocation5 + $0x680] sm:$0xff]
    %v339 = vld [vmem:[#allocation5 + $0x688] sm:$0xff]
    %v340 = vld [vmem:[#allocation5 + $0x690] sm:$0xff]
    %v341 = vld [vmem:[#allocation5 + $0x698] sm:$0xff]
    %v342 = vld [vmem:[#allocation5 + $0x6a0] sm:$0xff]
    %v343 = vld [vmem:[#allocation5 + $0x6a8] sm:$0xff]
    %v344 = vld [vmem:[#allocation5 + $0x6b0] sm:$0xff]
    %v345 = vld [vmem:[#allocation5 + $0x6b8] sm:$0xff]
    %v346 = vld [vmem:[#allocation5 + $0x6c0] sm:$0xff]
    %v347 = vld [vmem:[#allocation5 + $0x6c8] sm:$0xff]
    %v348 = vld [vmem:[#allocation5 + $0x6d0] sm:$0xff]
    %v349 = vld [vmem:[#allocation5 + $0x6d8] sm:$0xff]
    %v350 = vld [vmem:[#allocation5 + $0x6e0] sm:$0xff]
    %v351 = vld [vmem:[#allocation5 + $0x6e8] sm:$0xff]
    %v352 = vld [vmem:[#allocation5 + $0x6f0] sm:$0xff]
    %v353 = vld [vmem:[#allocation5 + $0x6f8] sm:$0xff]
    %v354 = vld [vmem:[#allocation5 + $0x700] sm:$0xff]
    %v355 = vld [vmem:[#allocation5 + $0x708] sm:$0xff]
    %v356 = vld [vmem:[#allocation5 + $0x710] sm:$0xff]
    %v357 = vld [vmem:[#allocation5 + $0x718] sm:$0xff]
    %v358 = vld [vmem:[#allocation5 + $0x720] sm:$0xff]
    %v359 = vld [vmem:[#allocation5 + $0x728] sm:$0xff]
    %v360 = vld [vmem:[#allocation5 + $0x730] sm:$0xff]
    %v361 = vld [vmem:[#allocation5 + $0x738] sm:$0xff]
    %v362 = vld [vmem:[#allocation5 + $0x740] sm:$0xff]
    %v363 = vld [vmem:[#allocation5 + $0x748] sm:$0xff]
    %v364 = vld [vmem:[#allocation5 + $0x750] sm:$0xff]
    %v365 = vld [vmem:[#allocation5 + $0x758] sm:$0xff]
    %v366 = vld [vmem:[#allocation5 + $0x760] sm:$0xff]
    %v367 = vld [vmem:[#allocation5 + $0x768] sm:$0xff]
    %v368 = vld [vmem:[#allocation5 + $0x770] sm:$0xff]
    %v369 = vld [vmem:[#allocation5 + $0x778] sm:$0xff]
    %v370 = vld [vmem:[#allocation5 + $0x780] sm:$0xff]
    %v371 = vld [vmem:[#allocation5 + $0x788] sm:$0xff]
    %v372 = vld [vmem:[#allocation5 + $0x790] sm:$0xff]
    %v373 = vld [vmem:[#allocation5 + $0x798] sm:$0xff]
    %v374 = vld [vmem:[#allocation5 + $0x7a0] sm:$0xff]
    %v375 = vld [vmem:[#allocation5 + $0x7a8] sm:$0xff]
    %v376 = vld [vmem:[#allocation5 + $0x7b0] sm:$0xff]
    %v377 = vld [vmem:[#allocation5 + $0x7b8] sm:$0xff]
    %v378 = vld [vmem:[#allocation5 + $0x7c0] sm:$0xff]
    %v379 = vld [vmem:[#allocation5 + $0x7c8] sm:$0xff]
    %v380 = vld [vmem:[#allocation5 + $0x7d0] sm:$0xff]
    %v381 = vld [vmem:[#allocation5 + $0x7d8] sm:$0xff]
    %v382 = vld [vmem:[#allocation5 + $0x7e0] sm:$0xff]
    %v383 = vld [vmem:[#allocation5 + $0x7e8] sm:$0xff]
    %v384 = vld [vmem:[#allocation5 + $0x7f0] sm:$0xff]
    %v385 = vld [vmem:[#allocation5 + $0x7f8] sm:$0xff]
    %v386 = vld [vmem:[#allocation5 + $0x800] sm:$0xff]
    %v387 = vld [vmem:[#allocation5 + $0x808] sm:$0xff]
    %v388 = vld [vmem:[#allocation5 + $0x810] sm:$0xff]
    %v389 = vld [vmem:[#allocation5 + $0x818] sm:$0xff]
    %v390 = vld [vmem:[#allocation5 + $0x820] sm:$0xff]
    %v391 = vld [vmem:[#allocation5 + $0x828] sm:$0xff]
    %v392 = vld [vmem:[#allocation5 + $0x830] sm:$0xff]
    %v393 = vld [vmem:[#allocation5 + $0x838] sm:$0xff]
    %v394 = vld [vmem:[#allocation5 + $0x840] sm:$0xff]
    %v395 = vld [vmem:[#allocation5 + $0x848] sm:$0xff]
    %v396 = vld [vmem:[#allocation5 + $0x850] sm:$0xff]
    %v397 = vld [vmem:[#allocation5 + $0x858] sm:$0xff]
    %v398 = vld [vmem:[#allocation5 + $0x860] sm:$0xff]
    %v399 = vld [vmem:[#allocation5 + $0x868] sm:$0xff]
    %v400 = vld [vmem:[#allocation5 + $0x870] sm:$0xff]
    %v401 = vld [vmem:[#allocation5 + $0x878] sm:$0xff]
    %v402 = vld [vmem:[#allocation5 + $0x880] sm:$0xff]
    %v403 = vld [vmem:[#allocation5 + $0x888] sm:$0xff]
    %v404 = vld [vmem:[#allocation5 + $0x890] sm:$0xff]
    %v405 = vld [vmem:[#allocation5 + $0x898] sm:$0xff]
    %v406 = vld [vmem:[#allocation5 + $0x8a0] sm:$0xff]
    %v407 = vld [vmem:[#allocation5 + $0x8a8] sm:$0xff]
    %v408 = vld [vmem:[#allocation5 + $0x8b0] sm:$0xff]
    %v409 = vld [vmem:[#allocation5 + $0x8b8] sm:$0xff]
    %v410 = vld [vmem:[#allocation5 + $0x8c0] sm:$0xff]
    %v411 = vld [vmem:[#allocation5 + $0x8c8] sm:$0xff]
    %v412 = vld [vmem:[#allocation5 + $0x8d0] sm:$0xff]
    %v413 = vld [vmem:[#allocation5 + $0x8d8] sm:$0xff]
    %v414 = vld [vmem:[#allocation5 + $0x8e0] sm:$0xff]
    %v415 = vld [vmem:[#allocation5 + $0x8e8] sm:$0xff]
    %v416 = vld [vmem:[#allocation5 + $0x8f0] sm:$0xff]
    %v417 = vld [vmem:[#allocation5 + $0x8f8] sm:$0xff]
    %v418 = vld [vmem:[#allocation5 + $0x900] sm:$0xff]
    %v419 = vld [vmem:[#allocation5 + $0x908] sm:$0xff]
    %v420 = vld [vmem:[#allocation5 + $0x910] sm:$0xff]
    %v421 = vld [vmem:[#allocation5 + $0x918] sm:$0xff]
    %v422 = vld [vmem:[#allocation5 + $0x920] sm:$0xff]
    %v423 = vld [vmem:[#allocation5 + $0x928] sm:$0xff]
    %v424 = vld [vmem:[#allocation5 + $0x930] sm:$0xff]
    %v425 = vld [vmem:[#allocation5 + $0x938] sm:$0xff]
    %v426 = vld [vmem:[#allocation5 + $0x940] sm:$0xff]
    %v427 = vld [vmem:[#allocation5 + $0x948] sm:$0xff]
    %v428 = vld [vmem:[#allocation5 + $0x950] sm:$0xff]
    %v429 = vld [vmem:[#allocation5 + $0x958] sm:$0xff]
    %v430 = vld [vmem:[#allocation5 + $0x960] sm:$0xff]
    %v431 = vld [vmem:[#allocation5 + $0x968] sm:$0xff]
    %v432 = vld [vmem:[#allocation5 + $0x970] sm:$0xff]
    %v433 = vld [vmem:[#allocation5 + $0x978] sm:$0xff]
    %v434 = vld [vmem:[#allocation5 + $0x980] sm:$0xff]
    %v435 = vld [vmem:[#allocation5 + $0x988] sm:$0xff]
    %v436 = vld [vmem:[#allocation5 + $0x990] sm:$0xff]
    %v437 = vld [vmem:[#allocation5 + $0x998] sm:$0xff]
    %v438 = vld [vmem:[#allocation5 + $0x9a0] sm:$0xff]
    %v439 = vld [vmem:[#allocation5 + $0x9a8] sm:$0xff]
    %v440 = vld [vmem:[#allocation5 + $0x9b0] sm:$0xff]
    %v441 = vld [vmem:[#allocation5 + $0x9b8] sm:$0xff]
    %v442 = vld [vmem:[#allocation5 + $0x9c0] sm:$0xff]
    %v443 = vld [vmem:[#allocation5 + $0x9c8] sm:$0xff]
    %v444 = vld [vmem:[#allocation5 + $0x9d0] sm:$0xff]
    %v445 = vld [vmem:[#allocation5 + $0x9d8] sm:$0xff]
    %v446 = vld [vmem:[#allocation5 + $0x9e0] sm:$0xff]
    %v447 = vld [vmem:[#allocation5 + $0x9e8] sm:$0xff]
    %v448 = vld [vmem:[#allocation5 + $0x9f0] sm:$0xff]
    %v449 = vld [vmem:[#allocation5 + $0x9f8] sm:$0xff]
    %v450 = vld [vmem:[#allocation5 + $0xa00] sm:$0xff]
    %v451 = vld [vmem:[#allocation5 + $0xa08] sm:$0xff]
    %v452 = vld [vmem:[#allocation5 + $0xa10] sm:$0xff]
    %v453 = vld [vmem:[#allocation5 + $0xa18] sm:$0xff]
    %v454 = vld [vmem:[#allocation5 + $0xa20] sm:$0xff]
    %v455 = vld [vmem:[#allocation5 + $0xa28] sm:$0xff]
    %v456 = vld [vmem:[#allocation5 + $0xa30] sm:$0xff]
    %v457 = vld [vmem:[#allocation5 + $0xa38] sm:$0xff]
    %v458 = vld [vmem:[#allocation5 + $0xa40] sm:$0xff]
    %v459 = vld [vmem:[#allocation5 + $0xa48] sm:$0xff]
    %v460 = vld [vmem:[#allocation5 + $0xa50] sm:$0xff]
    %v461 = vld [vmem:[#allocation5 + $0xa58] sm:$0xff]
    %v462 = vld [vmem:[#allocation5 + $0xa60] sm:$0xff]
    %v463 = vld [vmem:[#allocation5 + $0xa68] sm:$0xff]
    %v464 = vld [vmem:[#allocation5 + $0xa70] sm:$0xff]
    %v465 = vld [vmem:[#allocation5 + $0xa78] sm:$0xff]
    %v466 = vld [vmem:[#allocation5 + $0xa80] sm:$0xff]
    %v467 = vld [vmem:[#allocation5 + $0xa88] sm:$0xff]
    %v468 = vld [vmem:[#allocation5 + $0xa90] sm:$0xff]
    %v469 = vld [vmem:[#allocation5 + $0xa98] sm:$0xff]
    %v470 = vld [vmem:[#allocation5 + $0xaa0] sm:$0xff]
    %v471 = vld [vmem:[#allocation5 + $0xaa8] sm:$0xff]
    %v472 = vld [vmem:[#allocation5 + $0xab0] sm:$0xff]
    %v473 = vld [vmem:[#allocation5 + $0xab8] sm:$0xff]
    %v474 = vld [vmem:[#allocation5 + $0xac0] sm:$0xff]
    %v475 = vld [vmem:[#allocation5 + $0xac8] sm:$0xff]
    %v476 = vld [vmem:[#allocation5 + $0xad0] sm:$0xff]
    %v477 = vld [vmem:[#allocation5 + $0xad8] sm:$0xff]
    %v478 = vld [vmem:[#allocation5 + $0xae0] sm:$0xff]
    %v479 = vld [vmem:[#allocation5 + $0xae8] sm:$0xff]
    %v480 = vld [vmem:[#allocation5 + $0xaf0] sm:$0xff]
    %v481 = vld [vmem:[#allocation5 + $0xaf8] sm:$0xff]
    %v482 = vld [vmem:[%s1] sm:$0xff]
    %v483 = vld [vmem:[%s1 + $0x8] sm:$0xff]
    %v484 = vld [vmem:[%s1 + $0x10] sm:$0xff]
    %v485 = vld [vmem:[%s1 + $0x18] sm:$0xff]
    %v486 = vld [vmem:[%s1 + $0x20] sm:$0xff]
    %v487 = vld [vmem:[%s1 + $0x28] sm:$0xff]
    %v488 = vld [vmem:[%s1 + $0x30] sm:$0xff]
    %v489 = vld [vmem:[%s1 + $0x38] sm:$0xff]
    %v490 = vld [vmem:[%s1 + $0x40] sm:$0xff]
    %v491 = vld [vmem:[%s1 + $0x48] sm:$0xff]
    %v492 = vld [vmem:[#allocation3] sm:$0xf]
    %v493 = vld [vmem:[#allocation3 + $0x4] sm:$0xf]
    %v494 = vld [vmem:[#allocation3 + $0x8] sm:$0xf]
    %v495 = vld [vmem:[#allocation3 + $0xc] sm:$0xf]
    %v496 = vld [vmem:[#allocation3 + $0x10] sm:$0xf]
    %v497 = vld [vmem:[#allocation3 + $0x14] sm:$0xf]
    %v498 = vld [vmem:[#allocation3 + $0x18] sm:$0xf]
    %v499 = vld [vmem:[#allocation3 + $0x1c] sm:$0xf]
    %v500 = vld [vmem:[#allocation3 + $0x20] sm:$0xf]
    %v501 = vld [vmem:[#allocation3 + $0x24] sm:$0xf]
    %v502 = vld [vmem:[#allocation3 + $0x28] sm:$0xf]
    %v503 = vld [vmem:[#allocation3 + $0x2c] sm:$0xf]
    %v504 = vld [vmem:[#allocation3 + $0x30] sm:$0xf]
    %v505 = vld [vmem:[#allocation3 + $0x34] sm:$0xf]
    %v506 = vld [vmem:[#allocation3 + $0x38] sm:$0xf]
    %v507 = vld [vmem:[#allocation3 + $0x3c] sm:$0xf]
    %v508 = vld [vmem:[#allocation3 + $0x40] sm:$0xf]
    %v509 = vld [vmem:[#allocation3 + $0x44] sm:$0xf]
    %v510 = vld [vmem:[#allocation3 + $0x48] sm:$0xf]
    %v511 = vld [vmem:[#allocation3 + $0x4c] sm:$0xf]
    %v512 = vld [vmem:[#allocation3 + $0x50] sm:$0xf]
    %v513 = vld [vmem:[#allocation3 + $0x54] sm:$0xf]
    %v514 = vld [vmem:[#allocation3 + $0x58] sm:$0xf]
    %v515 = vld [vmem:[#allocation3 + $0x5c] sm:$0xf]
    %v516 = vld [vmem:[#allocation3 + $0x60] sm:$0xf]
    %v517 = vld [vmem:[#allocation3 + $0x64] sm:$0xf]
    %v518 = vld [vmem:[#allocation3 + $0x68] sm:$0xf]
    %v519 = vld [vmem:[#allocation3 + $0x6c] sm:$0xf]
    %v520 = vld [vmem:[#allocation3 + $0x70] sm:$0xf]
    %v521 = vld [vmem:[#allocation3 + $0x74] sm:$0xf]
    %v522 = vld [vmem:[#allocation3 + $0x78] sm:$0xf]
    %v523 = vld [vmem:[#allocation3 + $0x7c] sm:$0xf]
    %v524 = vld [vmem:[#allocation3 + $0x80] sm:$0xf]
    %v525 = vld [vmem:[#allocation3 + $0x84] sm:$0xf]
    %v526 = vld [vmem:[#allocation3 + $0x88] sm:$0xf]
    %v527 = vld [vmem:[#allocation3 + $0x8c] sm:$0xf]
    %v528 = vld [vmem:[#allocation3 + $0x90] sm:$0xf]
    %v529 = vld [vmem:[#allocation3 + $0x94] sm:$0xf]
    %v530 = vld [vmem:[#allocation3 + $0x98] sm:$0xf]
    %v531 = vld [vmem:[#allocation3 + $0x9c] sm:$0xf]
    %v532 = vld [vmem:[#allocation3 + $0xa0] sm:$0xf]
    %v533 = vld [vmem:[#allocation3 + $0xa4] sm:$0xf]
    %v534 = vld [vmem:[#allocation3 + $0xa8] sm:$0xf]
    %v535 = vld [vmem:[#allocation3 + $0xac] sm:$0xf]
    %v536 = vld [vmem:[#allocation3 + $0xb0] sm:$0xf]
    %v537 = vld [vmem:[#allocation3 + $0xb4] sm:$0xf]
    %v538 = vld [vmem:[#allocation3 + $0xb8] sm:$0xf]
    %v539 = vld [vmem:[#allocation3 + $0xbc] sm:$0xf]
    %v540 = vld [vmem:[#allocation3 + $0xc0] sm:$0xf]
    %v541 = vld [vmem:[#allocation3 + $0xc4] sm:$0xf]
    %v542 = vld [vmem:[#allocation3 + $0xc8] sm:$0xf]
    %v543 = vld [vmem:[#allocation3 + $0xcc] sm:$0xf]
    %v544 = vld [vmem:[#allocation3 + $0xd0] sm:$0xf]
    %v545 = vld [vmem:[#allocation3 + $0xd4] sm:$0xf]
    %v546 = vld [vmem:[#allocation3 + $0xd8] sm:$0xf]
    %v547 = vld [vmem:[#allocation3 + $0xdc] sm:$0xf]
    %v548 = vld [vmem:[#allocation3 + $0xe0] sm:$0xf]
    %v549 = vld [vmem:[#allocation3 + $0xe4] sm:$0xf]
    %v550 = vld [vmem:[#allocation3 + $0xe8] sm:$0xf]
    %v551 = vld [vmem:[#allocation3 + $0xec] sm:$0xf]
    %v552 = vld [vmem:[#allocation3 + $0xf0] sm:$0xf]
    %v553 = vld [vmem:[#allocation3 + $0xf4] sm:$0xf]
    %v554 = vld [vmem:[#allocation3 + $0xf8] sm:$0xf]
    %v555 = vld [vmem:[#allocation3 + $0xfc] sm:$0xf]
    %v558 = vunpack.c.l.b16 %v482
    %v559 = vunpack.c.h.b16 %v482
    %v560 = vunpack.c.l.b16 %v483
    %v561 = vunpack.c.h.b16 %v483
    %v562 = vpack.c.b16 %v558, %v558
    %v563 = vpack.c.b16 %v559, %v559
    %v564 = vpack.c.b16 %v560, %v560
    %v565 = vpack.c.b16 %v561, %v561
    %v634 = vunpack.c.l.b16 %v492
    %v635 = vunpack.c.l.b16 %v493
    %v636 = vunpack.c.l.b16 %v494
    %v637 = vunpack.c.l.b16 %v495
    %v638 = vunpack.c.l.b16 %v496
    %v639 = vunpack.c.l.b16 %v497
    %v640 = vunpack.c.l.b16 %v498
    %v641 = vunpack.c.l.b16 %v499
    %v642 = vunpack.c.l.b16 %v500
    %v643 = vunpack.c.l.b16 %v501
    %v644 = vunpack.c.l.b16 %v502
    %v645 = vunpack.c.l.b16 %v503
    %v646 = vunpack.c.l.b16 %v504
    %v647 = vunpack.c.l.b16 %v505
    %v648 = vunpack.c.l.b16 %v506
    %v649 = vunpack.c.l.b16 %v507
    %v650 = vunpack.c.l.b16 %v508
    %v651 = vunpack.c.l.b16 %v509
    %v652 = vunpack.c.l.b16 %v510
    %v653 = vunpack.c.l.b16 %v511
    %v654 = vunpack.c.l.b16 %v512
    %v655 = vunpack.c.l.b16 %v513
    %v656 = vunpack.c.l.b16 %v514
    %v657 = vunpack.c.l.b16 %v515
    %v658 = vunpack.c.l.b16 %v516
    %v659 = vunpack.c.l.b16 %v517
    %v660 = vunpack.c.l.b16 %v518
    %v661 = vunpack.c.l.b16 %v519
    %v662 = vunpack.c.l.b16 %v520
    %v663 = vunpack.c.l.b16 %v521
    %v664 = vunpack.c.l.b16 %v522
    %v665 = vunpack.c.l.b16 %v523
    %v666 = vunpack.c.l.b16 %v524
    %v667 = vunpack.c.l.b16 %v525
    %v668 = vunpack.c.l.b16 %v526
    %v669 = vunpack.c.l.b16 %v527
    %v670 = vunpack.c.l.b16 %v528
    %v671 = vunpack.c.l.b16 %v529
    %v672 = vunpack.c.l.b16 %v530
    %v673 = vunpack.c.l.b16 %v531
    %v674 = vunpack.c.l.b16 %v532
    %v675 = vunpack.c.l.b16 %v533
    %v676 = vunpack.c.l.b16 %v534
    %v677 = vunpack.c.l.b16 %v535
    %v678 = vunpack.c.l.b16 %v536
    %v679 = vunpack.c.l.b16 %v537
    %v680 = vunpack.c.l.b16 %v538
    %v681 = vunpack.c.l.b16 %v539
    %v682 = vunpack.c.l.b16 %v540
    %v683 = vunpack.c.l.b16 %v541
    %v684 = vunpack.c.l.b16 %v542
    %v685 = vunpack.c.l.b16 %v543
    %v686 = vunpack.c.l.b16 %v544
    %v687 = vunpack.c.l.b16 %v545
    %v688 = vunpack.c.l.b16 %v546
    %v689 = vunpack.c.l.b16 %v547
    %v690 = vunpack.c.l.b16 %v548
    %v691 = vunpack.c.l.b16 %v549
    %v692 = vunpack.c.l.b16 %v550
    %v693 = vunpack.c.l.b16 %v551
    %v694 = vunpack.c.l.b16 %v552
    %v695 = vunpack.c.l.b16 %v553
    %v696 = vunpack.c.l.b16 %v554
    %v697 = vunpack.c.l.b16 %v555
    %v698 = vpack.c.b16 %v635, %v634
    %v699 = vpack.c.b16 %v637, %v636
    %v700 = vpack.c.b16 %v639, %v638
    %v701 = vpack.c.b16 %v641, %v640
    %v702 = vpack.c.b16 %v643, %v642
    %v703 = vpack.c.b16 %v645, %v644
    %v704 = vpack.c.b16 %v647, %v646
    %v705 = vpack.c.b16 %v649, %v648
    %v706 = vpack.c.b16 %v651, %v650
    %v707 = vpack.c.b16 %v653, %v652
    %v708 = vpack.c.b16 %v655, %v654
    %v709 = vpack.c.b16 %v657, %v656
    %v710 = vpack.c.b16 %v659, %v658
    %v711 = vpack.c.b16 %v661, %v660
    %v712 = vpack.c.b16 %v663, %v662
    %v713 = vpack.c.b16 %v665, %v664
    %v714 = vpack.c.b16 %v667, %v666
    %v715 = vpack.c.b16 %v669, %v668
    %v716 = vpack.c.b16 %v671, %v670
    %v717 = vpack.c.b16 %v673, %v672
    %v718 = vpack.c.b16 %v675, %v674
    %v719 = vpack.c.b16 %v677, %v676
    %v720 = vpack.c.b16 %v679, %v678
    %v721 = vpack.c.b16 %v681, %v680
    %v722 = vpack.c.b16 %v683, %v682
    %v723 = vpack.c.b16 %v685, %v684
    %v724 = vpack.c.b16 %v687, %v686
    %v725 = vpack.c.b16 %v689, %v688
    %v726 = vpack.c.b16 %v691, %v690
    %v727 = vpack.c.b16 %v693, %v692
    %v728 = vpack.c.b16 %v695, %v694
    %v729 = vpack.c.b16 %v697, %v696
    %762 = vmatprep.subr.bf16.mxu0 0
    %763 = vmatpush1.bf16.msra.mxu0 %v705
    %764 = vmatprep.subr.bf16.mxu0 0
    %765 = vmatpush1.bf16.msra.mxu0 %v704
    %766 = vmatprep.subr.bf16.mxu0 0
    %767 = vmatpush1.bf16.msra.mxu0 %v703
    %768 = vmatprep.subr.bf16.mxu0 0
    %769 = vmatpush1.bf16.msra.mxu0 %v702
    %770 = vmatprep.subr.bf16.mxu0 0
    %771 = vmatpush1.bf16.msra.mxu0 %v701
    %772 = vmatprep.subr.bf16.mxu0 0
    %773 = vmatpush1.bf16.msra.mxu0 %v700
    %774 = vmatprep.subr.bf16.mxu0 0
    %775 = vmatpush1.bf16.msra.mxu0 %v699
    %776 = vmatprep.subr.bf16.mxu0 0
    %777 = vmatpush1.bf16.msra.mxu0 %v698
    %778 = vmatprep.subr.bf16.mxu0 0
    %779 = vmatpush2.bf16.msra.mxu0 %v713
    %780 = vmatprep.subr.bf16.mxu0 0
    %781 = vmatpush2.bf16.msra.mxu0 %v712
    %782 = vmatprep.subr.bf16.mxu0 0
    %783 = vmatpush2.bf16.msra.mxu0 %v711
    %784 = vmatprep.subr.bf16.mxu0 0
    %785 = vmatpush2.bf16.msra.mxu0 %v710
    %786 = vmatprep.subr.bf16.mxu0 0
    %787 = vmatpush2.bf16.msra.mxu0 %v709
    %788 = vmatprep.subr.bf16.mxu0 0
    %789 = vmatpush2.bf16.msra.mxu0 %v708
    %790 = vmatprep.subr.bf16.mxu0 0
    %791 = vmatpush2.bf16.msra.mxu0 %v707
    %792 = vmatprep.subr.bf16.mxu0 0
    %793 = vmatpush2.bf16.msra.mxu0 %v706
    %794 = vmatprep.mubr.bf16.mxu0 %v563
    %795 = vmatmul.mubr.bf16.gmra.mxu0 %v562
    %v796 = vpop.f32.mrf.mxu0
    %v797 = vadd.f32 0.0, %v796
    %v798 = vpop.f32.mrf.mxu0
    %v799 = vpop.f32.mrf.mxu0
    %v800 = vpop.f32.mrf.mxu0
    %801 = vdwg.mxu0
    %802 = vmatprep.subr.bf16.mxu0 0
    %803 = vmatpush1.bf16.msra.mxu0 %v721
    %804 = vmatprep.subr.bf16.mxu0 0
    %805 = vmatpush1.bf16.msra.mxu0 %v720
    %806 = vmatprep.subr.bf16.mxu0 0
    %807 = vmatpush1.bf16.msra.mxu0 %v719
    %808 = vmatprep.subr.bf16.mxu0 0
    %809 = vmatpush1.bf16.msra.mxu0 %v718
    %810 = vmatprep.subr.bf16.mxu0 0
    %811 = vmatpush1.bf16.msra.mxu0 %v717
    %812 = vmatprep.subr.bf16.mxu0 0
    %813 = vmatpush1.bf16.msra.mxu0 %v716
    %814 = vmatprep.subr.bf16.mxu0 0
    %815 = vmatpush1.bf16.msra.mxu0 %v715
    %816 = vmatprep.subr.bf16.mxu0 0
    %817 = vmatpush1.bf16.msra.mxu0 %v714
    %818 = vmatprep.subr.bf16.mxu0 0
    %819 = vmatpush2.bf16.msra.mxu0 %v729
    %820 = vmatprep.subr.bf16.mxu0 0
    %821 = vmatpush2.bf16.msra.mxu0 %v728
    %822 = vmatprep.subr.bf16.mxu0 0
    %823 = vmatpush2.bf16.msra.mxu0 %v727
    %824 = vmatprep.subr.bf16.mxu0 0
    %825 = vmatpush2.bf16.msra.mxu0 %v726
    %826 = vmatprep.subr.bf16.mxu0 0
    %827 = vmatpush2.bf16.msra.mxu0 %v725
    %828 = vmatprep.subr.bf16.mxu0 0
    %829 = vmatpush2.bf16.msra.mxu0 %v724
    %830 = vmatprep.subr.bf16.mxu0 0
    %831 = vmatpush2.bf16.msra.mxu0 %v723
    %832 = vmatprep.subr.bf16.mxu0 0
    %833 = vmatpush2.bf16.msra.mxu0 %v722
    %834 = vmatprep.mubr.bf16.mxu0 %v565
    %835 = vmatmul.mubr.bf16.gmra.mxu0 %v564
    %v836 = vpop.f32.mrf.mxu0
    %v837 = vadd.f32 %v797, %v836
    %v838 = vpop.f32.mrf.mxu0
    %v839 = vpop.f32.mrf.mxu0
    %v840 = vpop.f32.mrf.mxu0
    %841 = vdwg.mxu0
    %v844 = vunpack.c.l.b16 %v484
    %v845 = vunpack.c.h.b16 %v484
    %v846 = vunpack.c.l.b16 %v485
    %v847 = vunpack.c.h.b16 %v485
    %v848 = vpack.c.b16 %v844, %v844
    %v849 = vpack.c.b16 %v845, %v845
    %v850 = vpack.c.b16 %v846, %v846
    %v851 = vpack.c.b16 %v847, %v847
    %856 = vmatprep.subr.bf16.mxu0 0
    %857 = vmatpush1.bf16.msra.mxu0 %v705
    %858 = vmatprep.subr.bf16.mxu0 0
    %859 = vmatpush1.bf16.msra.mxu0 %v704
    %860 = vmatprep.subr.bf16.mxu0 0
    %861 = vmatpush1.bf16.msra.mxu0 %v703
    %862 = vmatprep.subr.bf16.mxu0 0
    %863 = vmatpush1.bf16.msra.mxu0 %v702
    %864 = vmatprep.subr.bf16.mxu0 0
    %865 = vmatpush1.bf16.msra.mxu0 %v701
    %866 = vmatprep.subr.bf16.mxu0 0
    %867 = vmatpush1.bf16.msra.mxu0 %v700
    %868 = vmatprep.subr.bf16.mxu0 0
    %869 = vmatpush1.bf16.msra.mxu0 %v699
    %870 = vmatprep.subr.bf16.mxu0 0
    %871 = vmatpush1.bf16.msra.mxu0 %v698
    %872 = vmatprep.subr.bf16.mxu0 0
    %873 = vmatpush2.bf16.msra.mxu0 %v713
    %874 = vmatprep.subr.bf16.mxu0 0
    %875 = vmatpush2.bf16.msra.mxu0 %v712
    %876 = vmatprep.subr.bf16.mxu0 0
    %877 = vmatpush2.bf16.msra.mxu0 %v711
    %878 = vmatprep.subr.bf16.mxu0 0
    %879 = vmatpush2.bf16.msra.mxu0 %v710
    %880 = vmatprep.subr.bf16.mxu0 0
    %881 = vmatpush2.bf16.msra.mxu0 %v709
    %882 = vmatprep.subr.bf16.mxu0 0
    %883 = vmatpush2.bf16.msra.mxu0 %v708
    %884 = vmatprep.subr.bf16.mxu0 0
    %885 = vmatpush2.bf16.msra.mxu0 %v707
    %886 = vmatprep.subr.bf16.mxu0 0
    %887 = vmatpush2.bf16.msra.mxu0 %v706
    %888 = vmatprep.mubr.bf16.mxu0 %v849
    %889 = vmatmul.mubr.bf16.gmra.mxu0 %v848
    %v890 = vpop.f32.mrf.mxu0
    %v891 = vadd.f32 0.0, %v890
    %v892 = vpop.f32.mrf.mxu0
    %v893 = vpop.f32.mrf.mxu0
    %v894 = vpop.f32.mrf.mxu0
    %895 = vdwg.mxu0
    %896 = vmatprep.subr.bf16.mxu0 0
    %897 = vmatpush1.bf16.msra.mxu0 %v721
    %898 = vmatprep.subr.bf16.mxu0 0
    %899 = vmatpush1.bf16.msra.mxu0 %v720
    %900 = vmatprep.subr.bf16.mxu0 0
    %901 = vmatpush1.bf16.msra.mxu0 %v719
    %902 = vmatprep.subr.bf16.mxu0 0
    %903 = vmatpush1.bf16.msra.mxu0 %v718
    %904 = vmatprep.subr.bf16.mxu0 0
    %905 = vmatpush1.bf16.msra.mxu0 %v717
    %906 = vmatprep.subr.bf16.mxu0 0
    %907 = vmatpush1.bf16.msra.mxu0 %v716
    %908 = vmatprep.subr.bf16.mxu0 0
    %909 = vmatpush1.bf16.msra.mxu0 %v715
    %910 = vmatprep.subr.bf16.mxu0 0
    %911 = vmatpush1.bf16.msra.mxu0 %v714
    %912 = vmatprep.subr.bf16.mxu0 0
    %913 = vmatpush2.bf16.msra.mxu0 %v729
    %914 = vmatprep.subr.bf16.mxu0 0
    %915 = vmatpush2.bf16.msra.mxu0 %v728
    %916 = vmatprep.subr.bf16.mxu0 0
    %917 = vmatpush2.bf16.msra.mxu0 %v727
    %918 = vmatprep.subr.bf16.mxu0 0
    %919 = vmatpush2.bf16.msra.mxu0 %v726
    %920 = vmatprep.subr.bf16.mxu0 0
    %921 = vmatpush2.bf16.msra.mxu0 %v725
    %922 = vmatprep.subr.bf16.mxu0 0
    %923 = vmatpush2.bf16.msra.mxu0 %v724
    %924 = vmatprep.subr.bf16.mxu0 0
    %925 = vmatpush2.bf16.msra.mxu0 %v723
    %926 = vmatprep.subr.bf16.mxu0 0
    %927 = vmatpush2.bf16.msra.mxu0 %v722
    %928 = vmatprep.mubr.bf16.mxu0 %v851
    %929 = vmatmul.mubr.bf16.gmra.mxu0 %v850
    %v930 = vpop.f32.mrf.mxu0
    %v931 = vadd.f32 %v891, %v930
    %v932 = vpop.f32.mrf.mxu0
    %v933 = vpop.f32.mrf.mxu0
    %v934 = vpop.f32.mrf.mxu0
    %935 = vdwg.mxu0
    %v938 = vunpack.c.l.b16 %v486
    %v939 = vunpack.c.h.b16 %v486
    %v940 = vunpack.c.l.b16 %v487
    %v941 = vunpack.c.h.b16 %v487
    %v942 = vpack.c.b16 %v938, %v938
    %v943 = vpack.c.b16 %v939, %v939
    %v944 = vpack.c.b16 %v940, %v940
    %v945 = vpack.c.b16 %v941, %v941
    %950 = vmatprep.subr.bf16.mxu0 0
    %951 = vmatpush1.bf16.msra.mxu0 %v705
    %952 = vmatprep.subr.bf16.mxu0 0
    %953 = vmatpush1.bf16.msra.mxu0 %v704
    %954 = vmatprep.subr.bf16.mxu0 0
    %955 = vmatpush1.bf16.msra.mxu0 %v703
    %956 = vmatprep.subr.bf16.mxu0 0
    %957 = vmatpush1.bf16.msra.mxu0 %v702
    %958 = vmatprep.subr.bf16.mxu0 0
    %959 = vmatpush1.bf16.msra.mxu0 %v701
    %960 = vmatprep.subr.bf16.mxu0 0
    %961 = vmatpush1.bf16.msra.mxu0 %v700
    %962 = vmatprep.subr.bf16.mxu0 0
    %963 = vmatpush1.bf16.msra.mxu0 %v699
    %964 = vmatprep.subr.bf16.mxu0 0
    %965 = vmatpush1.bf16.msra.mxu0 %v698
    %966 = vmatprep.subr.bf16.mxu0 0
    %967 = vmatpush2.bf16.msra.mxu0 %v713
    %968 = vmatprep.subr.bf16.mxu0 0
    %969 = vmatpush2.bf16.msra.mxu0 %v712
    %970 = vmatprep.subr.bf16.mxu0 0
    %971 = vmatpush2.bf16.msra.mxu0 %v711
    %972 = vmatprep.subr.bf16.mxu0 0
    %973 = vmatpush2.bf16.msra.mxu0 %v710
    %974 = vmatprep.subr.bf16.mxu0 0
    %975 = vmatpush2.bf16.msra.mxu0 %v709
    %976 = vmatprep.subr.bf16.mxu0 0
    %977 = vmatpush2.bf16.msra.mxu0 %v708
    %978 = vmatprep.subr.bf16.mxu0 0
    %979 = vmatpush2.bf16.msra.mxu0 %v707
    %980 = vmatprep.subr.bf16.mxu0 0
    %981 = vmatpush2.bf16.msra.mxu0 %v706
    %982 = vmatprep.mubr.bf16.mxu0 %v943
    %983 = vmatmul.mubr.bf16.gmra.mxu0 %v942
    %v984 = vpop.f32.mrf.mxu0
    %v985 = vadd.f32 0.0, %v984
    %v986 = vpop.f32.mrf.mxu0
    %v987 = vpop.f32.mrf.mxu0
    %v988 = vpop.f32.mrf.mxu0
    %989 = vdwg.mxu0
    %990 = vmatprep.subr.bf16.mxu0 0
    %991 = vmatpush1.bf16.msra.mxu0 %v721
    %992 = vmatprep.subr.bf16.mxu0 0
    %993 = vmatpush1.bf16.msra.mxu0 %v720
    %994 = vmatprep.subr.bf16.mxu0 0
    %995 = vmatpush1.bf16.msra.mxu0 %v719
    %996 = vmatprep.subr.bf16.mxu0 0
    %997 = vmatpush1.bf16.msra.mxu0 %v718
    %998 = vmatprep.subr.bf16.mxu0 0
    %999 = vmatpush1.bf16.msra.mxu0 %v717
    %1000 = vmatprep.subr.bf16.mxu0 0
    %1001 = vmatpush1.bf16.msra.mxu0 %v716
    %1002 = vmatprep.subr.bf16.mxu0 0
    %1003 = vmatpush1.bf16.msra.mxu0 %v715
    %1004 = vmatprep.subr.bf16.mxu0 0
    %1005 = vmatpush1.bf16.msra.mxu0 %v714
    %1006 = vmatprep.subr.bf16.mxu0 0
    %1007 = vmatpush2.bf16.msra.mxu0 %v729
    %1008 = vmatprep.subr.bf16.mxu0 0
    %1009 = vmatpush2.bf16.msra.mxu0 %v728
    %1010 = vmatprep.subr.bf16.mxu0 0
    %1011 = vmatpush2.bf16.msra.mxu0 %v727
    %1012 = vmatprep.subr.bf16.mxu0 0
    %1013 = vmatpush2.bf16.msra.mxu0 %v726
    %1014 = vmatprep.subr.bf16.mxu0 0
    %1015 = vmatpush2.bf16.msra.mxu0 %v725
    %1016 = vmatprep.subr.bf16.mxu0 0
    %1017 = vmatpush2.bf16.msra.mxu0 %v724
    %1018 = vmatprep.subr.bf16.mxu0 0
    %1019 = vmatpush2.bf16.msra.mxu0 %v723
    %1020 = vmatprep.subr.bf16.mxu0 0
    %1021 = vmatpush2.bf16.msra.mxu0 %v722
    %1022 = vmatprep.mubr.bf16.mxu0 %v945
    %1023 = vmatmul.mubr.bf16.gmra.mxu0 %v944
    %v1024 = vpop.f32.mrf.mxu0
    %v1025 = vadd.f32 %v985, %v1024
    %v1026 = vpop.f32.mrf.mxu0
    %v1027 = vpop.f32.mrf.mxu0
    %v1028 = vpop.f32.mrf.mxu0
    %1029 = vdwg.mxu0
    %v1032 = vunpack.c.l.b16 %v488
    %v1033 = vunpack.c.h.b16 %v488
    %v1034 = vunpack.c.l.b16 %v489
    %v1035 = vunpack.c.h.b16 %v489
    %v1036 = vpack.c.b16 %v1032, %v1032
    %v1037 = vpack.c.b16 %v1033, %v1033
    %v1038 = vpack.c.b16 %v1034, %v1034
    %v1039 = vpack.c.b16 %v1035, %v1035
    %1044 = vmatprep.subr.bf16.mxu0 0
    %1045 = vmatpush1.bf16.msra.mxu0 %v705
    %1046 = vmatprep.subr.bf16.mxu0 0
    %1047 = vmatpush1.bf16.msra.mxu0 %v704
    %1048 = vmatprep.subr.bf16.mxu0 0
    %1049 = vmatpush1.bf16.msra.mxu0 %v703
    %1050 = vmatprep.subr.bf16.mxu0 0
    %1051 = vmatpush1.bf16.msra.mxu0 %v702
    %1052 = vmatprep.subr.bf16.mxu0 0
    %1053 = vmatpush1.bf16.msra.mxu0 %v701
    %1054 = vmatprep.subr.bf16.mxu0 0
    %1055 = vmatpush1.bf16.msra.mxu0 %v700
    %1056 = vmatprep.subr.bf16.mxu0 0
    %1057 = vmatpush1.bf16.msra.mxu0 %v699
    %1058 = vmatprep.subr.bf16.mxu0 0
    %1059 = vmatpush1.bf16.msra.mxu0 %v698
    %1060 = vmatprep.subr.bf16.mxu0 0
    %1061 = vmatpush2.bf16.msra.mxu0 %v713
    %1062 = vmatprep.subr.bf16.mxu0 0
    %1063 = vmatpush2.bf16.msra.mxu0 %v712
    %1064 = vmatprep.subr.bf16.mxu0 0
    %1065 = vmatpush2.bf16.msra.mxu0 %v711
    %1066 = vmatprep.subr.bf16.mxu0 0
    %1067 = vmatpush2.bf16.msra.mxu0 %v710
    %1068 = vmatprep.subr.bf16.mxu0 0
    %1069 = vmatpush2.bf16.msra.mxu0 %v709
    %1070 = vmatprep.subr.bf16.mxu0 0
    %1071 = vmatpush2.bf16.msra.mxu0 %v708
    %1072 = vmatprep.subr.bf16.mxu0 0
    %1073 = vmatpush2.bf16.msra.mxu0 %v707
    %1074 = vmatprep.subr.bf16.mxu0 0
    %1075 = vmatpush2.bf16.msra.mxu0 %v706
    %1076 = vmatprep.mubr.bf16.mxu0 %v1037
    %1077 = vmatmul.mubr.bf16.gmra.mxu0 %v1036
    %v1078 = vpop.f32.mrf.mxu0
    %v1079 = vadd.f32 0.0, %v1078
    %v1080 = vpop.f32.mrf.mxu0
    %v1081 = vpop.f32.mrf.mxu0
    %v1082 = vpop.f32.mrf.mxu0
    %1083 = vdwg.mxu0
    %1084 = vmatprep.subr.bf16.mxu0 0
    %1085 = vmatpush1.bf16.msra.mxu0 %v721
    %1086 = vmatprep.subr.bf16.mxu0 0
    %1087 = vmatpush1.bf16.msra.mxu0 %v720
    %1088 = vmatprep.subr.bf16.mxu0 0
    %1089 = vmatpush1.bf16.msra.mxu0 %v719
    %1090 = vmatprep.subr.bf16.mxu0 0
    %1091 = vmatpush1.bf16.msra.mxu0 %v718
    %1092 = vmatprep.subr.bf16.mxu0 0
    %1093 = vmatpush1.bf16.msra.mxu0 %v717
    %1094 = vmatprep.subr.bf16.mxu0 0
    %1095 = vmatpush1.bf16.msra.mxu0 %v716
    %1096 = vmatprep.subr.bf16.mxu0 0
    %1097 = vmatpush1.bf16.msra.mxu0 %v715
    %1098 = vmatprep.subr.bf16.mxu0 0
    %1099 = vmatpush1.bf16.msra.mxu0 %v714
    %1100 = vmatprep.subr.bf16.mxu0 0
    %1101 = vmatpush2.bf16.msra.mxu0 %v729
    %1102 = vmatprep.subr.bf16.mxu0 0
    %1103 = vmatpush2.bf16.msra.mxu0 %v728
    %1104 = vmatprep.subr.bf16.mxu0 0
    %1105 = vmatpush2.bf16.msra.mxu0 %v727
    %1106 = vmatprep.subr.bf16.mxu0 0
    %1107 = vmatpush2.bf16.msra.mxu0 %v726
    %1108 = vmatprep.subr.bf16.mxu0 0
    %1109 = vmatpush2.bf16.msra.mxu0 %v725
    %1110 = vmatprep.subr.bf16.mxu0 0
    %1111 = vmatpush2.bf16.msra.mxu0 %v724
    %1112 = vmatprep.subr.bf16.mxu0 0
    %1113 = vmatpush2.bf16.msra.mxu0 %v723
    %1114 = vmatprep.subr.bf16.mxu0 0
    %1115 = vmatpush2.bf16.msra.mxu0 %v722
    %1116 = vmatprep.mubr.bf16.mxu0 %v1039
    %1117 = vmatmul.mubr.bf16.gmra.mxu0 %v1038
    %v1118 = vpop.f32.mrf.mxu0
    %v1119 = vadd.f32 %v1079, %v1118
    %v1120 = vpop.f32.mrf.mxu0
    %v1121 = vpop.f32.mrf.mxu0
    %v1122 = vpop.f32.mrf.mxu0
    %1123 = vdwg.mxu0
    %v1126 = vunpack.c.l.b16 %v490
    %v1127 = vunpack.c.h.b16 %v490
    %v1128 = vunpack.c.l.b16 %v491
    %v1129 = vunpack.c.h.b16 %v491
    %v1130 = vpack.c.b16 %v1126, %v1126
    %v1131 = vpack.c.b16 %v1127, %v1127
    %v1132 = vpack.c.b16 %v1128, %v1128
    %v1133 = vpack.c.b16 %v1129, %v1129
    %1138 = vmatprep.subr.bf16.mxu0 0
    %1139 = vmatpush1.bf16.msra.mxu0 %v705
    %1140 = vmatprep.subr.bf16.mxu0 0
    %1141 = vmatpush1.bf16.msra.mxu0 %v704
    %1142 = vmatprep.subr.bf16.mxu0 0
    %1143 = vmatpush1.bf16.msra.mxu0 %v703
    %1144 = vmatprep.subr.bf16.mxu0 0
    %1145 = vmatpush1.bf16.msra.mxu0 %v702
    %1146 = vmatprep.subr.bf16.mxu0 0
    %1147 = vmatpush1.bf16.msra.mxu0 %v701
    %1148 = vmatprep.subr.bf16.mxu0 0
    %1149 = vmatpush1.bf16.msra.mxu0 %v700
    %1150 = vmatprep.subr.bf16.mxu0 0
    %1151 = vmatpush1.bf16.msra.mxu0 %v699
    %1152 = vmatprep.subr.bf16.mxu0 0
    %1153 = vmatpush1.bf16.msra.mxu0 %v698
    %1154 = vmatprep.subr.bf16.mxu0 0
    %1155 = vmatpush2.bf16.msra.mxu0 %v713
    %1156 = vmatprep.subr.bf16.mxu0 0
    %1157 = vmatpush2.bf16.msra.mxu0 %v712
    %1158 = vmatprep.subr.bf16.mxu0 0
    %1159 = vmatpush2.bf16.msra.mxu0 %v711
    %1160 = vmatprep.subr.bf16.mxu0 0
    %1161 = vmatpush2.bf16.msra.mxu0 %v710
    %1162 = vmatprep.subr.bf16.mxu0 0
    %1163 = vmatpush2.bf16.msra.mxu0 %v709
    %1164 = vmatprep.subr.bf16.mxu0 0
    %1165 = vmatpush2.bf16.msra.mxu0 %v708
    %1166 = vmatprep.subr.bf16.mxu0 0
    %1167 = vmatpush2.bf16.msra.mxu0 %v707
    %1168 = vmatprep.subr.bf16.mxu0 0
    %1169 = vmatpush2.bf16.msra.mxu0 %v706
    %1170 = vmatprep.mubr.bf16.mxu0 %v1131
    %1171 = vmatmul.mubr.bf16.gmra.mxu0 %v1130
    %v1172 = vpop.f32.mrf.mxu0
    %v1173 = vadd.f32 0.0, %v1172
    %v1174 = vpop.f32.mrf.mxu0
    %v1175 = vpop.f32.mrf.mxu0
    %v1176 = vpop.f32.mrf.mxu0
    %1177 = vdwg.mxu0
    %1178 = vmatprep.subr.bf16.mxu0 0
    %1179 = vmatpush1.bf16.msra.mxu0 %v721
    %1180 = vmatprep.subr.bf16.mxu0 0
    %1181 = vmatpush1.bf16.msra.mxu0 %v720
    %1182 = vmatprep.subr.bf16.mxu0 0
    %1183 = vmatpush1.bf16.msra.mxu0 %v719
    %1184 = vmatprep.subr.bf16.mxu0 0
    %1185 = vmatpush1.bf16.msra.mxu0 %v718
    %1186 = vmatprep.subr.bf16.mxu0 0
    %1187 = vmatpush1.bf16.msra.mxu0 %v717
    %1188 = vmatprep.subr.bf16.mxu0 0
    %1189 = vmatpush1.bf16.msra.mxu0 %v716
    %1190 = vmatprep.subr.bf16.mxu0 0
    %1191 = vmatpush1.bf16.msra.mxu0 %v715
    %1192 = vmatprep.subr.bf16.mxu0 0
    %1193 = vmatpush1.bf16.msra.mxu0 %v714
    %1194 = vmatprep.subr.bf16.mxu0 0
    %1195 = vmatpush2.bf16.msra.mxu0 %v729
    %1196 = vmatprep.subr.bf16.mxu0 0
    %1197 = vmatpush2.bf16.msra.mxu0 %v728
    %1198 = vmatprep.subr.bf16.mxu0 0
    %1199 = vmatpush2.bf16.msra.mxu0 %v727
    %1200 = vmatprep.subr.bf16.mxu0 0
    %1201 = vmatpush2.bf16.msra.mxu0 %v726
    %1202 = vmatprep.subr.bf16.mxu0 0
    %1203 = vmatpush2.bf16.msra.mxu0 %v725
    %1204 = vmatprep.subr.bf16.mxu0 0
    %1205 = vmatpush2.bf16.msra.mxu0 %v724
    %1206 = vmatprep.subr.bf16.mxu0 0
    %1207 = vmatpush2.bf16.msra.mxu0 %v723
    %1208 = vmatprep.subr.bf16.mxu0 0
    %1209 = vmatpush2.bf16.msra.mxu0 %v722
    %1210 = vmatprep.mubr.bf16.mxu0 %v1133
    %1211 = vmatmul.mubr.bf16.gmra.mxu0 %v1132
    %v1212 = vpop.f32.mrf.mxu0
    %v1213 = vadd.f32 %v1173, %v1212
    %v1214 = vpop.f32.mrf.mxu0
    %v1215 = vpop.f32.mrf.mxu0
    %v1216 = vpop.f32.mrf.mxu0
    %1217 = vdwg.mxu0
    %v1218 = vpack.c.bf16 %v837, %v837
    %v1219 = vpack.c.bf16 %v931, %v931
    %v1220 = vpack.c.bf16 %v1025, %v1025
    %v1221 = vpack.c.bf16 %v1119, %v1119
    %v1222 = vpack.c.bf16 %v1213, %v1213
    %v1223 = vld [vmem:[#allocation7] sm:$0xff]
    %v1224 = vld [vmem:[#allocation7 + $0x8] sm:$0xff]
    %v1225 = vld [vmem:[#allocation7 + $0x10] sm:$0xff]
    %v1226 = vld [vmem:[#allocation7 + $0x18] sm:$0xff]
    %v1227 = vld [vmem:[#allocation7 + $0x20] sm:$0xff]
    %v1228 = vld [vmem:[#allocation7 + $0x28] sm:$0xff]
    %v1229 = vld [vmem:[#allocation7 + $0x30] sm:$0xff]
    %v1230 = vld [vmem:[#allocation7 + $0x38] sm:$0xff]
    %v1231 = vld [vmem:[#allocation7 + $0x40] sm:$0xff]
    %v1232 = vld [vmem:[#allocation7 + $0x48] sm:$0xff]
    %v1233 = vld [vmem:[#allocation7 + $0x50] sm:$0xff]
    %v1234 = vld [vmem:[#allocation7 + $0x58] sm:$0xff]
    %v1235 = vld [vmem:[#allocation7 + $0x60] sm:$0xff]
    %v1236 = vld [vmem:[#allocation7 + $0x68] sm:$0xff]
    %v1237 = vld [vmem:[#allocation7 + $0x70] sm:$0xff]
    %v1238 = vld [vmem:[#allocation7 + $0x78] sm:$0xff]
    %v1239 = vld [vmem:[#allocation7 + $0x80] sm:$0xff]
    %v1240 = vld [vmem:[#allocation7 + $0x88] sm:$0xff]
    %v1241 = vld [vmem:[#allocation7 + $0x90] sm:$0xff]
    %v1242 = vld [vmem:[#allocation7 + $0x98] sm:$0xff]
    %v1243 = vld [vmem:[#allocation7 + $0xa0] sm:$0xff]
    %v1244 = vld [vmem:[#allocation7 + $0xa8] sm:$0xff]
    %v1245 = vld [vmem:[#allocation7 + $0xb0] sm:$0xff]
    %v1246 = vld [vmem:[#allocation7 + $0xb8] sm:$0xff]
    %v1247 = vld [vmem:[#allocation7 + $0xc0] sm:$0xff]
    %v1248 = vld [vmem:[#allocation7 + $0xc8] sm:$0xff]
    %v1249 = vld [vmem:[#allocation7 + $0xd0] sm:$0xff]
    %v1250 = vld [vmem:[#allocation7 + $0xd8] sm:$0xff]
    %v1251 = vld [vmem:[#allocation7 + $0xe0] sm:$0xff]
    %v1252 = vld [vmem:[#allocation7 + $0xe8] sm:$0xff]
    %v1253 = vld [vmem:[#allocation7 + $0xf0] sm:$0xff]
    %v1254 = vld [vmem:[#allocation7 + $0xf8] sm:$0xff]
    %v1255 = vld [vmem:[#allocation7 + $0x100] sm:$0xff]
    %v1256 = vld [vmem:[#allocation7 + $0x108] sm:$0xff]
    %v1257 = vld [vmem:[#allocation7 + $0x110] sm:$0xff]
    %v1258 = vld [vmem:[#allocation7 + $0x118] sm:$0xff]
    %v1259 = vld [vmem:[#allocation7 + $0x120] sm:$0xff]
    %v1260 = vld [vmem:[#allocation7 + $0x128] sm:$0xff]
    %v1261 = vld [vmem:[#allocation7 + $0x130] sm:$0xff]
    %v1262 = vld [vmem:[#allocation7 + $0x138] sm:$0xff]
    %v1263 = vld [vmem:[#allocation7 + $0x140] sm:$0xff]
    %v1264 = vld [vmem:[#allocation7 + $0x148] sm:$0xff]
    %v1265 = vld [vmem:[#allocation7 + $0x150] sm:$0xff]
    %v1266 = vld [vmem:[#allocation7 + $0x158] sm:$0xff]
    %v1267 = vld [vmem:[#allocation7 + $0x160] sm:$0xff]
    %v1268 = vld [vmem:[#allocation7 + $0x168] sm:$0xff]
    %v1269 = vld [vmem:[#allocation7 + $0x170] sm:$0xff]
    %v1270 = vld [vmem:[#allocation7 + $0x178] sm:$0xff]
    %v1271 = vld [vmem:[#allocation7 + $0x180] sm:$0xff]
    %v1272 = vld [vmem:[#allocation7 + $0x188] sm:$0xff]
    %v1273 = vld [vmem:[#allocation7 + $0x190] sm:$0xff]
    %v1274 = vld [vmem:[#allocation7 + $0x198] sm:$0xff]
    %v1275 = vld [vmem:[#allocation7 + $0x1a0] sm:$0xff]
    %v1276 = vld [vmem:[#allocation7 + $0x1a8] sm:$0xff]
    %v1277 = vld [vmem:[#allocation7 + $0x1b0] sm:$0xff]
    %v1278 = vld [vmem:[#allocation7 + $0x1b8] sm:$0xff]
    %v1279 = vld [vmem:[#allocation7 + $0x1c0] sm:$0xff]
    %v1280 = vld [vmem:[#allocation7 + $0x1c8] sm:$0xff]
    %v1281 = vld [vmem:[#allocation7 + $0x1d0] sm:$0xff]
    %v1282 = vld [vmem:[#allocation7 + $0x1d8] sm:$0xff]
    %v1283 = vld [vmem:[#allocation7 + $0x1e0] sm:$0xff]
    %v1284 = vld [vmem:[#allocation7 + $0x1e8] sm:$0xff]
    %v1285 = vld [vmem:[#allocation7 + $0x1f0] sm:$0xff]
    %v1286 = vld [vmem:[#allocation7 + $0x1f8] sm:$0xff]
    %v1287 = vld [vmem:[#allocation7 + $0x200] sm:$0xff]
    %v1288 = vld [vmem:[#allocation7 + $0x208] sm:$0xff]
    %v1289 = vld [vmem:[#allocation7 + $0x210] sm:$0xff]
    %v1290 = vld [vmem:[#allocation7 + $0x218] sm:$0xff]
    %v1291 = vld [vmem:[#allocation7 + $0x220] sm:$0xff]
    %v1292 = vld [vmem:[#allocation7 + $0x228] sm:$0xff]
    %v1293 = vld [vmem:[#allocation7 + $0x230] sm:$0xff]
    %v1294 = vld [vmem:[#allocation7 + $0x238] sm:$0xff]
    %v1295 = vld [vmem:[#allocation7 + $0x240] sm:$0xff]
    %v1296 = vld [vmem:[#allocation7 + $0x248] sm:$0xff]
    %v1297 = vld [vmem:[#allocation7 + $0x250] sm:$0xff]
    %v1298 = vld [vmem:[#allocation7 + $0x258] sm:$0xff]
    %v1299 = vld [vmem:[#allocation7 + $0x260] sm:$0xff]
    %v1300 = vld [vmem:[#allocation7 + $0x268] sm:$0xff]
    %v1301 = vld [vmem:[#allocation7 + $0x270] sm:$0xff]
    %v1302 = vld [vmem:[#allocation7 + $0x278] sm:$0xff]
    %v1303 = vld [vmem:[#allocation7 + $0x280] sm:$0xff]
    %v1304 = vld [vmem:[#allocation7 + $0x288] sm:$0xff]
    %v1305 = vld [vmem:[#allocation7 + $0x290] sm:$0xff]
    %v1306 = vld [vmem:[#allocation7 + $0x298] sm:$0xff]
    %v1307 = vld [vmem:[#allocation7 + $0x2a0] sm:$0xff]
    %v1308 = vld [vmem:[#allocation7 + $0x2a8] sm:$0xff]
    %v1309 = vld [vmem:[#allocation7 + $0x2b0] sm:$0xff]
    %v1310 = vld [vmem:[#allocation7 + $0x2b8] sm:$0xff]
    %v1311 = vld [vmem:[#allocation7 + $0x2c0] sm:$0xff]
    %v1312 = vld [vmem:[#allocation7 + $0x2c8] sm:$0xff]
    %v1313 = vld [vmem:[#allocation7 + $0x2d0] sm:$0xff]
    %v1314 = vld [vmem:[#allocation7 + $0x2d8] sm:$0xff]
    %v1315 = vld [vmem:[#allocation7 + $0x2e0] sm:$0xff]
    %v1316 = vld [vmem:[#allocation7 + $0x2e8] sm:$0xff]
    %v1317 = vld [vmem:[#allocation7 + $0x2f0] sm:$0xff]
    %v1318 = vld [vmem:[#allocation7 + $0x2f8] sm:$0xff]
    %v1319 = vld [vmem:[#allocation7 + $0x300] sm:$0xff]
    %v1320 = vld [vmem:[#allocation7 + $0x308] sm:$0xff]
    %v1321 = vld [vmem:[#allocation7 + $0x310] sm:$0xff]
    %v1322 = vld [vmem:[#allocation7 + $0x318] sm:$0xff]
    %v1323 = vld [vmem:[#allocation7 + $0x320] sm:$0xff]
    %v1324 = vld [vmem:[#allocation7 + $0x328] sm:$0xff]
    %v1325 = vld [vmem:[#allocation7 + $0x330] sm:$0xff]
    %v1326 = vld [vmem:[#allocation7 + $0x338] sm:$0xff]
    %v1327 = vld [vmem:[#allocation7 + $0x340] sm:$0xff]
    %v1328 = vld [vmem:[#allocation7 + $0x348] sm:$0xff]
    %v1329 = vld [vmem:[#allocation7 + $0x350] sm:$0xff]
    %v1330 = vld [vmem:[#allocation7 + $0x358] sm:$0xff]
    %v1331 = vld [vmem:[#allocation7 + $0x360] sm:$0xff]
    %v1332 = vld [vmem:[#allocation7 + $0x368] sm:$0xff]
    %v1333 = vld [vmem:[#allocation7 + $0x370] sm:$0xff]
    %v1334 = vld [vmem:[#allocation7 + $0x378] sm:$0xff]
    %v1335 = vld [vmem:[#allocation7 + $0x380] sm:$0xff]
    %v1336 = vld [vmem:[#allocation7 + $0x388] sm:$0xff]
    %v1337 = vld [vmem:[#allocation7 + $0x390] sm:$0xff]
    %v1338 = vld [vmem:[#allocation7 + $0x398] sm:$0xff]
    %v1339 = vld [vmem:[#allocation7 + $0x3a0] sm:$0xff]
    %v1340 = vld [vmem:[#allocation7 + $0x3a8] sm:$0xff]
    %v1341 = vld [vmem:[#allocation7 + $0x3b0] sm:$0xff]
    %v1342 = vld [vmem:[#allocation7 + $0x3b8] sm:$0xff]
    %v1343 = vld [vmem:[#allocation7 + $0x3c0] sm:$0xff]
    %v1344 = vld [vmem:[#allocation7 + $0x3c8] sm:$0xff]
    %v1345 = vld [vmem:[#allocation7 + $0x3d0] sm:$0xff]
    %v1346 = vld [vmem:[#allocation7 + $0x3d8] sm:$0xff]
    %v1347 = vld [vmem:[#allocation7 + $0x3e0] sm:$0xff]
    %v1348 = vld [vmem:[#allocation7 + $0x3e8] sm:$0xff]
    %v1349 = vld [vmem:[#allocation7 + $0x3f0] sm:$0xff]
    %v1350 = vld [vmem:[#allocation7 + $0x3f8] sm:$0xff]
    %v1351 = vld [vmem:[#allocation7 + $0x400] sm:$0xff]
    %v1352 = vld [vmem:[#allocation7 + $0x408] sm:$0xff]
    %v1353 = vld [vmem:[#allocation7 + $0x410] sm:$0xff]
    %v1354 = vld [vmem:[#allocation7 + $0x418] sm:$0xff]
    %v1355 = vld [vmem:[#allocation7 + $0x420] sm:$0xff]
    %v1356 = vld [vmem:[#allocation7 + $0x428] sm:$0xff]
    %v1357 = vld [vmem:[#allocation7 + $0x430] sm:$0xff]
    %v1358 = vld [vmem:[#allocation7 + $0x438] sm:$0xff]
    %v1359 = vld [vmem:[#allocation7 + $0x440] sm:$0xff]
    %v1360 = vld [vmem:[#allocation7 + $0x448] sm:$0xff]
    %v1361 = vld [vmem:[#allocation7 + $0x450] sm:$0xff]
    %v1362 = vld [vmem:[#allocation7 + $0x458] sm:$0xff]
    %v1363 = vld [vmem:[#allocation7 + $0x460] sm:$0xff]
    %v1364 = vld [vmem:[#allocation7 + $0x468] sm:$0xff]
    %v1365 = vld [vmem:[#allocation7 + $0x470] sm:$0xff]
    %v1366 = vld [vmem:[#allocation7 + $0x478] sm:$0xff]
    %v1367 = vld [vmem:[#allocation7 + $0x480] sm:$0xff]
    %v1368 = vld [vmem:[#allocation7 + $0x488] sm:$0xff]
    %v1369 = vld [vmem:[#allocation7 + $0x490] sm:$0xff]
    %v1370 = vld [vmem:[#allocation7 + $0x498] sm:$0xff]
    %v1371 = vld [vmem:[#allocation7 + $0x4a0] sm:$0xff]
    %v1372 = vld [vmem:[#allocation7 + $0x4a8] sm:$0xff]
    %v1373 = vld [vmem:[#allocation7 + $0x4b0] sm:$0xff]
    %v1374 = vld [vmem:[#allocation7 + $0x4b8] sm:$0xff]
    %v1375 = vld [vmem:[#allocation7 + $0x4c0] sm:$0xff]
    %v1376 = vld [vmem:[#allocation7 + $0x4c8] sm:$0xff]
    %v1377 = vld [vmem:[#allocation7 + $0x4d0] sm:$0xff]
    %v1378 = vld [vmem:[#allocation7 + $0x4d8] sm:$0xff]
    %v1379 = vld [vmem:[#allocation7 + $0x4e0] sm:$0xff]
    %v1380 = vld [vmem:[#allocation7 + $0x4e8] sm:$0xff]
    %v1381 = vld [vmem:[#allocation7 + $0x4f0] sm:$0xff]
    %v1382 = vld [vmem:[#allocation7 + $0x4f8] sm:$0xff]
    %v1383 = vld [vmem:[#allocation7 + $0x500] sm:$0xff]
    %v1384 = vld [vmem:[#allocation7 + $0x508] sm:$0xff]
    %v1385 = vld [vmem:[#allocation7 + $0x510] sm:$0xff]
    %v1386 = vld [vmem:[#allocation7 + $0x518] sm:$0xff]
    %v1387 = vld [vmem:[#allocation7 + $0x520] sm:$0xff]
    %v1388 = vld [vmem:[#allocation7 + $0x528] sm:$0xff]
    %v1389 = vld [vmem:[#allocation7 + $0x530] sm:$0xff]
    %v1390 = vld [vmem:[#allocation7 + $0x538] sm:$0xff]
    %v1391 = vld [vmem:[#allocation7 + $0x540] sm:$0xff]
    %v1392 = vld [vmem:[#allocation7 + $0x548] sm:$0xff]
    %v1393 = vld [vmem:[#allocation7 + $0x550] sm:$0xff]
    %v1394 = vld [vmem:[#allocation7 + $0x558] sm:$0xff]
    %v1395 = vld [vmem:[#allocation7 + $0x560] sm:$0xff]
    %v1396 = vld [vmem:[#allocation7 + $0x568] sm:$0xff]
    %v1397 = vld [vmem:[#allocation7 + $0x570] sm:$0xff]
    %v1398 = vld [vmem:[#allocation7 + $0x578] sm:$0xff]
    %v1399 = vld [vmem:[#allocation7 + $0x580] sm:$0xff]
    %v1400 = vld [vmem:[#allocation7 + $0x588] sm:$0xff]
    %v1401 = vld [vmem:[#allocation7 + $0x590] sm:$0xff]
    %v1402 = vld [vmem:[#allocation7 + $0x598] sm:$0xff]
    %v1403 = vld [vmem:[#allocation7 + $0x5a0] sm:$0xff]
    %v1404 = vld [vmem:[#allocation7 + $0x5a8] sm:$0xff]
    %v1405 = vld [vmem:[#allocation7 + $0x5b0] sm:$0xff]
    %v1406 = vld [vmem:[#allocation7 + $0x5b8] sm:$0xff]
    %v1407 = vld [vmem:[#allocation7 + $0x5c0] sm:$0xff]
    %v1408 = vld [vmem:[#allocation7 + $0x5c8] sm:$0xff]
    %v1409 = vld [vmem:[#allocation7 + $0x5d0] sm:$0xff]
    %v1410 = vld [vmem:[#allocation7 + $0x5d8] sm:$0xff]
    %v1411 = vld [vmem:[#allocation7 + $0x5e0] sm:$0xff]
    %v1412 = vld [vmem:[#allocation7 + $0x5e8] sm:$0xff]
    %v1413 = vld [vmem:[#allocation7 + $0x5f0] sm:$0xff]
    %v1414 = vld [vmem:[#allocation7 + $0x5f8] sm:$0xff]
    %v1415 = vld [vmem:[#allocation7 + $0x600] sm:$0xff]
    %v1416 = vld [vmem:[#allocation7 + $0x608] sm:$0xff]
    %v1417 = vld [vmem:[#allocation7 + $0x610] sm:$0xff]
    %v1418 = vld [vmem:[#allocation7 + $0x618] sm:$0xff]
    %v1419 = vld [vmem:[#allocation7 + $0x620] sm:$0xff]
    %v1420 = vld [vmem:[#allocation7 + $0x628] sm:$0xff]
    %v1421 = vld [vmem:[#allocation7 + $0x630] sm:$0xff]
    %v1422 = vld [vmem:[#allocation7 + $0x638] sm:$0xff]
    %v1423 = vld [vmem:[#allocation7 + $0x640] sm:$0xff]
    %v1424 = vld [vmem:[#allocation7 + $0x648] sm:$0xff]
    %v1425 = vld [vmem:[#allocation7 + $0x650] sm:$0xff]
    %v1426 = vld [vmem:[#allocation7 + $0x658] sm:$0xff]
    %v1427 = vld [vmem:[#allocation7 + $0x660] sm:$0xff]
    %v1428 = vld [vmem:[#allocation7 + $0x668] sm:$0xff]
    %v1429 = vld [vmem:[#allocation7 + $0x670] sm:$0xff]
    %v1430 = vld [vmem:[#allocation7 + $0x678] sm:$0xff]
    %v1431 = vld [vmem:[#allocation7 + $0x680] sm:$0xff]
    %v1432 = vld [vmem:[#allocation7 + $0x688] sm:$0xff]
    %v1433 = vld [vmem:[#allocation7 + $0x690] sm:$0xff]
    %v1434 = vld [vmem:[#allocation7 + $0x698] sm:$0xff]
    %v1435 = vld [vmem:[#allocation7 + $0x6a0] sm:$0xff]
    %v1436 = vld [vmem:[#allocation7 + $0x6a8] sm:$0xff]
    %v1437 = vld [vmem:[#allocation7 + $0x6b0] sm:$0xff]
    %v1438 = vld [vmem:[#allocation7 + $0x6b8] sm:$0xff]
    %v1439 = vld [vmem:[#allocation7 + $0x6c0] sm:$0xff]
    %v1440 = vld [vmem:[#allocation7 + $0x6c8] sm:$0xff]
    %v1441 = vld [vmem:[#allocation7 + $0x6d0] sm:$0xff]
    %v1442 = vld [vmem:[#allocation7 + $0x6d8] sm:$0xff]
    %v1443 = vld [vmem:[#allocation7 + $0x6e0] sm:$0xff]
    %v1444 = vld [vmem:[#allocation7 + $0x6e8] sm:$0xff]
    %v1445 = vld [vmem:[#allocation7 + $0x6f0] sm:$0xff]
    %v1446 = vld [vmem:[#allocation7 + $0x6f8] sm:$0xff]
    %v1447 = vld [vmem:[#allocation7 + $0x700] sm:$0xff]
    %v1448 = vld [vmem:[#allocation7 + $0x708] sm:$0xff]
    %v1449 = vld [vmem:[#allocation7 + $0x710] sm:$0xff]
    %v1450 = vld [vmem:[#allocation7 + $0x718] sm:$0xff]
    %v1451 = vld [vmem:[#allocation7 + $0x720] sm:$0xff]
    %v1452 = vld [vmem:[#allocation7 + $0x728] sm:$0xff]
    %v1453 = vld [vmem:[#allocation7 + $0x730] sm:$0xff]
    %v1454 = vld [vmem:[#allocation7 + $0x738] sm:$0xff]
    %v1455 = vld [vmem:[#allocation7 + $0x740] sm:$0xff]
    %v1456 = vld [vmem:[#allocation7 + $0x748] sm:$0xff]
    %v1457 = vld [vmem:[#allocation7 + $0x750] sm:$0xff]
    %v1458 = vld [vmem:[#allocation7 + $0x758] sm:$0xff]
    %v1459 = vld [vmem:[#allocation7 + $0x760] sm:$0xff]
    %v1460 = vld [vmem:[#allocation7 + $0x768] sm:$0xff]
    %v1461 = vld [vmem:[#allocation7 + $0x770] sm:$0xff]
    %v1462 = vld [vmem:[#allocation7 + $0x778] sm:$0xff]
    %v1463 = vld [vmem:[#allocation7 + $0x780] sm:$0xff]
    %v1464 = vld [vmem:[#allocation7 + $0x788] sm:$0xff]
    %v1465 = vld [vmem:[#allocation7 + $0x790] sm:$0xff]
    %v1466 = vld [vmem:[#allocation7 + $0x798] sm:$0xff]
    %v1467 = vld [vmem:[#allocation7 + $0x7a0] sm:$0xff]
    %v1468 = vld [vmem:[#allocation7 + $0x7a8] sm:$0xff]
    %v1469 = vld [vmem:[#allocation7 + $0x7b0] sm:$0xff]
    %v1470 = vld [vmem:[#allocation7 + $0x7b8] sm:$0xff]
    %v1471 = vld [vmem:[#allocation7 + $0x7c0] sm:$0xff]
    %v1472 = vld [vmem:[#allocation7 + $0x7c8] sm:$0xff]
    %v1473 = vld [vmem:[#allocation7 + $0x7d0] sm:$0xff]
    %v1474 = vld [vmem:[#allocation7 + $0x7d8] sm:$0xff]
    %v1475 = vld [vmem:[#allocation7 + $0x7e0] sm:$0xff]
    %v1476 = vld [vmem:[#allocation7 + $0x7e8] sm:$0xff]
    %v1477 = vld [vmem:[#allocation7 + $0x7f0] sm:$0xff]
    %v1478 = vld [vmem:[#allocation7 + $0x7f8] sm:$0xff]
    %v1479 = vld [vmem:[#allocation7 + $0x800] sm:$0xff]
    %v1480 = vld [vmem:[#allocation7 + $0x808] sm:$0xff]
    %v1481 = vld [vmem:[#allocation7 + $0x810] sm:$0xff]
    %v1482 = vld [vmem:[#allocation7 + $0x818] sm:$0xff]
    %v1483 = vld [vmem:[#allocation7 + $0x820] sm:$0xff]
    %v1484 = vld [vmem:[#allocation7 + $0x828] sm:$0xff]
    %v1485 = vld [vmem:[#allocation7 + $0x830] sm:$0xff]
    %v1486 = vld [vmem:[#allocation7 + $0x838] sm:$0xff]
    %v1487 = vld [vmem:[#allocation7 + $0x840] sm:$0xff]
    %v1488 = vld [vmem:[#allocation7 + $0x848] sm:$0xff]
    %v1489 = vld [vmem:[#allocation7 + $0x850] sm:$0xff]
    %v1490 = vld [vmem:[#allocation7 + $0x858] sm:$0xff]
    %v1491 = vld [vmem:[#allocation7 + $0x860] sm:$0xff]
    %v1492 = vld [vmem:[#allocation7 + $0x868] sm:$0xff]
    %v1493 = vld [vmem:[#allocation7 + $0x870] sm:$0xff]
    %v1494 = vld [vmem:[#allocation7 + $0x878] sm:$0xff]
    %v1495 = vld [vmem:[#allocation7 + $0x880] sm:$0xff]
    %v1496 = vld [vmem:[#allocation7 + $0x888] sm:$0xff]
    %v1497 = vld [vmem:[#allocation7 + $0x890] sm:$0xff]
    %v1498 = vld [vmem:[#allocation7 + $0x898] sm:$0xff]
    %v1499 = vld [vmem:[#allocation7 + $0x8a0] sm:$0xff]
    %v1500 = vld [vmem:[#allocation7 + $0x8a8] sm:$0xff]
    %v1501 = vld [vmem:[#allocation7 + $0x8b0] sm:$0xff]
    %v1502 = vld [vmem:[#allocation7 + $0x8b8] sm:$0xff]
    %v1503 = vld [vmem:[#allocation7 + $0x8c0] sm:$0xff]
    %v1504 = vld [vmem:[#allocation7 + $0x8c8] sm:$0xff]
    %v1505 = vld [vmem:[#allocation7 + $0x8d0] sm:$0xff]
    %v1506 = vld [vmem:[#allocation7 + $0x8d8] sm:$0xff]
    %v1507 = vld [vmem:[#allocation7 + $0x8e0] sm:$0xff]
    %v1508 = vld [vmem:[#allocation7 + $0x8e8] sm:$0xff]
    %v1509 = vld [vmem:[#allocation7 + $0x8f0] sm:$0xff]
    %v1510 = vld [vmem:[#allocation7 + $0x8f8] sm:$0xff]
    %v1511 = vld [vmem:[#allocation7 + $0x900] sm:$0xff]
    %v1512 = vld [vmem:[#allocation7 + $0x908] sm:$0xff]
    %v1513 = vld [vmem:[#allocation7 + $0x910] sm:$0xff]
    %v1514 = vld [vmem:[#allocation7 + $0x918] sm:$0xff]
    %v1515 = vld [vmem:[#allocation7 + $0x920] sm:$0xff]
    %v1516 = vld [vmem:[#allocation7 + $0x928] sm:$0xff]
    %v1517 = vld [vmem:[#allocation7 + $0x930] sm:$0xff]
    %v1518 = vld [vmem:[#allocation7 + $0x938] sm:$0xff]
    %v1519 = vld [vmem:[#allocation7 + $0x940] sm:$0xff]
    %v1520 = vld [vmem:[#allocation7 + $0x948] sm:$0xff]
    %v1521 = vld [vmem:[#allocation7 + $0x950] sm:$0xff]
    %v1522 = vld [vmem:[#allocation7 + $0x958] sm:$0xff]
    %v1523 = vld [vmem:[#allocation7 + $0x960] sm:$0xff]
    %v1524 = vld [vmem:[#allocation7 + $0x968] sm:$0xff]
    %v1525 = vld [vmem:[#allocation7 + $0x970] sm:$0xff]
    %v1526 = vld [vmem:[#allocation7 + $0x978] sm:$0xff]
    %v1527 = vld [vmem:[#allocation7 + $0x980] sm:$0xff]
    %v1528 = vld [vmem:[#allocation7 + $0x988] sm:$0xff]
    %v1529 = vld [vmem:[#allocation7 + $0x990] sm:$0xff]
    %v1530 = vld [vmem:[#allocation7 + $0x998] sm:$0xff]
    %v1531 = vld [vmem:[#allocation7 + $0x9a0] sm:$0xff]
    %v1532 = vld [vmem:[#allocation7 + $0x9a8] sm:$0xff]
    %v1533 = vld [vmem:[#allocation7 + $0x9b0] sm:$0xff]
    %v1534 = vld [vmem:[#allocation7 + $0x9b8] sm:$0xff]
    %v1535 = vld [vmem:[#allocation7 + $0x9c0] sm:$0xff]
    %v1536 = vld [vmem:[#allocation7 + $0x9c8] sm:$0xff]
    %v1537 = vld [vmem:[#allocation7 + $0x9d0] sm:$0xff]
    %v1538 = vld [vmem:[#allocation7 + $0x9d8] sm:$0xff]
    %v1539 = vld [vmem:[#allocation7 + $0x9e0] sm:$0xff]
    %v1540 = vld [vmem:[#allocation7 + $0x9e8] sm:$0xff]
    %v1541 = vld [vmem:[#allocation7 + $0x9f0] sm:$0xff]
    %v1542 = vld [vmem:[#allocation7 + $0x9f8] sm:$0xff]
    %v1863 = vunpack.c.l.b16 %v1223
    %v1864 = vunpack.c.h.b16 %v1223
    %v1865 = vunpack.c.l.b16 %v1224
    %v1866 = vunpack.c.h.b16 %v1224
    %v1867 = vunpack.c.l.b16 %v1225
    %v1868 = vunpack.c.h.b16 %v1225
    %v1869 = vunpack.c.l.b16 %v1226
    %v1870 = vunpack.c.h.b16 %v1226
    %v1871 = vunpack.c.l.b16 %v1227
    %v1872 = vunpack.c.h.b16 %v1227
    %v1873 = vunpack.c.l.b16 %v1228
    %v1874 = vunpack.c.h.b16 %v1228
    %v1875 = vunpack.c.l.b16 %v1229
    %v1876 = vunpack.c.h.b16 %v1229
    %v1877 = vunpack.c.l.b16 %v1230
    %v1878 = vunpack.c.h.b16 %v1230
    %v1879 = vunpack.c.l.b16 %v1231
    %v1880 = vunpack.c.h.b16 %v1231
    %v1881 = vunpack.c.l.b16 %v1232
    %v1882 = vunpack.c.h.b16 %v1232
    %v1883 = vunpack.c.l.b16 %v1233
    %v1884 = vunpack.c.h.b16 %v1233
    %v1885 = vunpack.c.l.b16 %v1234
    %v1886 = vunpack.c.h.b16 %v1234
    %v1887 = vunpack.c.l.b16 %v1235
    %v1888 = vunpack.c.h.b16 %v1235
    %v1889 = vunpack.c.l.b16 %v1236
    %v1890 = vunpack.c.h.b16 %v1236
    %v1891 = vunpack.c.l.b16 %v1237
    %v1892 = vunpack.c.h.b16 %v1237
    %v1893 = vunpack.c.l.b16 %v1238
    %v1894 = vunpack.c.h.b16 %v1238
    %v1895 = vunpack.c.l.b16 %v1239
    %v1896 = vunpack.c.h.b16 %v1239
    %v1897 = vunpack.c.l.b16 %v1240
    %v1898 = vunpack.c.h.b16 %v1240
    %v1899 = vunpack.c.l.b16 %v1241
    %v1900 = vunpack.c.h.b16 %v1241
    %v1901 = vunpack.c.l.b16 %v1242
    %v1902 = vunpack.c.h.b16 %v1242
    %v1903 = vunpack.c.l.b16 %v1243
    %v1904 = vunpack.c.h.b16 %v1243
    %v1905 = vunpack.c.l.b16 %v1244
    %v1906 = vunpack.c.h.b16 %v1244
    %v1907 = vunpack.c.l.b16 %v1245
    %v1908 = vunpack.c.h.b16 %v1245
    %v1909 = vunpack.c.l.b16 %v1246
    %v1910 = vunpack.c.h.b16 %v1246
    %v1911 = vunpack.c.l.b16 %v1247
    %v1912 = vunpack.c.h.b16 %v1247
    %v1913 = vunpack.c.l.b16 %v1248
    %v1914 = vunpack.c.h.b16 %v1248
    %v1915 = vunpack.c.l.b16 %v1249
    %v1916 = vunpack.c.h.b16 %v1249
    %v1917 = vunpack.c.l.b16 %v1250
    %v1918 = vunpack.c.h.b16 %v1250
    %v1919 = vunpack.c.l.b16 %v1251
    %v1920 = vunpack.c.h.b16 %v1251
    %v1921 = vunpack.c.l.b16 %v1252
    %v1922 = vunpack.c.h.b16 %v1252
    %v1923 = vunpack.c.l.b16 %v1253
    %v1924 = vunpack.c.h.b16 %v1253
    %v1925 = vunpack.c.l.b16 %v1254
    %v1926 = vunpack.c.h.b16 %v1254
    %v1927 = vunpack.c.l.b16 %v1255
    %v1928 = vunpack.c.h.b16 %v1255
    %v1929 = vunpack.c.l.b16 %v1256
    %v1930 = vunpack.c.h.b16 %v1256
    %v1931 = vunpack.c.l.b16 %v1257
    %v1932 = vunpack.c.h.b16 %v1257
    %v1933 = vunpack.c.l.b16 %v1258
    %v1934 = vunpack.c.h.b16 %v1258
    %v1935 = vunpack.c.l.b16 %v1259
    %v1936 = vunpack.c.h.b16 %v1259
    %v1937 = vunpack.c.l.b16 %v1260
    %v1938 = vunpack.c.h.b16 %v1260
    %v1939 = vunpack.c.l.b16 %v1261
    %v1940 = vunpack.c.h.b16 %v1261
    %v1941 = vunpack.c.l.b16 %v1262
    %v1942 = vunpack.c.h.b16 %v1262
    %v1943 = vunpack.c.l.b16 %v1263
    %v1944 = vunpack.c.h.b16 %v1263
    %v1945 = vunpack.c.l.b16 %v1264
    %v1946 = vunpack.c.h.b16 %v1264
    %v1947 = vunpack.c.l.b16 %v1265
    %v1948 = vunpack.c.h.b16 %v1265
    %v1949 = vunpack.c.l.b16 %v1266
    %v1950 = vunpack.c.h.b16 %v1266
    %v1951 = vunpack.c.l.b16 %v1267
    %v1952 = vunpack.c.h.b16 %v1267
    %v1953 = vunpack.c.l.b16 %v1268
    %v1954 = vunpack.c.h.b16 %v1268
    %v1955 = vunpack.c.l.b16 %v1269
    %v1956 = vunpack.c.h.b16 %v1269
    %v1957 = vunpack.c.l.b16 %v1270
    %v1958 = vunpack.c.h.b16 %v1270
    %v1959 = vunpack.c.l.b16 %v1271
    %v1960 = vunpack.c.h.b16 %v1271
    %v1961 = vunpack.c.l.b16 %v1272
    %v1962 = vunpack.c.h.b16 %v1272
    %v1963 = vunpack.c.l.b16 %v1273
    %v1964 = vunpack.c.h.b16 %v1273
    %v1965 = vunpack.c.l.b16 %v1274
    %v1966 = vunpack.c.h.b16 %v1274
    %v1967 = vunpack.c.l.b16 %v1275
    %v1968 = vunpack.c.h.b16 %v1275
    %v1969 = vunpack.c.l.b16 %v1276
    %v1970 = vunpack.c.h.b16 %v1276
    %v1971 = vunpack.c.l.b16 %v1277
    %v1972 = vunpack.c.h.b16 %v1277
    %v1973 = vunpack.c.l.b16 %v1278
    %v1974 = vunpack.c.h.b16 %v1278
    %v1975 = vunpack.c.l.b16 %v1279
    %v1976 = vunpack.c.h.b16 %v1279
    %v1977 = vunpack.c.l.b16 %v1280
    %v1978 = vunpack.c.h.b16 %v1280
    %v1979 = vunpack.c.l.b16 %v1281
    %v1980 = vunpack.c.h.b16 %v1281
    %v1981 = vunpack.c.l.b16 %v1282
    %v1982 = vunpack.c.h.b16 %v1282
    %v1983 = vunpack.c.l.b16 %v1283
    %v1984 = vunpack.c.h.b16 %v1283
    %v1985 = vunpack.c.l.b16 %v1284
    %v1986 = vunpack.c.h.b16 %v1284
    %v1987 = vunpack.c.l.b16 %v1285
    %v1988 = vunpack.c.h.b16 %v1285
    %v1989 = vunpack.c.l.b16 %v1286
    %v1990 = vunpack.c.h.b16 %v1286
    %v1991 = vunpack.c.l.b16 %v1287
    %v1992 = vunpack.c.h.b16 %v1287
    %v1993 = vunpack.c.l.b16 %v1288
    %v1994 = vunpack.c.h.b16 %v1288
    %v1995 = vunpack.c.l.b16 %v1289
    %v1996 = vunpack.c.h.b16 %v1289
    %v1997 = vunpack.c.l.b16 %v1290
    %v1998 = vunpack.c.h.b16 %v1290
    %v1999 = vunpack.c.l.b16 %v1291
    %v2000 = vunpack.c.h.b16 %v1291
    %v2001 = vunpack.c.l.b16 %v1292
    %v2002 = vunpack.c.h.b16 %v1292
    %v2003 = vunpack.c.l.b16 %v1293
    %v2004 = vunpack.c.h.b16 %v1293
    %v2005 = vunpack.c.l.b16 %v1294
    %v2006 = vunpack.c.h.b16 %v1294
    %v2007 = vunpack.c.l.b16 %v1295
    %v2008 = vunpack.c.h.b16 %v1295
    %v2009 = vunpack.c.l.b16 %v1296
    %v2010 = vunpack.c.h.b16 %v1296
    %v2011 = vunpack.c.l.b16 %v1297
    %v2012 = vunpack.c.h.b16 %v1297
    %v2013 = vunpack.c.l.b16 %v1298
    %v2014 = vunpack.c.h.b16 %v1298
    %v2015 = vunpack.c.l.b16 %v1299
    %v2016 = vunpack.c.h.b16 %v1299
    %v2017 = vunpack.c.l.b16 %v1300
    %v2018 = vunpack.c.h.b16 %v1300
    %v2019 = vunpack.c.l.b16 %v1301
    %v2020 = vunpack.c.h.b16 %v1301
    %v2021 = vunpack.c.l.b16 %v1302
    %v2022 = vunpack.c.h.b16 %v1302
    %v2023 = vunpack.c.l.b16 %v1303
    %v2024 = vunpack.c.h.b16 %v1303
    %v2025 = vunpack.c.l.b16 %v1304
    %v2026 = vunpack.c.h.b16 %v1304
    %v2027 = vunpack.c.l.b16 %v1305
    %v2028 = vunpack.c.h.b16 %v1305
    %v2029 = vunpack.c.l.b16 %v1306
    %v2030 = vunpack.c.h.b16 %v1306
    %v2031 = vunpack.c.l.b16 %v1307
    %v2032 = vunpack.c.h.b16 %v1307
    %v2033 = vunpack.c.l.b16 %v1308
    %v2034 = vunpack.c.h.b16 %v1308
    %v2035 = vunpack.c.l.b16 %v1309
    %v2036 = vunpack.c.h.b16 %v1309
    %v2037 = vunpack.c.l.b16 %v1310
    %v2038 = vunpack.c.h.b16 %v1310
    %v2039 = vunpack.c.l.b16 %v1311
    %v2040 = vunpack.c.h.b16 %v1311
    %v2041 = vunpack.c.l.b16 %v1312
    %v2042 = vunpack.c.h.b16 %v1312
    %v2043 = vunpack.c.l.b16 %v1313
    %v2044 = vunpack.c.h.b16 %v1313
    %v2045 = vunpack.c.l.b16 %v1314
    %v2046 = vunpack.c.h.b16 %v1314
    %v2047 = vunpack.c.l.b16 %v1315
    %v2048 = vunpack.c.h.b16 %v1315
    %v2049 = vunpack.c.l.b16 %v1316
    %v2050 = vunpack.c.h.b16 %v1316
    %v2051 = vunpack.c.l.b16 %v1317
    %v2052 = vunpack.c.h.b16 %v1317
    %v2053 = vunpack.c.l.b16 %v1318
    %v2054 = vunpack.c.h.b16 %v1318
    %v2055 = vunpack.c.l.b16 %v1319
    %v2056 = vunpack.c.h.b16 %v1319
    %v2057 = vunpack.c.l.b16 %v1320
    %v2058 = vunpack.c.h.b16 %v1320
    %v2059 = vunpack.c.l.b16 %v1321
    %v2060 = vunpack.c.h.b16 %v1321
    %v2061 = vunpack.c.l.b16 %v1322
    %v2062 = vunpack.c.h.b16 %v1322
    %v2063 = vunpack.c.l.b16 %v1323
    %v2064 = vunpack.c.h.b16 %v1323
    %v2065 = vunpack.c.l.b16 %v1324
    %v2066 = vunpack.c.h.b16 %v1324
    %v2067 = vunpack.c.l.b16 %v1325
    %v2068 = vunpack.c.h.b16 %v1325
    %v2069 = vunpack.c.l.b16 %v1326
    %v2070 = vunpack.c.h.b16 %v1326
    %v2071 = vunpack.c.l.b16 %v1327
    %v2072 = vunpack.c.h.b16 %v1327
    %v2073 = vunpack.c.l.b16 %v1328
    %v2074 = vunpack.c.h.b16 %v1328
    %v2075 = vunpack.c.l.b16 %v1329
    %v2076 = vunpack.c.h.b16 %v1329
    %v2077 = vunpack.c.l.b16 %v1330
    %v2078 = vunpack.c.h.b16 %v1330
    %v2079 = vunpack.c.l.b16 %v1331
    %v2080 = vunpack.c.h.b16 %v1331
    %v2081 = vunpack.c.l.b16 %v1332
    %v2082 = vunpack.c.h.b16 %v1332
    %v2083 = vunpack.c.l.b16 %v1333
    %v2084 = vunpack.c.h.b16 %v1333
    %v2085 = vunpack.c.l.b16 %v1334
    %v2086 = vunpack.c.h.b16 %v1334
    %v2087 = vunpack.c.l.b16 %v1335
    %v2088 = vunpack.c.h.b16 %v1335
    %v2089 = vunpack.c.l.b16 %v1336
    %v2090 = vunpack.c.h.b16 %v1336
    %v2091 = vunpack.c.l.b16 %v1337
    %v2092 = vunpack.c.h.b16 %v1337
    %v2093 = vunpack.c.l.b16 %v1338
    %v2094 = vunpack.c.h.b16 %v1338
    %v2095 = vunpack.c.l.b16 %v1339
    %v2096 = vunpack.c.h.b16 %v1339
    %v2097 = vunpack.c.l.b16 %v1340
    %v2098 = vunpack.c.h.b16 %v1340
    %v2099 = vunpack.c.l.b16 %v1341
    %v2100 = vunpack.c.h.b16 %v1341
    %v2101 = vunpack.c.l.b16 %v1342
    %v2102 = vunpack.c.h.b16 %v1342
    %v2103 = vunpack.c.l.b16 %v1343
    %v2104 = vunpack.c.h.b16 %v1343
    %v2105 = vunpack.c.l.b16 %v1344
    %v2106 = vunpack.c.h.b16 %v1344
    %v2107 = vunpack.c.l.b16 %v1345
    %v2108 = vunpack.c.h.b16 %v1345
    %v2109 = vunpack.c.l.b16 %v1346
    %v2110 = vunpack.c.h.b16 %v1346
    %v2111 = vunpack.c.l.b16 %v1347
    %v2112 = vunpack.c.h.b16 %v1347
    %v2113 = vunpack.c.l.b16 %v1348
    %v2114 = vunpack.c.h.b16 %v1348
    %v2115 = vunpack.c.l.b16 %v1349
    %v2116 = vunpack.c.h.b16 %v1349
    %v2117 = vunpack.c.l.b16 %v1350
    %v2118 = vunpack.c.h.b16 %v1350
    %v2119 = vunpack.c.l.b16 %v1351
    %v2120 = vunpack.c.h.b16 %v1351
    %v2121 = vunpack.c.l.b16 %v1352
    %v2122 = vunpack.c.h.b16 %v1352
    %v2123 = vunpack.c.l.b16 %v1353
    %v2124 = vunpack.c.h.b16 %v1353
    %v2125 = vunpack.c.l.b16 %v1354
    %v2126 = vunpack.c.h.b16 %v1354
    %v2127 = vunpack.c.l.b16 %v1355
    %v2128 = vunpack.c.h.b16 %v1355
    %v2129 = vunpack.c.l.b16 %v1356
    %v2130 = vunpack.c.h.b16 %v1356
    %v2131 = vunpack.c.l.b16 %v1357
    %v2132 = vunpack.c.h.b16 %v1357
    %v2133 = vunpack.c.l.b16 %v1358
    %v2134 = vunpack.c.h.b16 %v1358
    %v2135 = vunpack.c.l.b16 %v1359
    %v2136 = vunpack.c.h.b16 %v1359
    %v2137 = vunpack.c.l.b16 %v1360
    %v2138 = vunpack.c.h.b16 %v1360
    %v2139 = vunpack.c.l.b16 %v1361
    %v2140 = vunpack.c.h.b16 %v1361
    %v2141 = vunpack.c.l.b16 %v1362
    %v2142 = vunpack.c.h.b16 %v1362
    %v2143 = vunpack.c.l.b16 %v1363
    %v2144 = vunpack.c.h.b16 %v1363
    %v2145 = vunpack.c.l.b16 %v1364
    %v2146 = vunpack.c.h.b16 %v1364
    %v2147 = vunpack.c.l.b16 %v1365
    %v2148 = vunpack.c.h.b16 %v1365
    %v2149 = vunpack.c.l.b16 %v1366
    %v2150 = vunpack.c.h.b16 %v1366
    %v2151 = vunpack.c.l.b16 %v1367
    %v2152 = vunpack.c.h.b16 %v1367
    %v2153 = vunpack.c.l.b16 %v1368
    %v2154 = vunpack.c.h.b16 %v1368
    %v2155 = vunpack.c.l.b16 %v1369
    %v2156 = vunpack.c.h.b16 %v1369
    %v2157 = vunpack.c.l.b16 %v1370
    %v2158 = vunpack.c.h.b16 %v1370
    %v2159 = vunpack.c.l.b16 %v1371
    %v2160 = vunpack.c.h.b16 %v1371
    %v2161 = vunpack.c.l.b16 %v1372
    %v2162 = vunpack.c.h.b16 %v1372
    %v2163 = vunpack.c.l.b16 %v1373
    %v2164 = vunpack.c.h.b16 %v1373
    %v2165 = vunpack.c.l.b16 %v1374
    %v2166 = vunpack.c.h.b16 %v1374
    %v2167 = vunpack.c.l.b16 %v1375
    %v2168 = vunpack.c.h.b16 %v1375
    %v2169 = vunpack.c.l.b16 %v1376
    %v2170 = vunpack.c.h.b16 %v1376
    %v2171 = vunpack.c.l.b16 %v1377
    %v2172 = vunpack.c.h.b16 %v1377
    %v2173 = vunpack.c.l.b16 %v1378
    %v2174 = vunpack.c.h.b16 %v1378
    %v2175 = vunpack.c.l.b16 %v1379
    %v2176 = vunpack.c.h.b16 %v1379
    %v2177 = vunpack.c.l.b16 %v1380
    %v2178 = vunpack.c.h.b16 %v1380
    %v2179 = vunpack.c.l.b16 %v1381
    %v2180 = vunpack.c.h.b16 %v1381
    %v2181 = vunpack.c.l.b16 %v1382
    %v2182 = vunpack.c.h.b16 %v1382
    %v2183 = vunpack.c.l.b16 %v1383
    %v2184 = vunpack.c.h.b16 %v1383
    %v2185 = vunpack.c.l.b16 %v1384
    %v2186 = vunpack.c.h.b16 %v1384
    %v2187 = vunpack.c.l.b16 %v1385
    %v2188 = vunpack.c.h.b16 %v1385
    %v2189 = vunpack.c.l.b16 %v1386
    %v2190 = vunpack.c.h.b16 %v1386
    %v2191 = vunpack.c.l.b16 %v1387
    %v2192 = vunpack.c.h.b16 %v1387
    %v2193 = vunpack.c.l.b16 %v1388
    %v2194 = vunpack.c.h.b16 %v1388
    %v2195 = vunpack.c.l.b16 %v1389
    %v2196 = vunpack.c.h.b16 %v1389
    %v2197 = vunpack.c.l.b16 %v1390
    %v2198 = vunpack.c.h.b16 %v1390
    %v2199 = vunpack.c.l.b16 %v1391
    %v2200 = vunpack.c.h.b16 %v1391
    %v2201 = vunpack.c.l.b16 %v1392
    %v2202 = vunpack.c.h.b16 %v1392
    %v2203 = vunpack.c.l.b16 %v1393
    %v2204 = vunpack.c.h.b16 %v1393
    %v2205 = vunpack.c.l.b16 %v1394
    %v2206 = vunpack.c.h.b16 %v1394
    %v2207 = vunpack.c.l.b16 %v1395
    %v2208 = vunpack.c.h.b16 %v1395
    %v2209 = vunpack.c.l.b16 %v1396
    %v2210 = vunpack.c.h.b16 %v1396
    %v2211 = vunpack.c.l.b16 %v1397
    %v2212 = vunpack.c.h.b16 %v1397
    %v2213 = vunpack.c.l.b16 %v1398
    %v2214 = vunpack.c.h.b16 %v1398
    %v2215 = vunpack.c.l.b16 %v1399
    %v2216 = vunpack.c.h.b16 %v1399
    %v2217 = vunpack.c.l.b16 %v1400
    %v2218 = vunpack.c.h.b16 %v1400
    %v2219 = vunpack.c.l.b16 %v1401
    %v2220 = vunpack.c.h.b16 %v1401
    %v2221 = vunpack.c.l.b16 %v1402
    %v2222 = vunpack.c.h.b16 %v1402
    %v2223 = vunpack.c.l.b16 %v1403
    %v2224 = vunpack.c.h.b16 %v1403
    %v2225 = vunpack.c.l.b16 %v1404
    %v2226 = vunpack.c.h.b16 %v1404
    %v2227 = vunpack.c.l.b16 %v1405
    %v2228 = vunpack.c.h.b16 %v1405
    %v2229 = vunpack.c.l.b16 %v1406
    %v2230 = vunpack.c.h.b16 %v1406
    %v2231 = vunpack.c.l.b16 %v1407
    %v2232 = vunpack.c.h.b16 %v1407
    %v2233 = vunpack.c.l.b16 %v1408
    %v2234 = vunpack.c.h.b16 %v1408
    %v2235 = vunpack.c.l.b16 %v1409
    %v2236 = vunpack.c.h.b16 %v1409
    %v2237 = vunpack.c.l.b16 %v1410
    %v2238 = vunpack.c.h.b16 %v1410
    %v2239 = vunpack.c.l.b16 %v1411
    %v2240 = vunpack.c.h.b16 %v1411
    %v2241 = vunpack.c.l.b16 %v1412
    %v2242 = vunpack.c.h.b16 %v1412
    %v2243 = vunpack.c.l.b16 %v1413
    %v2244 = vunpack.c.h.b16 %v1413
    %v2245 = vunpack.c.l.b16 %v1414
    %v2246 = vunpack.c.h.b16 %v1414
    %v2247 = vunpack.c.l.b16 %v1415
    %v2248 = vunpack.c.h.b16 %v1415
    %v2249 = vunpack.c.l.b16 %v1416
    %v2250 = vunpack.c.h.b16 %v1416
    %v2251 = vunpack.c.l.b16 %v1417
    %v2252 = vunpack.c.h.b16 %v1417
    %v2253 = vunpack.c.l.b16 %v1418
    %v2254 = vunpack.c.h.b16 %v1418
    %v2255 = vunpack.c.l.b16 %v1419
    %v2256 = vunpack.c.h.b16 %v1419
    %v2257 = vunpack.c.l.b16 %v1420
    %v2258 = vunpack.c.h.b16 %v1420
    %v2259 = vunpack.c.l.b16 %v1421
    %v2260 = vunpack.c.h.b16 %v1421
    %v2261 = vunpack.c.l.b16 %v1422
    %v2262 = vunpack.c.h.b16 %v1422
    %v2263 = vunpack.c.l.b16 %v1423
    %v2264 = vunpack.c.h.b16 %v1423
    %v2265 = vunpack.c.l.b16 %v1424
    %v2266 = vunpack.c.h.b16 %v1424
    %v2267 = vunpack.c.l.b16 %v1425
    %v2268 = vunpack.c.h.b16 %v1425
    %v2269 = vunpack.c.l.b16 %v1426
    %v2270 = vunpack.c.h.b16 %v1426
    %v2271 = vunpack.c.l.b16 %v1427
    %v2272 = vunpack.c.h.b16 %v1427
    %v2273 = vunpack.c.l.b16 %v1428
    %v2274 = vunpack.c.h.b16 %v1428
    %v2275 = vunpack.c.l.b16 %v1429
    %v2276 = vunpack.c.h.b16 %v1429
    %v2277 = vunpack.c.l.b16 %v1430
    %v2278 = vunpack.c.h.b16 %v1430
    %v2279 = vunpack.c.l.b16 %v1431
    %v2280 = vunpack.c.h.b16 %v1431
    %v2281 = vunpack.c.l.b16 %v1432
    %v2282 = vunpack.c.h.b16 %v1432
    %v2283 = vunpack.c.l.b16 %v1433
    %v2284 = vunpack.c.h.b16 %v1433
    %v2285 = vunpack.c.l.b16 %v1434
    %v2286 = vunpack.c.h.b16 %v1434
    %v2287 = vunpack.c.l.b16 %v1435
    %v2288 = vunpack.c.h.b16 %v1435
    %v2289 = vunpack.c.l.b16 %v1436
    %v2290 = vunpack.c.h.b16 %v1436
    %v2291 = vunpack.c.l.b16 %v1437
    %v2292 = vunpack.c.h.b16 %v1437
    %v2293 = vunpack.c.l.b16 %v1438
    %v2294 = vunpack.c.h.b16 %v1438
    %v2295 = vunpack.c.l.b16 %v1439
    %v2296 = vunpack.c.h.b16 %v1439
    %v2297 = vunpack.c.l.b16 %v1440
    %v2298 = vunpack.c.h.b16 %v1440
    %v2299 = vunpack.c.l.b16 %v1441
    %v2300 = vunpack.c.h.b16 %v1441
    %v2301 = vunpack.c.l.b16 %v1442
    %v2302 = vunpack.c.h.b16 %v1442
    %v2303 = vunpack.c.l.b16 %v1443
    %v2304 = vunpack.c.h.b16 %v1443
    %v2305 = vunpack.c.l.b16 %v1444
    %v2306 = vunpack.c.h.b16 %v1444
    %v2307 = vunpack.c.l.b16 %v1445
    %v2308 = vunpack.c.h.b16 %v1445
    %v2309 = vunpack.c.l.b16 %v1446
    %v2310 = vunpack.c.h.b16 %v1446
    %v2311 = vunpack.c.l.b16 %v1447
    %v2312 = vunpack.c.h.b16 %v1447
    %v2313 = vunpack.c.l.b16 %v1448
    %v2314 = vunpack.c.h.b16 %v1448
    %v2315 = vunpack.c.l.b16 %v1449
    %v2316 = vunpack.c.h.b16 %v1449
    %v2317 = vunpack.c.l.b16 %v1450
    %v2318 = vunpack.c.h.b16 %v1450
    %v2319 = vunpack.c.l.b16 %v1451
    %v2320 = vunpack.c.h.b16 %v1451
    %v2321 = vunpack.c.l.b16 %v1452
    %v2322 = vunpack.c.h.b16 %v1452
    %v2323 = vunpack.c.l.b16 %v1453
    %v2324 = vunpack.c.h.b16 %v1453
    %v2325 = vunpack.c.l.b16 %v1454
    %v2326 = vunpack.c.h.b16 %v1454
    %v2327 = vunpack.c.l.b16 %v1455
    %v2328 = vunpack.c.h.b16 %v1455
    %v2329 = vunpack.c.l.b16 %v1456
    %v2330 = vunpack.c.h.b16 %v1456
    %v2331 = vunpack.c.l.b16 %v1457
    %v2332 = vunpack.c.h.b16 %v1457
    %v2333 = vunpack.c.l.b16 %v1458
    %v2334 = vunpack.c.h.b16 %v1458
    %v2335 = vunpack.c.l.b16 %v1459
    %v2336 = vunpack.c.h.b16 %v1459
    %v2337 = vunpack.c.l.b16 %v1460
    %v2338 = vunpack.c.h.b16 %v1460
    %v2339 = vunpack.c.l.b16 %v1461
    %v2340 = vunpack.c.h.b16 %v1461
    %v2341 = vunpack.c.l.b16 %v1462
    %v2342 = vunpack.c.h.b16 %v1462
    %v2343 = vunpack.c.l.b16 %v1463
    %v2344 = vunpack.c.h.b16 %v1463
    %v2345 = vunpack.c.l.b16 %v1464
    %v2346 = vunpack.c.h.b16 %v1464
    %v2347 = vunpack.c.l.b16 %v1465
    %v2348 = vunpack.c.h.b16 %v1465
    %v2349 = vunpack.c.l.b16 %v1466
    %v2350 = vunpack.c.h.b16 %v1466
    %v2351 = vunpack.c.l.b16 %v1467
    %v2352 = vunpack.c.h.b16 %v1467
    %v2353 = vunpack.c.l.b16 %v1468
    %v2354 = vunpack.c.h.b16 %v1468
    %v2355 = vunpack.c.l.b16 %v1469
    %v2356 = vunpack.c.h.b16 %v1469
    %v2357 = vunpack.c.l.b16 %v1470
    %v2358 = vunpack.c.h.b16 %v1470
    %v2359 = vunpack.c.l.b16 %v1471
    %v2360 = vunpack.c.h.b16 %v1471
    %v2361 = vunpack.c.l.b16 %v1472
    %v2362 = vunpack.c.h.b16 %v1472
    %v2363 = vunpack.c.l.b16 %v1473
    %v2364 = vunpack.c.h.b16 %v1473
    %v2365 = vunpack.c.l.b16 %v1474
    %v2366 = vunpack.c.h.b16 %v1474
    %v2367 = vunpack.c.l.b16 %v1475
    %v2368 = vunpack.c.h.b16 %v1475
    %v2369 = vunpack.c.l.b16 %v1476
    %v2370 = vunpack.c.h.b16 %v1476
    %v2371 = vunpack.c.l.b16 %v1477
    %v2372 = vunpack.c.h.b16 %v1477
    %v2373 = vunpack.c.l.b16 %v1478
    %v2374 = vunpack.c.h.b16 %v1478
    %v2375 = vunpack.c.l.b16 %v1479
    %v2376 = vunpack.c.h.b16 %v1479
    %v2377 = vunpack.c.l.b16 %v1480
    %v2378 = vunpack.c.h.b16 %v1480
    %v2379 = vunpack.c.l.b16 %v1481
    %v2380 = vunpack.c.h.b16 %v1481
    %v2381 = vunpack.c.l.b16 %v1482
    %v2382 = vunpack.c.h.b16 %v1482
    %v2383 = vunpack.c.l.b16 %v1483
    %v2384 = vunpack.c.h.b16 %v1483
    %v2385 = vunpack.c.l.b16 %v1484
    %v2386 = vunpack.c.h.b16 %v1484
    %v2387 = vunpack.c.l.b16 %v1485
    %v2388 = vunpack.c.h.b16 %v1485
    %v2389 = vunpack.c.l.b16 %v1486
    %v2390 = vunpack.c.h.b16 %v1486
    %v2391 = vunpack.c.l.b16 %v1487
    %v2392 = vunpack.c.h.b16 %v1487
    %v2393 = vunpack.c.l.b16 %v1488
    %v2394 = vunpack.c.h.b16 %v1488
    %v2395 = vunpack.c.l.b16 %v1489
    %v2396 = vunpack.c.h.b16 %v1489
    %v2397 = vunpack.c.l.b16 %v1490
    %v2398 = vunpack.c.h.b16 %v1490
    %v2399 = vunpack.c.l.b16 %v1491
    %v2400 = vunpack.c.h.b16 %v1491
    %v2401 = vunpack.c.l.b16 %v1492
    %v2402 = vunpack.c.h.b16 %v1492
    %v2403 = vunpack.c.l.b16 %v1493
    %v2404 = vunpack.c.h.b16 %v1493
    %v2405 = vunpack.c.l.b16 %v1494
    %v2406 = vunpack.c.h.b16 %v1494
    %v2407 = vunpack.c.l.b16 %v1495
    %v2408 = vunpack.c.h.b16 %v1495
    %v2409 = vunpack.c.l.b16 %v1496
    %v2410 = vunpack.c.h.b16 %v1496
    %v2411 = vunpack.c.l.b16 %v1497
    %v2412 = vunpack.c.h.b16 %v1497
    %v2413 = vunpack.c.l.b16 %v1498
    %v2414 = vunpack.c.h.b16 %v1498
    %v2415 = vunpack.c.l.b16 %v1499
    %v2416 = vunpack.c.h.b16 %v1499
    %v2417 = vunpack.c.l.b16 %v1500
    %v2418 = vunpack.c.h.b16 %v1500
    %v2419 = vunpack.c.l.b16 %v1501
    %v2420 = vunpack.c.h.b16 %v1501
    %v2421 = vunpack.c.l.b16 %v1502
    %v2422 = vunpack.c.h.b16 %v1502
    %v2423 = vunpack.c.l.b16 %v1503
    %v2424 = vunpack.c.h.b16 %v1503
    %v2425 = vunpack.c.l.b16 %v1504
    %v2426 = vunpack.c.h.b16 %v1504
    %v2427 = vunpack.c.l.b16 %v1505
    %v2428 = vunpack.c.h.b16 %v1505
    %v2429 = vunpack.c.l.b16 %v1506
    %v2430 = vunpack.c.h.b16 %v1506
    %v2431 = vunpack.c.l.b16 %v1507
    %v2432 = vunpack.c.h.b16 %v1507
    %v2433 = vunpack.c.l.b16 %v1508
    %v2434 = vunpack.c.h.b16 %v1508
    %v2435 = vunpack.c.l.b16 %v1509
    %v2436 = vunpack.c.h.b16 %v1509
    %v2437 = vunpack.c.l.b16 %v1510
    %v2438 = vunpack.c.h.b16 %v1510
    %v2439 = vunpack.c.l.b16 %v1511
    %v2440 = vunpack.c.h.b16 %v1511
    %v2441 = vunpack.c.l.b16 %v1512
    %v2442 = vunpack.c.h.b16 %v1512
    %v2443 = vunpack.c.l.b16 %v1513
    %v2444 = vunpack.c.h.b16 %v1513
    %v2445 = vunpack.c.l.b16 %v1514
    %v2446 = vunpack.c.h.b16 %v1514
    %v2447 = vunpack.c.l.b16 %v1515
    %v2448 = vunpack.c.h.b16 %v1515
    %v2449 = vunpack.c.l.b16 %v1516
    %v2450 = vunpack.c.h.b16 %v1516
    %v2451 = vunpack.c.l.b16 %v1517
    %v2452 = vunpack.c.h.b16 %v1517
    %v2453 = vunpack.c.l.b16 %v1518
    %v2454 = vunpack.c.h.b16 %v1518
    %v2455 = vunpack.c.l.b16 %v1519
    %v2456 = vunpack.c.h.b16 %v1519
    %v2457 = vunpack.c.l.b16 %v1520
    %v2458 = vunpack.c.h.b16 %v1520
    %v2459 = vunpack.c.l.b16 %v1521
    %v2460 = vunpack.c.h.b16 %v1521
    %v2461 = vunpack.c.l.b16 %v1522
    %v2462 = vunpack.c.h.b16 %v1522
    %v2463 = vunpack.c.l.b16 %v1523
    %v2464 = vunpack.c.h.b16 %v1523
    %v2465 = vunpack.c.l.b16 %v1524
    %v2466 = vunpack.c.h.b16 %v1524
    %v2467 = vunpack.c.l.b16 %v1525
    %v2468 = vunpack.c.h.b16 %v1525
    %v2469 = vunpack.c.l.b16 %v1526
    %v2470 = vunpack.c.h.b16 %v1526
    %v2471 = vunpack.c.l.b16 %v1527
    %v2472 = vunpack.c.h.b16 %v1527
    %v2473 = vunpack.c.l.b16 %v1528
    %v2474 = vunpack.c.h.b16 %v1528
    %v2475 = vunpack.c.l.b16 %v1529
    %v2476 = vunpack.c.h.b16 %v1529
    %v2477 = vunpack.c.l.b16 %v1530
    %v2478 = vunpack.c.h.b16 %v1530
    %v2479 = vunpack.c.l.b16 %v1531
    %v2480 = vunpack.c.h.b16 %v1531
    %v2481 = vunpack.c.l.b16 %v1532
    %v2482 = vunpack.c.h.b16 %v1532
    %v2483 = vunpack.c.l.b16 %v1533
    %v2484 = vunpack.c.h.b16 %v1533
    %v2485 = vunpack.c.l.b16 %v1534
    %v2486 = vunpack.c.h.b16 %v1534
    %v2487 = vunpack.c.l.b16 %v1535
    %v2488 = vunpack.c.h.b16 %v1535
    %v2489 = vunpack.c.l.b16 %v1536
    %v2490 = vunpack.c.h.b16 %v1536
    %v2491 = vunpack.c.l.b16 %v1537
    %v2492 = vunpack.c.h.b16 %v1537
    %v2493 = vunpack.c.l.b16 %v1538
    %v2494 = vunpack.c.h.b16 %v1538
    %v2495 = vunpack.c.l.b16 %v1539
    %v2496 = vunpack.c.h.b16 %v1539
    %v2497 = vunpack.c.l.b16 %v1540
    %v2498 = vunpack.c.h.b16 %v1540
    %v2499 = vunpack.c.l.b16 %v1541
    %v2500 = vunpack.c.h.b16 %v1541
    %v2501 = vunpack.c.l.b16 %v1542
    %v2502 = vunpack.c.h.b16 %v1542
    %v2503 = vpack.c.b16 %v1871, %v1863
    %v2504 = vpack.c.b16 %v1872, %v1864
    %v2505 = vpack.c.b16 %v1873, %v1865
    %v2506 = vpack.c.b16 %v1874, %v1866
    %v2507 = vpack.c.b16 %v1875, %v1867
    %v2508 = vpack.c.b16 %v1876, %v1868
    %v2509 = vpack.c.b16 %v1877, %v1869
    %v2510 = vpack.c.b16 %v1878, %v1870
    %v2511 = vpack.c.b16 %v1887, %v1879
    %v2512 = vpack.c.b16 %v1888, %v1880
    %v2513 = vpack.c.b16 %v1889, %v1881
    %v2514 = vpack.c.b16 %v1890, %v1882
    %v2515 = vpack.c.b16 %v1891, %v1883
    %v2516 = vpack.c.b16 %v1892, %v1884
    %v2517 = vpack.c.b16 %v1893, %v1885
    %v2518 = vpack.c.b16 %v1894, %v1886
    %v2519 = vpack.c.b16 %v1903, %v1895
    %v2520 = vpack.c.b16 %v1904, %v1896
    %v2521 = vpack.c.b16 %v1905, %v1897
    %v2522 = vpack.c.b16 %v1906, %v1898
    %v2523 = vpack.c.b16 %v1907, %v1899
    %v2524 = vpack.c.b16 %v1908, %v1900
    %v2525 = vpack.c.b16 %v1909, %v1901
    %v2526 = vpack.c.b16 %v1910, %v1902
    %v2527 = vpack.c.b16 %v1919, %v1911
    %v2528 = vpack.c.b16 %v1920, %v1912
    %v2529 = vpack.c.b16 %v1921, %v1913
    %v2530 = vpack.c.b16 %v1922, %v1914
    %v2531 = vpack.c.b16 %v1923, %v1915
    %v2532 = vpack.c.b16 %v1924, %v1916
    %v2533 = vpack.c.b16 %v1925, %v1917
    %v2534 = vpack.c.b16 %v1926, %v1918
    %v2535 = vpack.c.b16 %v1935, %v1927
    %v2536 = vpack.c.b16 %v1936, %v1928
    %v2537 = vpack.c.b16 %v1937, %v1929
    %v2538 = vpack.c.b16 %v1938, %v1930
    %v2539 = vpack.c.b16 %v1939, %v1931
    %v2540 = vpack.c.b16 %v1940, %v1932
    %v2541 = vpack.c.b16 %v1941, %v1933
    %v2542 = vpack.c.b16 %v1942, %v1934
    %v2543 = vpack.c.b16 %v1951, %v1943
    %v2544 = vpack.c.b16 %v1952, %v1944
    %v2545 = vpack.c.b16 %v1953, %v1945
    %v2546 = vpack.c.b16 %v1954, %v1946
    %v2547 = vpack.c.b16 %v1955, %v1947
    %v2548 = vpack.c.b16 %v1956, %v1948
    %v2549 = vpack.c.b16 %v1957, %v1949
    %v2550 = vpack.c.b16 %v1958, %v1950
    %v2551 = vpack.c.b16 %v1967, %v1959
    %v2552 = vpack.c.b16 %v1968, %v1960
    %v2553 = vpack.c.b16 %v1969, %v1961
    %v2554 = vpack.c.b16 %v1970, %v1962
    %v2555 = vpack.c.b16 %v1971, %v1963
    %v2556 = vpack.c.b16 %v1972, %v1964
    %v2557 = vpack.c.b16 %v1973, %v1965
    %v2558 = vpack.c.b16 %v1974, %v1966
    %v2559 = vpack.c.b16 %v1983, %v1975
    %v2560 = vpack.c.b16 %v1984, %v1976
    %v2561 = vpack.c.b16 %v1985, %v1977
    %v2562 = vpack.c.b16 %v1986, %v1978
    %v2563 = vpack.c.b16 %v1987, %v1979
    %v2564 = vpack.c.b16 %v1988, %v1980
    %v2565 = vpack.c.b16 %v1989, %v1981
    %v2566 = vpack.c.b16 %v1990, %v1982
    %v2567 = vpack.c.b16 %v1999, %v1991
    %v2568 = vpack.c.b16 %v2000, %v1992
    %v2569 = vpack.c.b16 %v2001, %v1993
    %v2570 = vpack.c.b16 %v2002, %v1994
    %v2571 = vpack.c.b16 %v2003, %v1995
    %v2572 = vpack.c.b16 %v2004, %v1996
    %v2573 = vpack.c.b16 %v2005, %v1997
    %v2574 = vpack.c.b16 %v2006, %v1998
    %v2575 = vpack.c.b16 %v2015, %v2007
    %v2576 = vpack.c.b16 %v2016, %v2008
    %v2577 = vpack.c.b16 %v2017, %v2009
    %v2578 = vpack.c.b16 %v2018, %v2010
    %v2579 = vpack.c.b16 %v2019, %v2011
    %v2580 = vpack.c.b16 %v2020, %v2012
    %v2581 = vpack.c.b16 %v2021, %v2013
    %v2582 = vpack.c.b16 %v2022, %v2014
    %v2583 = vpack.c.b16 %v2031, %v2023
    %v2584 = vpack.c.b16 %v2032, %v2024
    %v2585 = vpack.c.b16 %v2033, %v2025
    %v2586 = vpack.c.b16 %v2034, %v2026
    %v2587 = vpack.c.b16 %v2035, %v2027
    %v2588 = vpack.c.b16 %v2036, %v2028
    %v2589 = vpack.c.b16 %v2037, %v2029
    %v2590 = vpack.c.b16 %v2038, %v2030
    %v2591 = vpack.c.b16 %v2047, %v2039
    %v2592 = vpack.c.b16 %v2048, %v2040
    %v2593 = vpack.c.b16 %v2049, %v2041
    %v2594 = vpack.c.b16 %v2050, %v2042
    %v2595 = vpack.c.b16 %v2051, %v2043
    %v2596 = vpack.c.b16 %v2052, %v2044
    %v2597 = vpack.c.b16 %v2053, %v2045
    %v2598 = vpack.c.b16 %v2054, %v2046
    %v2599 = vpack.c.b16 %v2063, %v2055
    %v2600 = vpack.c.b16 %v2064, %v2056
    %v2601 = vpack.c.b16 %v2065, %v2057
    %v2602 = vpack.c.b16 %v2066, %v2058
    %v2603 = vpack.c.b16 %v2067, %v2059
    %v2604 = vpack.c.b16 %v2068, %v2060
    %v2605 = vpack.c.b16 %v2069, %v2061
    %v2606 = vpack.c.b16 %v2070, %v2062
    %v2607 = vpack.c.b16 %v2079, %v2071
    %v2608 = vpack.c.b16 %v2080, %v2072
    %v2609 = vpack.c.b16 %v2081, %v2073
    %v2610 = vpack.c.b16 %v2082, %v2074
    %v2611 = vpack.c.b16 %v2083, %v2075
    %v2612 = vpack.c.b16 %v2084, %v2076
    %v2613 = vpack.c.b16 %v2085, %v2077
    %v2614 = vpack.c.b16 %v2086, %v2078
    %v2615 = vpack.c.b16 %v2095, %v2087
    %v2616 = vpack.c.b16 %v2096, %v2088
    %v2617 = vpack.c.b16 %v2097, %v2089
    %v2618 = vpack.c.b16 %v2098, %v2090
    %v2619 = vpack.c.b16 %v2099, %v2091
    %v2620 = vpack.c.b16 %v2100, %v2092
    %v2621 = vpack.c.b16 %v2101, %v2093
    %v2622 = vpack.c.b16 %v2102, %v2094
    %v2623 = vpack.c.b16 %v2111, %v2103
    %v2624 = vpack.c.b16 %v2112, %v2104
    %v2625 = vpack.c.b16 %v2113, %v2105
    %v2626 = vpack.c.b16 %v2114, %v2106
    %v2627 = vpack.c.b16 %v2115, %v2107
    %v2628 = vpack.c.b16 %v2116, %v2108
    %v2629 = vpack.c.b16 %v2117, %v2109
    %v2630 = vpack.c.b16 %v2118, %v2110
    %v2631 = vpack.c.b16 %v2127, %v2119
    %v2632 = vpack.c.b16 %v2128, %v2120
    %v2633 = vpack.c.b16 %v2129, %v2121
    %v2634 = vpack.c.b16 %v2130, %v2122
    %v2635 = vpack.c.b16 %v2131, %v2123
    %v2636 = vpack.c.b16 %v2132, %v2124
    %v2637 = vpack.c.b16 %v2133, %v2125
    %v2638 = vpack.c.b16 %v2134, %v2126
    %v2639 = vpack.c.b16 %v2143, %v2135
    %v2640 = vpack.c.b16 %v2144, %v2136
    %v2641 = vpack.c.b16 %v2145, %v2137
    %v2642 = vpack.c.b16 %v2146, %v2138
    %v2643 = vpack.c.b16 %v2147, %v2139
    %v2644 = vpack.c.b16 %v2148, %v2140
    %v2645 = vpack.c.b16 %v2149, %v2141
    %v2646 = vpack.c.b16 %v2150, %v2142
    %v2647 = vpack.c.b16 %v2159, %v2151
    %v2648 = vpack.c.b16 %v2160, %v2152
    %v2649 = vpack.c.b16 %v2161, %v2153
    %v2650 = vpack.c.b16 %v2162, %v2154
    %v2651 = vpack.c.b16 %v2163, %v2155
    %v2652 = vpack.c.b16 %v2164, %v2156
    %v2653 = vpack.c.b16 %v2165, %v2157
    %v2654 = vpack.c.b16 %v2166, %v2158
    %v2655 = vpack.c.b16 %v2175, %v2167
    %v2656 = vpack.c.b16 %v2176, %v2168
    %v2657 = vpack.c.b16 %v2177, %v2169
    %v2658 = vpack.c.b16 %v2178, %v2170
    %v2659 = vpack.c.b16 %v2179, %v2171
    %v2660 = vpack.c.b16 %v2180, %v2172
    %v2661 = vpack.c.b16 %v2181, %v2173
    %v2662 = vpack.c.b16 %v2182, %v2174
    %v2663 = vpack.c.b16 %v2191, %v2183
    %v2664 = vpack.c.b16 %v2192, %v2184
    %v2665 = vpack.c.b16 %v2193, %v2185
    %v2666 = vpack.c.b16 %v2194, %v2186
    %v2667 = vpack.c.b16 %v2195, %v2187
    %v2668 = vpack.c.b16 %v2196, %v2188
    %v2669 = vpack.c.b16 %v2197, %v2189
    %v2670 = vpack.c.b16 %v2198, %v2190
    %v2671 = vpack.c.b16 %v2207, %v2199
    %v2672 = vpack.c.b16 %v2208, %v2200
    %v2673 = vpack.c.b16 %v2209, %v2201
    %v2674 = vpack.c.b16 %v2210, %v2202
    %v2675 = vpack.c.b16 %v2211, %v2203
    %v2676 = vpack.c.b16 %v2212, %v2204
    %v2677 = vpack.c.b16 %v2213, %v2205
    %v2678 = vpack.c.b16 %v2214, %v2206
    %v2679 = vpack.c.b16 %v2223, %v2215
    %v2680 = vpack.c.b16 %v2224, %v2216
    %v2681 = vpack.c.b16 %v2225, %v2217
    %v2682 = vpack.c.b16 %v2226, %v2218
    %v2683 = vpack.c.b16 %v2227, %v2219
    %v2684 = vpack.c.b16 %v2228, %v2220
    %v2685 = vpack.c.b16 %v2229, %v2221
    %v2686 = vpack.c.b16 %v2230, %v2222
    %v2687 = vpack.c.b16 %v2239, %v2231
    %v2688 = vpack.c.b16 %v2240, %v2232
    %v2689 = vpack.c.b16 %v2241, %v2233
    %v2690 = vpack.c.b16 %v2242, %v2234
    %v2691 = vpack.c.b16 %v2243, %v2235
    %v2692 = vpack.c.b16 %v2244, %v2236
    %v2693 = vpack.c.b16 %v2245, %v2237
    %v2694 = vpack.c.b16 %v2246, %v2238
    %v2695 = vpack.c.b16 %v2255, %v2247
    %v2696 = vpack.c.b16 %v2256, %v2248
    %v2697 = vpack.c.b16 %v2257, %v2249
    %v2698 = vpack.c.b16 %v2258, %v2250
    %v2699 = vpack.c.b16 %v2259, %v2251
    %v2700 = vpack.c.b16 %v2260, %v2252
    %v2701 = vpack.c.b16 %v2261, %v2253
    %v2702 = vpack.c.b16 %v2262, %v2254
    %v2703 = vpack.c.b16 %v2271, %v2263
    %v2704 = vpack.c.b16 %v2272, %v2264
    %v2705 = vpack.c.b16 %v2273, %v2265
    %v2706 = vpack.c.b16 %v2274, %v2266
    %v2707 = vpack.c.b16 %v2275, %v2267
    %v2708 = vpack.c.b16 %v2276, %v2268
    %v2709 = vpack.c.b16 %v2277, %v2269
    %v2710 = vpack.c.b16 %v2278, %v2270
    %v2711 = vpack.c.b16 %v2287, %v2279
    %v2712 = vpack.c.b16 %v2288, %v2280
    %v2713 = vpack.c.b16 %v2289, %v2281
    %v2714 = vpack.c.b16 %v2290, %v2282
    %v2715 = vpack.c.b16 %v2291, %v2283
    %v2716 = vpack.c.b16 %v2292, %v2284
    %v2717 = vpack.c.b16 %v2293, %v2285
    %v2718 = vpack.c.b16 %v2294, %v2286
    %v2719 = vpack.c.b16 %v2303, %v2295
    %v2720 = vpack.c.b16 %v2304, %v2296
    %v2721 = vpack.c.b16 %v2305, %v2297
    %v2722 = vpack.c.b16 %v2306, %v2298
    %v2723 = vpack.c.b16 %v2307, %v2299
    %v2724 = vpack.c.b16 %v2308, %v2300
    %v2725 = vpack.c.b16 %v2309, %v2301
    %v2726 = vpack.c.b16 %v2310, %v2302
    %v2727 = vpack.c.b16 %v2319, %v2311
    %v2728 = vpack.c.b16 %v2320, %v2312
    %v2729 = vpack.c.b16 %v2321, %v2313
    %v2730 = vpack.c.b16 %v2322, %v2314
    %v2731 = vpack.c.b16 %v2323, %v2315
    %v2732 = vpack.c.b16 %v2324, %v2316
    %v2733 = vpack.c.b16 %v2325, %v2317
    %v2734 = vpack.c.b16 %v2326, %v2318
    %v2735 = vpack.c.b16 %v2335, %v2327
    %v2736 = vpack.c.b16 %v2336, %v2328
    %v2737 = vpack.c.b16 %v2337, %v2329
    %v2738 = vpack.c.b16 %v2338, %v2330
    %v2739 = vpack.c.b16 %v2339, %v2331
    %v2740 = vpack.c.b16 %v2340, %v2332
    %v2741 = vpack.c.b16 %v2341, %v2333
    %v2742 = vpack.c.b16 %v2342, %v2334
    %v2743 = vpack.c.b16 %v2351, %v2343
    %v2744 = vpack.c.b16 %v2352, %v2344
    %v2745 = vpack.c.b16 %v2353, %v2345
    %v2746 = vpack.c.b16 %v2354, %v2346
    %v2747 = vpack.c.b16 %v2355, %v2347
    %v2748 = vpack.c.b16 %v2356, %v2348
    %v2749 = vpack.c.b16 %v2357, %v2349
    %v2750 = vpack.c.b16 %v2358, %v2350
    %v2751 = vpack.c.b16 %v2367, %v2359
    %v2752 = vpack.c.b16 %v2368, %v2360
    %v2753 = vpack.c.b16 %v2369, %v2361
    %v2754 = vpack.c.b16 %v2370, %v2362
    %v2755 = vpack.c.b16 %v2371, %v2363
    %v2756 = vpack.c.b16 %v2372, %v2364
    %v2757 = vpack.c.b16 %v2373, %v2365
    %v2758 = vpack.c.b16 %v2374, %v2366
    %v2759 = vpack.c.b16 %v2383, %v2375
    %v2760 = vpack.c.b16 %v2384, %v2376
    %v2761 = vpack.c.b16 %v2385, %v2377
    %v2762 = vpack.c.b16 %v2386, %v2378
    %v2763 = vpack.c.b16 %v2387, %v2379
    %v2764 = vpack.c.b16 %v2388, %v2380
    %v2765 = vpack.c.b16 %v2389, %v2381
    %v2766 = vpack.c.b16 %v2390, %v2382
    %v2767 = vpack.c.b16 %v2399, %v2391
    %v2768 = vpack.c.b16 %v2400, %v2392
    %v2769 = vpack.c.b16 %v2401, %v2393
    %v2770 = vpack.c.b16 %v2402, %v2394
    %v2771 = vpack.c.b16 %v2403, %v2395
    %v2772 = vpack.c.b16 %v2404, %v2396
    %v2773 = vpack.c.b16 %v2405, %v2397
    %v2774 = vpack.c.b16 %v2406, %v2398
    %v2775 = vpack.c.b16 %v2415, %v2407
    %v2776 = vpack.c.b16 %v2416, %v2408
    %v2777 = vpack.c.b16 %v2417, %v2409
    %v2778 = vpack.c.b16 %v2418, %v2410
    %v2779 = vpack.c.b16 %v2419, %v2411
    %v2780 = vpack.c.b16 %v2420, %v2412
    %v2781 = vpack.c.b16 %v2421, %v2413
    %v2782 = vpack.c.b16 %v2422, %v2414
    %v2783 = vpack.c.b16 %v2431, %v2423
    %v2784 = vpack.c.b16 %v2432, %v2424
    %v2785 = vpack.c.b16 %v2433, %v2425
    %v2786 = vpack.c.b16 %v2434, %v2426
    %v2787 = vpack.c.b16 %v2435, %v2427
    %v2788 = vpack.c.b16 %v2436, %v2428
    %v2789 = vpack.c.b16 %v2437, %v2429
    %v2790 = vpack.c.b16 %v2438, %v2430
    %v2791 = vpack.c.b16 %v2447, %v2439
    %v2792 = vpack.c.b16 %v2448, %v2440
    %v2793 = vpack.c.b16 %v2449, %v2441
    %v2794 = vpack.c.b16 %v2450, %v2442
    %v2795 = vpack.c.b16 %v2451, %v2443
    %v2796 = vpack.c.b16 %v2452, %v2444
    %v2797 = vpack.c.b16 %v2453, %v2445
    %v2798 = vpack.c.b16 %v2454, %v2446
    %v2799 = vpack.c.b16 %v2463, %v2455
    %v2800 = vpack.c.b16 %v2464, %v2456
    %v2801 = vpack.c.b16 %v2465, %v2457
    %v2802 = vpack.c.b16 %v2466, %v2458
    %v2803 = vpack.c.b16 %v2467, %v2459
    %v2804 = vpack.c.b16 %v2468, %v2460
    %v2805 = vpack.c.b16 %v2469, %v2461
    %v2806 = vpack.c.b16 %v2470, %v2462
    %v2807 = vpack.c.b16 %v2479, %v2471
    %v2808 = vpack.c.b16 %v2480, %v2472
    %v2809 = vpack.c.b16 %v2481, %v2473
    %v2810 = vpack.c.b16 %v2482, %v2474
    %v2811 = vpack.c.b16 %v2483, %v2475
    %v2812 = vpack.c.b16 %v2484, %v2476
    %v2813 = vpack.c.b16 %v2485, %v2477
    %v2814 = vpack.c.b16 %v2486, %v2478
    %v2815 = vpack.c.b16 %v2495, %v2487
    %v2816 = vpack.c.b16 %v2496, %v2488
    %v2817 = vpack.c.b16 %v2497, %v2489
    %v2818 = vpack.c.b16 %v2498, %v2490
    %v2819 = vpack.c.b16 %v2499, %v2491
    %v2820 = vpack.c.b16 %v2500, %v2492
    %v2821 = vpack.c.b16 %v2501, %v2493
    %v2822 = vpack.c.b16 %v2502, %v2494
    %3143 = vmatprep.subr.bf16.mxu0 %v2560
    %3144 = vmatpush1.bf16.msra.mxu0 %v2559
    %3145 = vmatprep.subr.bf16.mxu0 %v2552
    %3146 = vmatpush1.bf16.msra.mxu0 %v2551
    %3147 = vmatprep.subr.bf16.mxu0 %v2544
    %3148 = vmatpush1.bf16.msra.mxu0 %v2543
    %3149 = vmatprep.subr.bf16.mxu0 %v2536
    %3150 = vmatpush1.bf16.msra.mxu0 %v2535
    %3151 = vmatprep.subr.bf16.mxu0 %v2528
    %3152 = vmatpush1.bf16.msra.mxu0 %v2527
    %3153 = vmatprep.subr.bf16.mxu0 %v2520
    %3154 = vmatpush1.bf16.msra.mxu0 %v2519
    %3155 = vmatprep.subr.bf16.mxu0 %v2512
    %3156 = vmatpush1.bf16.msra.mxu0 %v2511
    %3157 = vmatprep.subr.bf16.mxu0 %v2504
    %3158 = vmatpush1.bf16.msra.mxu0 %v2503
    %3159 = vmatprep.subr.bf16.mxu0 %v2624
    %3160 = vmatpush2.bf16.msra.mxu0 %v2623
    %3161 = vmatprep.subr.bf16.mxu0 %v2616
    %3162 = vmatpush2.bf16.msra.mxu0 %v2615
    %3163 = vmatprep.subr.bf16.mxu0 %v2608
    %3164 = vmatpush2.bf16.msra.mxu0 %v2607
    %3165 = vmatprep.subr.bf16.mxu0 %v2600
    %3166 = vmatpush2.bf16.msra.mxu0 %v2599
    %3167 = vmatprep.subr.bf16.mxu0 %v2592
    %3168 = vmatpush2.bf16.msra.mxu0 %v2591
    %3169 = vmatprep.subr.bf16.mxu0 %v2584
    %3170 = vmatpush2.bf16.msra.mxu0 %v2583
    %3171 = vmatprep.subr.bf16.mxu0 %v2576
    %3172 = vmatpush2.bf16.msra.mxu0 %v2575
    %3173 = vmatprep.subr.bf16.mxu0 %v2568
    %3174 = vmatpush2.bf16.msra.mxu0 %v2567
    %3175 = vmatprep.mubr.bf16.mxu0 %v1219
    %3176 = vmatmul.mubr.bf16.gmra.mxu0 %v1218
    %v3177 = vpop.f32.mrf.mxu0
    %v3178 = vadd.f32 0.0, %v3177
    %v3179 = vpop.f32.mrf.mxu0
    %v3180 = vadd.f32 0.0, %v3179
    %v3181 = vpop.f32.mrf.mxu0
    %v3182 = vpop.f32.mrf.mxu0
    %3183 = vdwg.mxu0
    %3184 = vmatprep.subr.bf16.mxu0 %v2688
    %3185 = vmatpush1.bf16.msra.mxu0 %v2687
    %3186 = vmatprep.subr.bf16.mxu0 %v2680
    %3187 = vmatpush1.bf16.msra.mxu0 %v2679
    %3188 = vmatprep.subr.bf16.mxu0 %v2672
    %3189 = vmatpush1.bf16.msra.mxu0 %v2671
    %3190 = vmatprep.subr.bf16.mxu0 %v2664
    %3191 = vmatpush1.bf16.msra.mxu0 %v2663
    %3192 = vmatprep.subr.bf16.mxu0 %v2656
    %3193 = vmatpush1.bf16.msra.mxu0 %v2655
    %3194 = vmatprep.subr.bf16.mxu0 %v2648
    %3195 = vmatpush1.bf16.msra.mxu0 %v2647
    %3196 = vmatprep.subr.bf16.mxu0 %v2640
    %3197 = vmatpush1.bf16.msra.mxu0 %v2639
    %3198 = vmatprep.subr.bf16.mxu0 %v2632
    %3199 = vmatpush1.bf16.msra.mxu0 %v2631
    %3200 = vmatprep.subr.bf16.mxu0 %v2752
    %3201 = vmatpush2.bf16.msra.mxu0 %v2751
    %3202 = vmatprep.subr.bf16.mxu0 %v2744
    %3203 = vmatpush2.bf16.msra.mxu0 %v2743
    %3204 = vmatprep.subr.bf16.mxu0 %v2736
    %3205 = vmatpush2.bf16.msra.mxu0 %v2735
    %3206 = vmatprep.subr.bf16.mxu0 %v2728
    %3207 = vmatpush2.bf16.msra.mxu0 %v2727
    %3208 = vmatprep.subr.bf16.mxu0 %v2720
    %3209 = vmatpush2.bf16.msra.mxu0 %v2719
    %3210 = vmatprep.subr.bf16.mxu0 %v2712
    %3211 = vmatpush2.bf16.msra.mxu0 %v2711
    %3212 = vmatprep.subr.bf16.mxu0 %v2704
    %3213 = vmatpush2.bf16.msra.mxu0 %v2703
    %3214 = vmatprep.subr.bf16.mxu0 %v2696
    %3215 = vmatpush2.bf16.msra.mxu0 %v2695
    %3216 = vmatprep.mubr.bf16.mxu0 %v1221
    %3217 = vmatmul.mubr.bf16.gmra.mxu0 %v1220
    %v3218 = vpop.f32.mrf.mxu0
    %v3219 = vadd.f32 %v3178, %v3218
    %v3220 = vpop.f32.mrf.mxu0
    %v3221 = vadd.f32 %v3180, %v3220
    %v3222 = vpop.f32.mrf.mxu0
    %v3223 = vpop.f32.mrf.mxu0
    %3224 = vdwg.mxu0
    %3225 = vmatprep.subr.bf16.mxu0 %v2816
    %3226 = vmatpush1.bf16.msra.mxu0 %v2815
    %3227 = vmatprep.subr.bf16.mxu0 %v2808
    %3228 = vmatpush1.bf16.msra.mxu0 %v2807
    %3229 = vmatprep.subr.bf16.mxu0 %v2800
    %3230 = vmatpush1.bf16.msra.mxu0 %v2799
    %3231 = vmatprep.subr.bf16.mxu0 %v2792
    %3232 = vmatpush1.bf16.msra.mxu0 %v2791
    %3233 = vmatprep.subr.bf16.mxu0 %v2784
    %3234 = vmatpush1.bf16.msra.mxu0 %v2783
    %3235 = vmatprep.subr.bf16.mxu0 %v2776
    %3236 = vmatpush1.bf16.msra.mxu0 %v2775
    %3237 = vmatprep.subr.bf16.mxu0 %v2768
    %3238 = vmatpush1.bf16.msra.mxu0 %v2767
    %3239 = vmatprep.subr.bf16.mxu0 %v2760
    %3240 = vmatpush1.bf16.msra.mxu0 %v2759
    %3241 = vmatprep.subr.bf16.mxu0 0
    %3242 = vmatpush2.bf16.msra.mxu0 0
    %3243 = vmatprep.subr.bf16.mxu0 0
    %3244 = vmatpush2.bf16.msra.mxu0 0
    %3245 = vmatprep.subr.bf16.mxu0 0
    %3246 = vmatpush2.bf16.msra.mxu0 0
    %3247 = vmatprep.subr.bf16.mxu0 0
    %3248 = vmatpush2.bf16.msra.mxu0 0
    %3249 = vmatprep.subr.bf16.mxu0 0
    %3250 = vmatpush2.bf16.msra.mxu0 0
    %3251 = vmatprep.subr.bf16.mxu0 0
    %3252 = vmatpush2.bf16.msra.mxu0 0
    %3253 = vmatprep.subr.bf16.mxu0 0
    %3254 = vmatpush2.bf16.msra.mxu0 0
    %3255 = vmatprep.subr.bf16.mxu0 0
    %3256 = vmatpush2.bf16.msra.mxu0 0
    %3257 = vmatprep.mubr.bf16.mxu0 0
    %3258 = vmatmul.mubr.bf16.gmra.mxu0 %v1222
    %v3259 = vpop.f32.mrf.mxu0
    %v3260 = vadd.f32 %v3219, %v3259
    %v3261 = vpop.f32.mrf.mxu0
    %v3262 = vadd.f32 %v3221, %v3261
    %v3263 = vpop.f32.mrf.mxu0
    %v3264 = vpop.f32.mrf.mxu0
    %3265 = vdwg.mxu0
    %3266 = vmatprep.subr.bf16.mxu0 %v2562
    %3267 = vmatpush1.bf16.msra.mxu0 %v2561
    %3268 = vmatprep.subr.bf16.mxu0 %v2554
    %3269 = vmatpush1.bf16.msra.mxu0 %v2553
    %3270 = vmatprep.subr.bf16.mxu0 %v2546
    %3271 = vmatpush1.bf16.msra.mxu0 %v2545
    %3272 = vmatprep.subr.bf16.mxu0 %v2538
    %3273 = vmatpush1.bf16.msra.mxu0 %v2537
    %3274 = vmatprep.subr.bf16.mxu0 %v2530
    %3275 = vmatpush1.bf16.msra.mxu0 %v2529
    %3276 = vmatprep.subr.bf16.mxu0 %v2522
    %3277 = vmatpush1.bf16.msra.mxu0 %v2521
    %3278 = vmatprep.subr.bf16.mxu0 %v2514
    %3279 = vmatpush1.bf16.msra.mxu0 %v2513
    %3280 = vmatprep.subr.bf16.mxu0 %v2506
    %3281 = vmatpush1.bf16.msra.mxu0 %v2505
    %3282 = vmatprep.subr.bf16.mxu0 %v2626
    %3283 = vmatpush2.bf16.msra.mxu0 %v2625
    %3284 = vmatprep.subr.bf16.mxu0 %v2618
    %3285 = vmatpush2.bf16.msra.mxu0 %v2617
    %3286 = vmatprep.subr.bf16.mxu0 %v2610
    %3287 = vmatpush2.bf16.msra.mxu0 %v2609
    %3288 = vmatprep.subr.bf16.mxu0 %v2602
    %3289 = vmatpush2.bf16.msra.mxu0 %v2601
    %3290 = vmatprep.subr.bf16.mxu0 %v2594
    %3291 = vmatpush2.bf16.msra.mxu0 %v2593
    %3292 = vmatprep.subr.bf16.mxu0 %v2586
    %3293 = vmatpush2.bf16.msra.mxu0 %v2585
    %3294 = vmatprep.subr.bf16.mxu0 %v2578
    %3295 = vmatpush2.bf16.msra.mxu0 %v2577
    %3296 = vmatprep.subr.bf16.mxu0 %v2570
    %3297 = vmatpush2.bf16.msra.mxu0 %v2569
    %3298 = vmatprep.mubr.bf16.mxu0 %v1219
    %3299 = vmatmul.mubr.bf16.gmra.mxu0 %v1218
    %v3300 = vpop.f32.mrf.mxu0
    %v3301 = vadd.f32 0.0, %v3300
    %v3302 = vpop.f32.mrf.mxu0
    %v3303 = vadd.f32 0.0, %v3302
    %v3304 = vpop.f32.mrf.mxu0
    %v3305 = vpop.f32.mrf.mxu0
    %3306 = vdwg.mxu0
    %3307 = vmatprep.subr.bf16.mxu0 %v2690
    %3308 = vmatpush1.bf16.msra.mxu0 %v2689
    %3309 = vmatprep.subr.bf16.mxu0 %v2682
    %3310 = vmatpush1.bf16.msra.mxu0 %v2681
    %3311 = vmatprep.subr.bf16.mxu0 %v2674
    %3312 = vmatpush1.bf16.msra.mxu0 %v2673
    %3313 = vmatprep.subr.bf16.mxu0 %v2666
    %3314 = vmatpush1.bf16.msra.mxu0 %v2665
    %3315 = vmatprep.subr.bf16.mxu0 %v2658
    %3316 = vmatpush1.bf16.msra.mxu0 %v2657
    %3317 = vmatprep.subr.bf16.mxu0 %v2650
    %3318 = vmatpush1.bf16.msra.mxu0 %v2649
    %3319 = vmatprep.subr.bf16.mxu0 %v2642
    %3320 = vmatpush1.bf16.msra.mxu0 %v2641
    %3321 = vmatprep.subr.bf16.mxu0 %v2634
    %3322 = vmatpush1.bf16.msra.mxu0 %v2633
    %3323 = vmatprep.subr.bf16.mxu0 %v2754
    %3324 = vmatpush2.bf16.msra.mxu0 %v2753
    %3325 = vmatprep.subr.bf16.mxu0 %v2746
    %3326 = vmatpush2.bf16.msra.mxu0 %v2745
    %3327 = vmatprep.subr.bf16.mxu0 %v2738
    %3328 = vmatpush2.bf16.msra.mxu0 %v2737
    %3329 = vmatprep.subr.bf16.mxu0 %v2730
    %3330 = vmatpush2.bf16.msra.mxu0 %v2729
    %3331 = vmatprep.subr.bf16.mxu0 %v2722
    %3332 = vmatpush2.bf16.msra.mxu0 %v2721
    %3333 = vmatprep.subr.bf16.mxu0 %v2714
    %3334 = vmatpush2.bf16.msra.mxu0 %v2713
    %3335 = vmatprep.subr.bf16.mxu0 %v2706
    %3336 = vmatpush2.bf16.msra.mxu0 %v2705
    %3337 = vmatprep.subr.bf16.mxu0 %v2698
    %3338 = vmatpush2.bf16.msra.mxu0 %v2697
    %3339 = vmatprep.mubr.bf16.mxu0 %v1221
    %3340 = vmatmul.mubr.bf16.gmra.mxu0 %v1220
    %v3341 = vpop.f32.mrf.mxu0
    %v3342 = vadd.f32 %v3301, %v3341
    %v3343 = vpop.f32.mrf.mxu0
    %v3344 = vadd.f32 %v3303, %v3343
    %v3345 = vpop.f32.mrf.mxu0
    %v3346 = vpop.f32.mrf.mxu0
    %3347 = vdwg.mxu0
    %3348 = vmatprep.subr.bf16.mxu0 %v2818
    %3349 = vmatpush1.bf16.msra.mxu0 %v2817
    %3350 = vmatprep.subr.bf16.mxu0 %v2810
    %3351 = vmatpush1.bf16.msra.mxu0 %v2809
    %3352 = vmatprep.subr.bf16.mxu0 %v2802
    %3353 = vmatpush1.bf16.msra.mxu0 %v2801
    %3354 = vmatprep.subr.bf16.mxu0 %v2794
    %3355 = vmatpush1.bf16.msra.mxu0 %v2793
    %3356 = vmatprep.subr.bf16.mxu0 %v2786
    %3357 = vmatpush1.bf16.msra.mxu0 %v2785
    %3358 = vmatprep.subr.bf16.mxu0 %v2778
    %3359 = vmatpush1.bf16.msra.mxu0 %v2777
    %3360 = vmatprep.subr.bf16.mxu0 %v2770
    %3361 = vmatpush1.bf16.msra.mxu0 %v2769
    %3362 = vmatprep.subr.bf16.mxu0 %v2762
    %3363 = vmatpush1.bf16.msra.mxu0 %v2761
    %3364 = vmatprep.subr.bf16.mxu0 0
    %3365 = vmatpush2.bf16.msra.mxu0 0
    %3366 = vmatprep.subr.bf16.mxu0 0
    %3367 = vmatpush2.bf16.msra.mxu0 0
    %3368 = vmatprep.subr.bf16.mxu0 0
    %3369 = vmatpush2.bf16.msra.mxu0 0
    %3370 = vmatprep.subr.bf16.mxu0 0
    %3371 = vmatpush2.bf16.msra.mxu0 0
    %3372 = vmatprep.subr.bf16.mxu0 0
    %3373 = vmatpush2.bf16.msra.mxu0 0
    %3374 = vmatprep.subr.bf16.mxu0 0
    %3375 = vmatpush2.bf16.msra.mxu0 0
    %3376 = vmatprep.subr.bf16.mxu0 0
    %3377 = vmatpush2.bf16.msra.mxu0 0
    %3378 = vmatprep.subr.bf16.mxu0 0
    %3379 = vmatpush2.bf16.msra.mxu0 0
    %3380 = vmatprep.mubr.bf16.mxu0 0
    %3381 = vmatmul.mubr.bf16.gmra.mxu0 %v1222
    %v3382 = vpop.f32.mrf.mxu0
    %v3383 = vadd.f32 %v3342, %v3382
    %v3384 = vpop.f32.mrf.mxu0
    %v3385 = vadd.f32 %v3344, %v3384
    %v3386 = vpop.f32.mrf.mxu0
    %v3387 = vpop.f32.mrf.mxu0
    %3388 = vdwg.mxu0
    %3389 = vmatprep.subr.bf16.mxu0 %v2564
    %3390 = vmatpush1.bf16.msra.mxu0 %v2563
    %3391 = vmatprep.subr.bf16.mxu0 %v2556
    %3392 = vmatpush1.bf16.msra.mxu0 %v2555
    %3393 = vmatprep.subr.bf16.mxu0 %v2548
    %3394 = vmatpush1.bf16.msra.mxu0 %v2547
    %3395 = vmatprep.subr.bf16.mxu0 %v2540
    %3396 = vmatpush1.bf16.msra.mxu0 %v2539
    %3397 = vmatprep.subr.bf16.mxu0 %v2532
    %3398 = vmatpush1.bf16.msra.mxu0 %v2531
    %3399 = vmatprep.subr.bf16.mxu0 %v2524
    %3400 = vmatpush1.bf16.msra.mxu0 %v2523
    %3401 = vmatprep.subr.bf16.mxu0 %v2516
    %3402 = vmatpush1.bf16.msra.mxu0 %v2515
    %3403 = vmatprep.subr.bf16.mxu0 %v2508
    %3404 = vmatpush1.bf16.msra.mxu0 %v2507
    %3405 = vmatprep.subr.bf16.mxu0 %v2628
    %3406 = vmatpush2.bf16.msra.mxu0 %v2627
    %3407 = vmatprep.subr.bf16.mxu0 %v2620
    %3408 = vmatpush2.bf16.msra.mxu0 %v2619
    %3409 = vmatprep.subr.bf16.mxu0 %v2612
    %3410 = vmatpush2.bf16.msra.mxu0 %v2611
    %3411 = vmatprep.subr.bf16.mxu0 %v2604
    %3412 = vmatpush2.bf16.msra.mxu0 %v2603
    %3413 = vmatprep.subr.bf16.mxu0 %v2596
    %3414 = vmatpush2.bf16.msra.mxu0 %v2595
    %3415 = vmatprep.subr.bf16.mxu0 %v2588
    %3416 = vmatpush2.bf16.msra.mxu0 %v2587
    %3417 = vmatprep.subr.bf16.mxu0 %v2580
    %3418 = vmatpush2.bf16.msra.mxu0 %v2579
    %3419 = vmatprep.subr.bf16.mxu0 %v2572
    %3420 = vmatpush2.bf16.msra.mxu0 %v2571
    %3421 = vmatprep.mubr.bf16.mxu0 %v1219
    %3422 = vmatmul.mubr.bf16.gmra.mxu0 %v1218
    %v3423 = vpop.f32.mrf.mxu0
    %v3424 = vadd.f32 0.0, %v3423
    %v3425 = vpop.f32.mrf.mxu0
    %v3426 = vadd.f32 0.0, %v3425
    %v3427 = vpop.f32.mrf.mxu0
    %v3428 = vpop.f32.mrf.mxu0
    %3429 = vdwg.mxu0
    %3430 = vmatprep.subr.bf16.mxu0 %v2692
    %3431 = vmatpush1.bf16.msra.mxu0 %v2691
    %3432 = vmatprep.subr.bf16.mxu0 %v2684
    %3433 = vmatpush1.bf16.msra.mxu0 %v2683
    %3434 = vmatprep.subr.bf16.mxu0 %v2676
    %3435 = vmatpush1.bf16.msra.mxu0 %v2675
    %3436 = vmatprep.subr.bf16.mxu0 %v2668
    %3437 = vmatpush1.bf16.msra.mxu0 %v2667
    %3438 = vmatprep.subr.bf16.mxu0 %v2660
    %3439 = vmatpush1.bf16.msra.mxu0 %v2659
    %3440 = vmatprep.subr.bf16.mxu0 %v2652
    %3441 = vmatpush1.bf16.msra.mxu0 %v2651
    %3442 = vmatprep.subr.bf16.mxu0 %v2644
    %3443 = vmatpush1.bf16.msra.mxu0 %v2643
    %3444 = vmatprep.subr.bf16.mxu0 %v2636
    %3445 = vmatpush1.bf16.msra.mxu0 %v2635
    %3446 = vmatprep.subr.bf16.mxu0 %v2756
    %3447 = vmatpush2.bf16.msra.mxu0 %v2755
    %3448 = vmatprep.subr.bf16.mxu0 %v2748
    %3449 = vmatpush2.bf16.msra.mxu0 %v2747
    %3450 = vmatprep.subr.bf16.mxu0 %v2740
    %3451 = vmatpush2.bf16.msra.mxu0 %v2739
    %3452 = vmatprep.subr.bf16.mxu0 %v2732
    %3453 = vmatpush2.bf16.msra.mxu0 %v2731
    %3454 = vmatprep.subr.bf16.mxu0 %v2724
    %3455 = vmatpush2.bf16.msra.mxu0 %v2723
    %3456 = vmatprep.subr.bf16.mxu0 %v2716
    %3457 = vmatpush2.bf16.msra.mxu0 %v2715
    %3458 = vmatprep.subr.bf16.mxu0 %v2708
    %3459 = vmatpush2.bf16.msra.mxu0 %v2707
    %3460 = vmatprep.subr.bf16.mxu0 %v2700
    %3461 = vmatpush2.bf16.msra.mxu0 %v2699
    %3462 = vmatprep.mubr.bf16.mxu0 %v1221
    %3463 = vmatmul.mubr.bf16.gmra.mxu0 %v1220
    %v3464 = vpop.f32.mrf.mxu0
    %v3465 = vadd.f32 %v3424, %v3464
    %v3466 = vpop.f32.mrf.mxu0
    %v3467 = vadd.f32 %v3426, %v3466
    %v3468 = vpop.f32.mrf.mxu0
    %v3469 = vpop.f32.mrf.mxu0
    %3470 = vdwg.mxu0
    %3471 = vmatprep.subr.bf16.mxu0 %v2820
    %3472 = vmatpush1.bf16.msra.mxu0 %v2819
    %3473 = vmatprep.subr.bf16.mxu0 %v2812
    %3474 = vmatpush1.bf16.msra.mxu0 %v2811
    %3475 = vmatprep.subr.bf16.mxu0 %v2804
    %3476 = vmatpush1.bf16.msra.mxu0 %v2803
    %3477 = vmatprep.subr.bf16.mxu0 %v2796
    %3478 = vmatpush1.bf16.msra.mxu0 %v2795
    %3479 = vmatprep.subr.bf16.mxu0 %v2788
    %3480 = vmatpush1.bf16.msra.mxu0 %v2787
    %3481 = vmatprep.subr.bf16.mxu0 %v2780
    %3482 = vmatpush1.bf16.msra.mxu0 %v2779
    %3483 = vmatprep.subr.bf16.mxu0 %v2772
    %3484 = vmatpush1.bf16.msra.mxu0 %v2771
    %3485 = vmatprep.subr.bf16.mxu0 %v2764
    %3486 = vmatpush1.bf16.msra.mxu0 %v2763
    %3487 = vmatprep.subr.bf16.mxu0 0
    %3488 = vmatpush2.bf16.msra.mxu0 0
    %3489 = vmatprep.subr.bf16.mxu0 0
    %3490 = vmatpush2.bf16.msra.mxu0 0
    %3491 = vmatprep.subr.bf16.mxu0 0
    %3492 = vmatpush2.bf16.msra.mxu0 0
    %3493 = vmatprep.subr.bf16.mxu0 0
    %3494 = vmatpush2.bf16.msra.mxu0 0
    %3495 = vmatprep.subr.bf16.mxu0 0
    %3496 = vmatpush2.bf16.msra.mxu0 0
    %3497 = vmatprep.subr.bf16.mxu0 0
    %3498 = vmatpush2.bf16.msra.mxu0 0
    %3499 = vmatprep.subr.bf16.mxu0 0
    %3500 = vmatpush2.bf16.msra.mxu0 0
    %3501 = vmatprep.subr.bf16.mxu0 0
    %3502 = vmatpush2.bf16.msra.mxu0 0
    %3503 = vmatprep.mubr.bf16.mxu0 0
    %3504 = vmatmul.mubr.bf16.gmra.mxu0 %v1222
    %v3505 = vpop.f32.mrf.mxu0
    %v3506 = vadd.f32 %v3465, %v3505
    %v3507 = vpop.f32.mrf.mxu0
    %v3508 = vadd.f32 %v3467, %v3507
    %v3509 = vpop.f32.mrf.mxu0
    %v3510 = vpop.f32.mrf.mxu0
    %3511 = vdwg.mxu0
    %3512 = vmatprep.subr.bf16.mxu0 %v2566
    %3513 = vmatpush1.bf16.msra.mxu0 %v2565
    %3514 = vmatprep.subr.bf16.mxu0 %v2558
    %3515 = vmatpush1.bf16.msra.mxu0 %v2557
    %3516 = vmatprep.subr.bf16.mxu0 %v2550
    %3517 = vmatpush1.bf16.msra.mxu0 %v2549
    %3518 = vmatprep.subr.bf16.mxu0 %v2542
    %3519 = vmatpush1.bf16.msra.mxu0 %v2541
    %3520 = vmatprep.subr.bf16.mxu0 %v2534
    %3521 = vmatpush1.bf16.msra.mxu0 %v2533
    %3522 = vmatprep.subr.bf16.mxu0 %v2526
    %3523 = vmatpush1.bf16.msra.mxu0 %v2525
    %3524 = vmatprep.subr.bf16.mxu0 %v2518
    %3525 = vmatpush1.bf16.msra.mxu0 %v2517
    %3526 = vmatprep.subr.bf16.mxu0 %v2510
    %3527 = vmatpush1.bf16.msra.mxu0 %v2509
    %3528 = vmatprep.subr.bf16.mxu0 %v2630
    %3529 = vmatpush2.bf16.msra.mxu0 %v2629
    %3530 = vmatprep.subr.bf16.mxu0 %v2622
    %3531 = vmatpush2.bf16.msra.mxu0 %v2621
    %3532 = vmatprep.subr.bf16.mxu0 %v2614
    %3533 = vmatpush2.bf16.msra.mxu0 %v2613
    %3534 = vmatprep.subr.bf16.mxu0 %v2606
    %3535 = vmatpush2.bf16.msra.mxu0 %v2605
    %3536 = vmatprep.subr.bf16.mxu0 %v2598
    %3537 = vmatpush2.bf16.msra.mxu0 %v2597
    %3538 = vmatprep.subr.bf16.mxu0 %v2590
    %3539 = vmatpush2.bf16.msra.mxu0 %v2589
    %3540 = vmatprep.subr.bf16.mxu0 %v2582
    %3541 = vmatpush2.bf16.msra.mxu0 %v2581
    %3542 = vmatprep.subr.bf16.mxu0 %v2574
    %3543 = vmatpush2.bf16.msra.mxu0 %v2573
    %3544 = vmatprep.mubr.bf16.mxu0 %v1219
    %3545 = vmatmul.mubr.bf16.gmra.mxu0 %v1218
    %v3546 = vpop.f32.mrf.mxu0
    %v3547 = vadd.f32 0.0, %v3546
    %v3548 = vpop.f32.mrf.mxu0
    %v3549 = vadd.f32 0.0, %v3548
    %v3550 = vpop.f32.mrf.mxu0
    %v3551 = vpop.f32.mrf.mxu0
    %3552 = vdwg.mxu0
    %3553 = vmatprep.subr.bf16.mxu0 %v2694
    %3554 = vmatpush1.bf16.msra.mxu0 %v2693
    %3555 = vmatprep.subr.bf16.mxu0 %v2686
    %3556 = vmatpush1.bf16.msra.mxu0 %v2685
    %3557 = vmatprep.subr.bf16.mxu0 %v2678
    %3558 = vmatpush1.bf16.msra.mxu0 %v2677
    %3559 = vmatprep.subr.bf16.mxu0 %v2670
    %3560 = vmatpush1.bf16.msra.mxu0 %v2669
    %3561 = vmatprep.subr.bf16.mxu0 %v2662
    %3562 = vmatpush1.bf16.msra.mxu0 %v2661
    %3563 = vmatprep.subr.bf16.mxu0 %v2654
    %3564 = vmatpush1.bf16.msra.mxu0 %v2653
    %3565 = vmatprep.subr.bf16.mxu0 %v2646
    %3566 = vmatpush1.bf16.msra.mxu0 %v2645
    %3567 = vmatprep.subr.bf16.mxu0 %v2638
    %3568 = vmatpush1.bf16.msra.mxu0 %v2637
    %3569 = vmatprep.subr.bf16.mxu0 %v2758
    %3570 = vmatpush2.bf16.msra.mxu0 %v2757
    %3571 = vmatprep.subr.bf16.mxu0 %v2750
    %3572 = vmatpush2.bf16.msra.mxu0 %v2749
    %3573 = vmatprep.subr.bf16.mxu0 %v2742
    %3574 = vmatpush2.bf16.msra.mxu0 %v2741
    %3575 = vmatprep.subr.bf16.mxu0 %v2734
    %3576 = vmatpush2.bf16.msra.mxu0 %v2733
    %3577 = vmatprep.subr.bf16.mxu0 %v2726
    %3578 = vmatpush2.bf16.msra.mxu0 %v2725
    %3579 = vmatprep.subr.bf16.mxu0 %v2718
    %3580 = vmatpush2.bf16.msra.mxu0 %v2717
    %3581 = vmatprep.subr.bf16.mxu0 %v2710
    %3582 = vmatpush2.bf16.msra.mxu0 %v2709
    %3583 = vmatprep.subr.bf16.mxu0 %v2702
    %3584 = vmatpush2.bf16.msra.mxu0 %v2701
    %3585 = vmatprep.mubr.bf16.mxu0 %v1221
    %3586 = vmatmul.mubr.bf16.gmra.mxu0 %v1220
    %v3587 = vpop.f32.mrf.mxu0
    %v3588 = vadd.f32 %v3547, %v3587
    %v3589 = vpop.f32.mrf.mxu0
    %v3590 = vadd.f32 %v3549, %v3589
    %v3591 = vpop.f32.mrf.mxu0
    %v3592 = vpop.f32.mrf.mxu0
    %3593 = vdwg.mxu0
    %3594 = vmatprep.subr.bf16.mxu0 %v2822
    %3595 = vmatpush1.bf16.msra.mxu0 %v2821
    %3596 = vmatprep.subr.bf16.mxu0 %v2814
    %3597 = vmatpush1.bf16.msra.mxu0 %v2813
    %3598 = vmatprep.subr.bf16.mxu0 %v2806
    %3599 = vmatpush1.bf16.msra.mxu0 %v2805
    %3600 = vmatprep.subr.bf16.mxu0 %v2798
    %3601 = vmatpush1.bf16.msra.mxu0 %v2797
    %3602 = vmatprep.subr.bf16.mxu0 %v2790
    %3603 = vmatpush1.bf16.msra.mxu0 %v2789
    %3604 = vmatprep.subr.bf16.mxu0 %v2782
    %3605 = vmatpush1.bf16.msra.mxu0 %v2781
    %3606 = vmatprep.subr.bf16.mxu0 %v2774
    %3607 = vmatpush1.bf16.msra.mxu0 %v2773
    %3608 = vmatprep.subr.bf16.mxu0 %v2766
    %3609 = vmatpush1.bf16.msra.mxu0 %v2765
    %3610 = vmatprep.subr.bf16.mxu0 0
    %3611 = vmatpush2.bf16.msra.mxu0 0
    %3612 = vmatprep.subr.bf16.mxu0 0
    %3613 = vmatpush2.bf16.msra.mxu0 0
    %3614 = vmatprep.subr.bf16.mxu0 0
    %3615 = vmatpush2.bf16.msra.mxu0 0
    %3616 = vmatprep.subr.bf16.mxu0 0
    %3617 = vmatpush2.bf16.msra.mxu0 0
    %3618 = vmatprep.subr.bf16.mxu0 0
    %3619 = vmatpush2.bf16.msra.mxu0 0
    %3620 = vmatprep.subr.bf16.mxu0 0
    %3621 = vmatpush2.bf16.msra.mxu0 0
    %3622 = vmatprep.subr.bf16.mxu0 0
    %3623 = vmatpush2.bf16.msra.mxu0 0
    %3624 = vmatprep.subr.bf16.mxu0 0
    %3625 = vmatpush2.bf16.msra.mxu0 0
    %3626 = vmatprep.mubr.bf16.mxu0 0
    %3627 = vmatmul.mubr.bf16.gmra.mxu0 %v1222
    %v3628 = vpop.f32.mrf.mxu0
    %v3629 = vadd.f32 %v3588, %v3628
    %v3630 = vpop.f32.mrf.mxu0
    %v3631 = vadd.f32 %v3590, %v3630
    %v3632 = vpop.f32.mrf.mxu0
    %v3633 = vpop.f32.mrf.mxu0
    %3634 = vdwg.mxu0
    %v3638 = vunpack.c.l.b16 %v127
    %v3639 = vunpack.c.h.b16 %v127
    %v3640 = vunpack.c.l.b16 %v128
    %v3641 = vunpack.c.h.b16 %v128
    %v3642 = vunpack.c.l.b16 %v129
    %v3643 = vunpack.c.h.b16 %v129
    %v3644 = vpack.c.b16 %v3638, %v3638
    %v3645 = vpack.c.b16 %v3639, %v3639
    %v3646 = vpack.c.b16 %v3640, %v3640
    %v3647 = vpack.c.b16 %v3641, %v3641
    %v3648 = vpack.c.b16 %v3642, %v3642
    %v3649 = vpack.c.b16 %v3643, %v3643
    %v4007 = vunpack.c.l.b16 %v130
    %v4008 = vunpack.c.h.b16 %v130
    %v4009 = vunpack.c.l.b16 %v131
    %v4010 = vunpack.c.h.b16 %v131
    %v4011 = vunpack.c.l.b16 %v132
    %v4012 = vunpack.c.h.b16 %v132
    %v4013 = vunpack.c.l.b16 %v133
    %v4014 = vunpack.c.h.b16 %v133
    %v4015 = vunpack.c.l.b16 %v134
    %v4016 = vunpack.c.h.b16 %v134
    %v4017 = vunpack.c.l.b16 %v135
    %v4018 = vunpack.c.h.b16 %v135
    %v4019 = vunpack.c.l.b16 %v136
    %v4020 = vunpack.c.h.b16 %v136
    %v4021 = vunpack.c.l.b16 %v137
    %v4022 = vunpack.c.h.b16 %v137
    %v4023 = vunpack.c.l.b16 %v138
    %v4024 = vunpack.c.h.b16 %v138
    %v4025 = vunpack.c.l.b16 %v139
    %v4026 = vunpack.c.h.b16 %v139
    %v4027 = vunpack.c.l.b16 %v140
    %v4028 = vunpack.c.h.b16 %v140
    %v4029 = vunpack.c.l.b16 %v141
    %v4030 = vunpack.c.h.b16 %v141
    %v4031 = vunpack.c.l.b16 %v142
    %v4032 = vunpack.c.h.b16 %v142
    %v4033 = vunpack.c.l.b16 %v143
    %v4034 = vunpack.c.h.b16 %v143
    %v4035 = vunpack.c.l.b16 %v144
    %v4036 = vunpack.c.h.b16 %v144
    %v4037 = vunpack.c.l.b16 %v145
    %v4038 = vunpack.c.h.b16 %v145
    %v4039 = vunpack.c.l.b16 %v146
    %v4040 = vunpack.c.h.b16 %v146
    %v4041 = vunpack.c.l.b16 %v147
    %v4042 = vunpack.c.h.b16 %v147
    %v4043 = vunpack.c.l.b16 %v148
    %v4044 = vunpack.c.h.b16 %v148
    %v4045 = vunpack.c.l.b16 %v149
    %v4046 = vunpack.c.h.b16 %v149
    %v4047 = vunpack.c.l.b16 %v150
    %v4048 = vunpack.c.h.b16 %v150
    %v4049 = vunpack.c.l.b16 %v151
    %v4050 = vunpack.c.h.b16 %v151
    %v4051 = vunpack.c.l.b16 %v152
    %v4052 = vunpack.c.h.b16 %v152
    %v4053 = vunpack.c.l.b16 %v153
    %v4054 = vunpack.c.h.b16 %v153
    %v4055 = vunpack.c.l.b16 %v154
    %v4056 = vunpack.c.h.b16 %v154
    %v4057 = vunpack.c.l.b16 %v155
    %v4058 = vunpack.c.h.b16 %v155
    %v4059 = vunpack.c.l.b16 %v156
    %v4060 = vunpack.c.h.b16 %v156
    %v4061 = vunpack.c.l.b16 %v157
    %v4062 = vunpack.c.h.b16 %v157
    %v4063 = vunpack.c.l.b16 %v158
    %v4064 = vunpack.c.h.b16 %v158
    %v4065 = vunpack.c.l.b16 %v159
    %v4066 = vunpack.c.h.b16 %v159
    %v4067 = vunpack.c.l.b16 %v160
    %v4068 = vunpack.c.h.b16 %v160
    %v4069 = vunpack.c.l.b16 %v161
    %v4070 = vunpack.c.h.b16 %v161
    %v4071 = vunpack.c.l.b16 %v162
    %v4072 = vunpack.c.h.b16 %v162
    %v4073 = vunpack.c.l.b16 %v163
    %v4074 = vunpack.c.h.b16 %v163
    %v4075 = vunpack.c.l.b16 %v164
    %v4076 = vunpack.c.h.b16 %v164
    %v4077 = vunpack.c.l.b16 %v165
    %v4078 = vunpack.c.h.b16 %v165
    %v4079 = vunpack.c.l.b16 %v166
    %v4080 = vunpack.c.h.b16 %v166
    %v4081 = vunpack.c.l.b16 %v167
    %v4082 = vunpack.c.h.b16 %v167
    %v4083 = vunpack.c.l.b16 %v168
    %v4084 = vunpack.c.h.b16 %v168
    %v4085 = vunpack.c.l.b16 %v169
    %v4086 = vunpack.c.h.b16 %v169
    %v4087 = vunpack.c.l.b16 %v170
    %v4088 = vunpack.c.h.b16 %v170
    %v4089 = vunpack.c.l.b16 %v171
    %v4090 = vunpack.c.h.b16 %v171
    %v4091 = vunpack.c.l.b16 %v172
    %v4092 = vunpack.c.h.b16 %v172
    %v4093 = vunpack.c.l.b16 %v173
    %v4094 = vunpack.c.h.b16 %v173
    %v4095 = vunpack.c.l.b16 %v174
    %v4096 = vunpack.c.h.b16 %v174
    %v4097 = vunpack.c.l.b16 %v175
    %v4098 = vunpack.c.h.b16 %v175
    %v4099 = vunpack.c.l.b16 %v176
    %v4100 = vunpack.c.h.b16 %v176
    %v4101 = vunpack.c.l.b16 %v177
    %v4102 = vunpack.c.h.b16 %v177
    %v4103 = vunpack.c.l.b16 %v178
    %v4104 = vunpack.c.h.b16 %v178
    %v4105 = vunpack.c.l.b16 %v179
    %v4106 = vunpack.c.h.b16 %v179
    %v4107 = vunpack.c.l.b16 %v180
    %v4108 = vunpack.c.h.b16 %v180
    %v4109 = vunpack.c.l.b16 %v181
    %v4110 = vunpack.c.h.b16 %v181
    %v4111 = vunpack.c.l.b16 %v182
    %v4112 = vunpack.c.h.b16 %v182
    %v4113 = vunpack.c.l.b16 %v183
    %v4114 = vunpack.c.h.b16 %v183
    %v4115 = vunpack.c.l.b16 %v184
    %v4116 = vunpack.c.h.b16 %v184
    %v4117 = vunpack.c.l.b16 %v185
    %v4118 = vunpack.c.h.b16 %v185
    %v4119 = vunpack.c.l.b16 %v186
    %v4120 = vunpack.c.h.b16 %v186
    %v4121 = vunpack.c.l.b16 %v187
    %v4122 = vunpack.c.h.b16 %v187
    %v4123 = vunpack.c.l.b16 %v188
    %v4124 = vunpack.c.h.b16 %v188
    %v4125 = vunpack.c.l.b16 %v189
    %v4126 = vunpack.c.h.b16 %v189
    %v4127 = vunpack.c.l.b16 %v190
    %v4128 = vunpack.c.h.b16 %v190
    %v4129 = vunpack.c.l.b16 %v191
    %v4130 = vunpack.c.h.b16 %v191
    %v4131 = vunpack.c.l.b16 %v192
    %v4132 = vunpack.c.h.b16 %v192
    %v4133 = vunpack.c.l.b16 %v193
    %v4134 = vunpack.c.h.b16 %v193
    %v4135 = vunpack.c.l.b16 %v194
    %v4136 = vunpack.c.h.b16 %v194
    %v4137 = vunpack.c.l.b16 %v195
    %v4138 = vunpack.c.h.b16 %v195
    %v4139 = vunpack.c.l.b16 %v196
    %v4140 = vunpack.c.h.b16 %v196
    %v4141 = vunpack.c.l.b16 %v197
    %v4142 = vunpack.c.h.b16 %v197
    %v4143 = vunpack.c.l.b16 %v198
    %v4144 = vunpack.c.h.b16 %v198
    %v4145 = vunpack.c.l.b16 %v199
    %v4146 = vunpack.c.h.b16 %v199
    %v4147 = vunpack.c.l.b16 %v200
    %v4148 = vunpack.c.h.b16 %v200
    %v4149 = vunpack.c.l.b16 %v201
    %v4150 = vunpack.c.h.b16 %v201
    %v4151 = vunpack.c.l.b16 %v202
    %v4152 = vunpack.c.h.b16 %v202
    %v4153 = vunpack.c.l.b16 %v203
    %v4154 = vunpack.c.h.b16 %v203
    %v4155 = vunpack.c.l.b16 %v204
    %v4156 = vunpack.c.h.b16 %v204
    %v4157 = vunpack.c.l.b16 %v205
    %v4158 = vunpack.c.h.b16 %v205
    %v4159 = vunpack.c.l.b16 %v206
    %v4160 = vunpack.c.h.b16 %v206
    %v4161 = vunpack.c.l.b16 %v207
    %v4162 = vunpack.c.h.b16 %v207
    %v4163 = vunpack.c.l.b16 %v208
    %v4164 = vunpack.c.h.b16 %v208
    %v4165 = vunpack.c.l.b16 %v209
    %v4166 = vunpack.c.h.b16 %v209
    %v4167 = vunpack.c.l.b16 %v210
    %v4168 = vunpack.c.h.b16 %v210
    %v4169 = vunpack.c.l.b16 %v211
    %v4170 = vunpack.c.h.b16 %v211
    %v4171 = vunpack.c.l.b16 %v212
    %v4172 = vunpack.c.h.b16 %v212
    %v4173 = vunpack.c.l.b16 %v213
    %v4174 = vunpack.c.h.b16 %v213
    %v4175 = vunpack.c.l.b16 %v214
    %v4176 = vunpack.c.h.b16 %v214
    %v4177 = vunpack.c.l.b16 %v215
    %v4178 = vunpack.c.h.b16 %v215
    %v4179 = vunpack.c.l.b16 %v216
    %v4180 = vunpack.c.h.b16 %v216
    %v4181 = vunpack.c.l.b16 %v217
    %v4182 = vunpack.c.h.b16 %v217
    %v4183 = vunpack.c.l.b16 %v218
    %v4184 = vunpack.c.h.b16 %v218
    %v4185 = vunpack.c.l.b16 %v219
    %v4186 = vunpack.c.h.b16 %v219
    %v4187 = vunpack.c.l.b16 %v220
    %v4188 = vunpack.c.h.b16 %v220
    %v4189 = vunpack.c.l.b16 %v221
    %v4190 = vunpack.c.h.b16 %v221
    %v4191 = vunpack.c.l.b16 %v222
    %v4192 = vunpack.c.h.b16 %v222
    %v4193 = vunpack.c.l.b16 %v223
    %v4194 = vunpack.c.h.b16 %v223
    %v4195 = vunpack.c.l.b16 %v224
    %v4196 = vunpack.c.h.b16 %v224
    %v4197 = vunpack.c.l.b16 %v225
    %v4198 = vunpack.c.h.b16 %v225
    %v4199 = vunpack.c.l.b16 %v226
    %v4200 = vunpack.c.h.b16 %v226
    %v4201 = vunpack.c.l.b16 %v227
    %v4202 = vunpack.c.h.b16 %v227
    %v4203 = vunpack.c.l.b16 %v228
    %v4204 = vunpack.c.h.b16 %v228
    %v4205 = vunpack.c.l.b16 %v229
    %v4206 = vunpack.c.h.b16 %v229
    %v4207 = vunpack.c.l.b16 %v230
    %v4208 = vunpack.c.h.b16 %v230
    %v4209 = vunpack.c.l.b16 %v231
    %v4210 = vunpack.c.h.b16 %v231
    %v4211 = vunpack.c.l.b16 %v232
    %v4212 = vunpack.c.h.b16 %v232
    %v4213 = vunpack.c.l.b16 %v233
    %v4214 = vunpack.c.h.b16 %v233
    %v4215 = vunpack.c.l.b16 %v234
    %v4216 = vunpack.c.h.b16 %v234
    %v4217 = vunpack.c.l.b16 %v235
    %v4218 = vunpack.c.h.b16 %v235
    %v4219 = vunpack.c.l.b16 %v236
    %v4220 = vunpack.c.h.b16 %v236
    %v4221 = vunpack.c.l.b16 %v237
    %v4222 = vunpack.c.h.b16 %v237
    %v4223 = vunpack.c.l.b16 %v238
    %v4224 = vunpack.c.h.b16 %v238
    %v4225 = vunpack.c.l.b16 %v239
    %v4226 = vunpack.c.h.b16 %v239
    %v4227 = vunpack.c.l.b16 %v240
    %v4228 = vunpack.c.h.b16 %v240
    %v4229 = vunpack.c.l.b16 %v241
    %v4230 = vunpack.c.h.b16 %v241
    %v4231 = vunpack.c.l.b16 %v242
    %v4232 = vunpack.c.h.b16 %v242
    %v4233 = vunpack.c.l.b16 %v243
    %v4234 = vunpack.c.h.b16 %v243
    %v4235 = vunpack.c.l.b16 %v244
    %v4236 = vunpack.c.h.b16 %v244
    %v4237 = vunpack.c.l.b16 %v245
    %v4238 = vunpack.c.h.b16 %v245
    %v4239 = vunpack.c.l.b16 %v246
    %v4240 = vunpack.c.h.b16 %v246
    %v4241 = vunpack.c.l.b16 %v247
    %v4242 = vunpack.c.h.b16 %v247
    %v4243 = vunpack.c.l.b16 %v248
    %v4244 = vunpack.c.h.b16 %v248
    %v4245 = vunpack.c.l.b16 %v249
    %v4246 = vunpack.c.h.b16 %v249
    %v4247 = vunpack.c.l.b16 %v250
    %v4248 = vunpack.c.h.b16 %v250
    %v4249 = vunpack.c.l.b16 %v251
    %v4250 = vunpack.c.h.b16 %v251
    %v4251 = vunpack.c.l.b16 %v252
    %v4252 = vunpack.c.h.b16 %v252
    %v4253 = vunpack.c.l.b16 %v253
    %v4254 = vunpack.c.h.b16 %v253
    %v4255 = vunpack.c.l.b16 %v254
    %v4256 = vunpack.c.h.b16 %v254
    %v4257 = vunpack.c.l.b16 %v255
    %v4258 = vunpack.c.h.b16 %v255
    %v4259 = vunpack.c.l.b16 %v256
    %v4260 = vunpack.c.h.b16 %v256
    %v4261 = vunpack.c.l.b16 %v257
    %v4262 = vunpack.c.h.b16 %v257
    %v4263 = vunpack.c.l.b16 %v258
    %v4264 = vunpack.c.h.b16 %v258
    %v4265 = vunpack.c.l.b16 %v259
    %v4266 = vunpack.c.h.b16 %v259
    %v4267 = vunpack.c.l.b16 %v260
    %v4268 = vunpack.c.h.b16 %v260
    %v4269 = vunpack.c.l.b16 %v261
    %v4270 = vunpack.c.h.b16 %v261
    %v4271 = vunpack.c.l.b16 %v262
    %v4272 = vunpack.c.h.b16 %v262
    %v4273 = vunpack.c.l.b16 %v263
    %v4274 = vunpack.c.h.b16 %v263
    %v4275 = vunpack.c.l.b16 %v264
    %v4276 = vunpack.c.h.b16 %v264
    %v4277 = vunpack.c.l.b16 %v265
    %v4278 = vunpack.c.h.b16 %v265
    %v4279 = vunpack.c.l.b16 %v266
    %v4280 = vunpack.c.h.b16 %v266
    %v4281 = vunpack.c.l.b16 %v267
    %v4282 = vunpack.c.h.b16 %v267
    %v4283 = vunpack.c.l.b16 %v268
    %v4284 = vunpack.c.h.b16 %v268
    %v4285 = vunpack.c.l.b16 %v269
    %v4286 = vunpack.c.h.b16 %v269
    %v4287 = vunpack.c.l.b16 %v270
    %v4288 = vunpack.c.h.b16 %v270
    %v4289 = vunpack.c.l.b16 %v271
    %v4290 = vunpack.c.h.b16 %v271
    %v4291 = vunpack.c.l.b16 %v272
    %v4292 = vunpack.c.h.b16 %v272
    %v4293 = vunpack.c.l.b16 %v273
    %v4294 = vunpack.c.h.b16 %v273
    %v4295 = vunpack.c.l.b16 %v274
    %v4296 = vunpack.c.h.b16 %v274
    %v4297 = vunpack.c.l.b16 %v275
    %v4298 = vunpack.c.h.b16 %v275
    %v4299 = vunpack.c.l.b16 %v276
    %v4300 = vunpack.c.h.b16 %v276
    %v4301 = vunpack.c.l.b16 %v277
    %v4302 = vunpack.c.h.b16 %v277
    %v4303 = vunpack.c.l.b16 %v278
    %v4304 = vunpack.c.h.b16 %v278
    %v4305 = vunpack.c.l.b16 %v279
    %v4306 = vunpack.c.h.b16 %v279
    %v4307 = vunpack.c.l.b16 %v280
    %v4308 = vunpack.c.h.b16 %v280
    %v4309 = vunpack.c.l.b16 %v281
    %v4310 = vunpack.c.h.b16 %v281
    %v4311 = vunpack.c.l.b16 %v282
    %v4312 = vunpack.c.h.b16 %v282
    %v4313 = vunpack.c.l.b16 %v283
    %v4314 = vunpack.c.h.b16 %v283
    %v4315 = vunpack.c.l.b16 %v284
    %v4316 = vunpack.c.h.b16 %v284
    %v4317 = vunpack.c.l.b16 %v285
    %v4318 = vunpack.c.h.b16 %v285
    %v4319 = vunpack.c.l.b16 %v286
    %v4320 = vunpack.c.h.b16 %v286
    %v4321 = vunpack.c.l.b16 %v287
    %v4322 = vunpack.c.h.b16 %v287
    %v4323 = vunpack.c.l.b16 %v288
    %v4324 = vunpack.c.h.b16 %v288
    %v4325 = vunpack.c.l.b16 %v289
    %v4326 = vunpack.c.h.b16 %v289
    %v4327 = vunpack.c.l.b16 %v290
    %v4328 = vunpack.c.h.b16 %v290
    %v4329 = vunpack.c.l.b16 %v291
    %v4330 = vunpack.c.h.b16 %v291
    %v4331 = vunpack.c.l.b16 %v292
    %v4332 = vunpack.c.h.b16 %v292
    %v4333 = vunpack.c.l.b16 %v293
    %v4334 = vunpack.c.h.b16 %v293
    %v4335 = vunpack.c.l.b16 %v294
    %v4336 = vunpack.c.h.b16 %v294
    %v4337 = vunpack.c.l.b16 %v295
    %v4338 = vunpack.c.h.b16 %v295
    %v4339 = vunpack.c.l.b16 %v296
    %v4340 = vunpack.c.h.b16 %v296
    %v4341 = vunpack.c.l.b16 %v297
    %v4342 = vunpack.c.h.b16 %v297
    %v4343 = vunpack.c.l.b16 %v298
    %v4344 = vunpack.c.h.b16 %v298
    %v4345 = vunpack.c.l.b16 %v299
    %v4346 = vunpack.c.h.b16 %v299
    %v4347 = vunpack.c.l.b16 %v300
    %v4348 = vunpack.c.h.b16 %v300
    %v4349 = vunpack.c.l.b16 %v301
    %v4350 = vunpack.c.h.b16 %v301
    %v4351 = vunpack.c.l.b16 %v302
    %v4352 = vunpack.c.h.b16 %v302
    %v4353 = vunpack.c.l.b16 %v303
    %v4354 = vunpack.c.h.b16 %v303
    %v4355 = vunpack.c.l.b16 %v304
    %v4356 = vunpack.c.h.b16 %v304
    %v4357 = vunpack.c.l.b16 %v305
    %v4358 = vunpack.c.h.b16 %v305
    %v4359 = vunpack.c.l.b16 %v306
    %v4360 = vunpack.c.h.b16 %v306
    %v4361 = vunpack.c.l.b16 %v307
    %v4362 = vunpack.c.h.b16 %v307
    %v4363 = vunpack.c.l.b16 %v308
    %v4364 = vunpack.c.h.b16 %v308
    %v4365 = vunpack.c.l.b16 %v309
    %v4366 = vunpack.c.h.b16 %v309
    %v4367 = vunpack.c.l.b16 %v310
    %v4368 = vunpack.c.h.b16 %v310
    %v4369 = vunpack.c.l.b16 %v311
    %v4370 = vunpack.c.h.b16 %v311
    %v4371 = vunpack.c.l.b16 %v312
    %v4372 = vunpack.c.h.b16 %v312
    %v4373 = vunpack.c.l.b16 %v313
    %v4374 = vunpack.c.h.b16 %v313
    %v4375 = vunpack.c.l.b16 %v314
    %v4376 = vunpack.c.h.b16 %v314
    %v4377 = vunpack.c.l.b16 %v315
    %v4378 = vunpack.c.h.b16 %v315
    %v4379 = vunpack.c.l.b16 %v316
    %v4380 = vunpack.c.h.b16 %v316
    %v4381 = vunpack.c.l.b16 %v317
    %v4382 = vunpack.c.h.b16 %v317
    %v4383 = vunpack.c.l.b16 %v318
    %v4384 = vunpack.c.h.b16 %v318
    %v4385 = vunpack.c.l.b16 %v319
    %v4386 = vunpack.c.h.b16 %v319
    %v4387 = vunpack.c.l.b16 %v320
    %v4388 = vunpack.c.h.b16 %v320
    %v4389 = vunpack.c.l.b16 %v321
    %v4390 = vunpack.c.h.b16 %v321
    %v4391 = vunpack.c.l.b16 %v322
    %v4392 = vunpack.c.h.b16 %v322
    %v4393 = vunpack.c.l.b16 %v323
    %v4394 = vunpack.c.h.b16 %v323
    %v4395 = vunpack.c.l.b16 %v324
    %v4396 = vunpack.c.h.b16 %v324
    %v4397 = vunpack.c.l.b16 %v325
    %v4398 = vunpack.c.h.b16 %v325
    %v4399 = vunpack.c.l.b16 %v326
    %v4400 = vunpack.c.h.b16 %v326
    %v4401 = vunpack.c.l.b16 %v327
    %v4402 = vunpack.c.h.b16 %v327
    %v4403 = vunpack.c.l.b16 %v328
    %v4404 = vunpack.c.h.b16 %v328
    %v4405 = vunpack.c.l.b16 %v329
    %v4406 = vunpack.c.h.b16 %v329
    %v4407 = vunpack.c.l.b16 %v330
    %v4408 = vunpack.c.h.b16 %v330
    %v4409 = vunpack.c.l.b16 %v331
    %v4410 = vunpack.c.h.b16 %v331
    %v4411 = vunpack.c.l.b16 %v332
    %v4412 = vunpack.c.h.b16 %v332
    %v4413 = vunpack.c.l.b16 %v333
    %v4414 = vunpack.c.h.b16 %v333
    %v4415 = vunpack.c.l.b16 %v334
    %v4416 = vunpack.c.h.b16 %v334
    %v4417 = vunpack.c.l.b16 %v335
    %v4418 = vunpack.c.h.b16 %v335
    %v4419 = vunpack.c.l.b16 %v336
    %v4420 = vunpack.c.h.b16 %v336
    %v4421 = vunpack.c.l.b16 %v337
    %v4422 = vunpack.c.h.b16 %v337
    %v4423 = vunpack.c.l.b16 %v338
    %v4424 = vunpack.c.h.b16 %v338
    %v4425 = vunpack.c.l.b16 %v339
    %v4426 = vunpack.c.h.b16 %v339
    %v4427 = vunpack.c.l.b16 %v340
    %v4428 = vunpack.c.h.b16 %v340
    %v4429 = vunpack.c.l.b16 %v341
    %v4430 = vunpack.c.h.b16 %v341
    %v4431 = vunpack.c.l.b16 %v342
    %v4432 = vunpack.c.h.b16 %v342
    %v4433 = vunpack.c.l.b16 %v343
    %v4434 = vunpack.c.h.b16 %v343
    %v4435 = vunpack.c.l.b16 %v344
    %v4436 = vunpack.c.h.b16 %v344
    %v4437 = vunpack.c.l.b16 %v345
    %v4438 = vunpack.c.h.b16 %v345
    %v4439 = vunpack.c.l.b16 %v346
    %v4440 = vunpack.c.h.b16 %v346
    %v4441 = vunpack.c.l.b16 %v347
    %v4442 = vunpack.c.h.b16 %v347
    %v4443 = vunpack.c.l.b16 %v348
    %v4444 = vunpack.c.h.b16 %v348
    %v4445 = vunpack.c.l.b16 %v349
    %v4446 = vunpack.c.h.b16 %v349
    %v4447 = vunpack.c.l.b16 %v350
    %v4448 = vunpack.c.h.b16 %v350
    %v4449 = vunpack.c.l.b16 %v351
    %v4450 = vunpack.c.h.b16 %v351
    %v4451 = vunpack.c.l.b16 %v352
    %v4452 = vunpack.c.h.b16 %v352
    %v4453 = vunpack.c.l.b16 %v353
    %v4454 = vunpack.c.h.b16 %v353
    %v4455 = vunpack.c.l.b16 %v354
    %v4456 = vunpack.c.h.b16 %v354
    %v4457 = vunpack.c.l.b16 %v355
    %v4458 = vunpack.c.h.b16 %v355
    %v4459 = vunpack.c.l.b16 %v356
    %v4460 = vunpack.c.h.b16 %v356
    %v4461 = vunpack.c.l.b16 %v357
    %v4462 = vunpack.c.h.b16 %v357
    %v4463 = vunpack.c.l.b16 %v358
    %v4464 = vunpack.c.h.b16 %v358
    %v4465 = vunpack.c.l.b16 %v359
    %v4466 = vunpack.c.h.b16 %v359
    %v4467 = vunpack.c.l.b16 %v360
    %v4468 = vunpack.c.h.b16 %v360
    %v4469 = vunpack.c.l.b16 %v361
    %v4470 = vunpack.c.h.b16 %v361
    %v4471 = vunpack.c.l.b16 %v362
    %v4472 = vunpack.c.h.b16 %v362
    %v4473 = vunpack.c.l.b16 %v363
    %v4474 = vunpack.c.h.b16 %v363
    %v4475 = vunpack.c.l.b16 %v364
    %v4476 = vunpack.c.h.b16 %v364
    %v4477 = vunpack.c.l.b16 %v365
    %v4478 = vunpack.c.h.b16 %v365
    %v4479 = vunpack.c.l.b16 %v366
    %v4480 = vunpack.c.h.b16 %v366
    %v4481 = vunpack.c.l.b16 %v367
    %v4482 = vunpack.c.h.b16 %v367
    %v4483 = vunpack.c.l.b16 %v368
    %v4484 = vunpack.c.h.b16 %v368
    %v4485 = vunpack.c.l.b16 %v369
    %v4486 = vunpack.c.h.b16 %v369
    %v4487 = vunpack.c.l.b16 %v370
    %v4488 = vunpack.c.h.b16 %v370
    %v4489 = vunpack.c.l.b16 %v371
    %v4490 = vunpack.c.h.b16 %v371
    %v4491 = vunpack.c.l.b16 %v372
    %v4492 = vunpack.c.h.b16 %v372
    %v4493 = vunpack.c.l.b16 %v373
    %v4494 = vunpack.c.h.b16 %v373
    %v4495 = vunpack.c.l.b16 %v374
    %v4496 = vunpack.c.h.b16 %v374
    %v4497 = vunpack.c.l.b16 %v375
    %v4498 = vunpack.c.h.b16 %v375
    %v4499 = vunpack.c.l.b16 %v376
    %v4500 = vunpack.c.h.b16 %v376
    %v4501 = vunpack.c.l.b16 %v377
    %v4502 = vunpack.c.h.b16 %v377
    %v4503 = vunpack.c.l.b16 %v378
    %v4504 = vunpack.c.h.b16 %v378
    %v4505 = vunpack.c.l.b16 %v379
    %v4506 = vunpack.c.h.b16 %v379
    %v4507 = vunpack.c.l.b16 %v380
    %v4508 = vunpack.c.h.b16 %v380
    %v4509 = vunpack.c.l.b16 %v381
    %v4510 = vunpack.c.h.b16 %v381
    %v4511 = vunpack.c.l.b16 %v382
    %v4512 = vunpack.c.h.b16 %v382
    %v4513 = vunpack.c.l.b16 %v383
    %v4514 = vunpack.c.h.b16 %v383
    %v4515 = vunpack.c.l.b16 %v384
    %v4516 = vunpack.c.h.b16 %v384
    %v4517 = vunpack.c.l.b16 %v385
    %v4518 = vunpack.c.h.b16 %v385
    %v4519 = vunpack.c.l.b16 %v386
    %v4520 = vunpack.c.h.b16 %v386
    %v4521 = vunpack.c.l.b16 %v387
    %v4522 = vunpack.c.h.b16 %v387
    %v4523 = vunpack.c.l.b16 %v388
    %v4524 = vunpack.c.h.b16 %v388
    %v4525 = vunpack.c.l.b16 %v389
    %v4526 = vunpack.c.h.b16 %v389
    %v4527 = vunpack.c.l.b16 %v390
    %v4528 = vunpack.c.h.b16 %v390
    %v4529 = vunpack.c.l.b16 %v391
    %v4530 = vunpack.c.h.b16 %v391
    %v4531 = vunpack.c.l.b16 %v392
    %v4532 = vunpack.c.h.b16 %v392
    %v4533 = vunpack.c.l.b16 %v393
    %v4534 = vunpack.c.h.b16 %v393
    %v4535 = vunpack.c.l.b16 %v394
    %v4536 = vunpack.c.h.b16 %v394
    %v4537 = vunpack.c.l.b16 %v395
    %v4538 = vunpack.c.h.b16 %v395
    %v4539 = vunpack.c.l.b16 %v396
    %v4540 = vunpack.c.h.b16 %v396
    %v4541 = vunpack.c.l.b16 %v397
    %v4542 = vunpack.c.h.b16 %v397
    %v4543 = vunpack.c.l.b16 %v398
    %v4544 = vunpack.c.h.b16 %v398
    %v4545 = vunpack.c.l.b16 %v399
    %v4546 = vunpack.c.h.b16 %v399
    %v4547 = vunpack.c.l.b16 %v400
    %v4548 = vunpack.c.h.b16 %v400
    %v4549 = vunpack.c.l.b16 %v401
    %v4550 = vunpack.c.h.b16 %v401
    %v4551 = vunpack.c.l.b16 %v402
    %v4552 = vunpack.c.h.b16 %v402
    %v4553 = vunpack.c.l.b16 %v403
    %v4554 = vunpack.c.h.b16 %v403
    %v4555 = vunpack.c.l.b16 %v404
    %v4556 = vunpack.c.h.b16 %v404
    %v4557 = vunpack.c.l.b16 %v405
    %v4558 = vunpack.c.h.b16 %v405
    %v4559 = vunpack.c.l.b16 %v406
    %v4560 = vunpack.c.h.b16 %v406
    %v4561 = vunpack.c.l.b16 %v407
    %v4562 = vunpack.c.h.b16 %v407
    %v4563 = vunpack.c.l.b16 %v408
    %v4564 = vunpack.c.h.b16 %v408
    %v4565 = vunpack.c.l.b16 %v409
    %v4566 = vunpack.c.h.b16 %v409
    %v4567 = vunpack.c.l.b16 %v410
    %v4568 = vunpack.c.h.b16 %v410
    %v4569 = vunpack.c.l.b16 %v411
    %v4570 = vunpack.c.h.b16 %v411
    %v4571 = vunpack.c.l.b16 %v412
    %v4572 = vunpack.c.h.b16 %v412
    %v4573 = vunpack.c.l.b16 %v413
    %v4574 = vunpack.c.h.b16 %v413
    %v4575 = vunpack.c.l.b16 %v414
    %v4576 = vunpack.c.h.b16 %v414
    %v4577 = vunpack.c.l.b16 %v415
    %v4578 = vunpack.c.h.b16 %v415
    %v4579 = vunpack.c.l.b16 %v416
    %v4580 = vunpack.c.h.b16 %v416
    %v4581 = vunpack.c.l.b16 %v417
    %v4582 = vunpack.c.h.b16 %v417
    %v4583 = vunpack.c.l.b16 %v418
    %v4584 = vunpack.c.h.b16 %v418
    %v4585 = vunpack.c.l.b16 %v419
    %v4586 = vunpack.c.h.b16 %v419
    %v4587 = vunpack.c.l.b16 %v420
    %v4588 = vunpack.c.h.b16 %v420
    %v4589 = vunpack.c.l.b16 %v421
    %v4590 = vunpack.c.h.b16 %v421
    %v4591 = vunpack.c.l.b16 %v422
    %v4592 = vunpack.c.h.b16 %v422
    %v4593 = vunpack.c.l.b16 %v423
    %v4594 = vunpack.c.h.b16 %v423
    %v4595 = vunpack.c.l.b16 %v424
    %v4596 = vunpack.c.h.b16 %v424
    %v4597 = vunpack.c.l.b16 %v425
    %v4598 = vunpack.c.h.b16 %v425
    %v4599 = vunpack.c.l.b16 %v426
    %v4600 = vunpack.c.h.b16 %v426
    %v4601 = vunpack.c.l.b16 %v427
    %v4602 = vunpack.c.h.b16 %v427
    %v4603 = vunpack.c.l.b16 %v428
    %v4604 = vunpack.c.h.b16 %v428
    %v4605 = vunpack.c.l.b16 %v429
    %v4606 = vunpack.c.h.b16 %v429
    %v4607 = vunpack.c.l.b16 %v430
    %v4608 = vunpack.c.h.b16 %v430
    %v4609 = vunpack.c.l.b16 %v431
    %v4610 = vunpack.c.h.b16 %v431
    %v4611 = vunpack.c.l.b16 %v432
    %v4612 = vunpack.c.h.b16 %v432
    %v4613 = vunpack.c.l.b16 %v433
    %v4614 = vunpack.c.h.b16 %v433
    %v4615 = vunpack.c.l.b16 %v434
    %v4616 = vunpack.c.h.b16 %v434
    %v4617 = vunpack.c.l.b16 %v435
    %v4618 = vunpack.c.h.b16 %v435
    %v4619 = vunpack.c.l.b16 %v436
    %v4620 = vunpack.c.h.b16 %v436
    %v4621 = vunpack.c.l.b16 %v437
    %v4622 = vunpack.c.h.b16 %v437
    %v4623 = vunpack.c.l.b16 %v438
    %v4624 = vunpack.c.h.b16 %v438
    %v4625 = vunpack.c.l.b16 %v439
    %v4626 = vunpack.c.h.b16 %v439
    %v4627 = vunpack.c.l.b16 %v440
    %v4628 = vunpack.c.h.b16 %v440
    %v4629 = vunpack.c.l.b16 %v441
    %v4630 = vunpack.c.h.b16 %v441
    %v4631 = vunpack.c.l.b16 %v442
    %v4632 = vunpack.c.h.b16 %v442
    %v4633 = vunpack.c.l.b16 %v443
    %v4634 = vunpack.c.h.b16 %v443
    %v4635 = vunpack.c.l.b16 %v444
    %v4636 = vunpack.c.h.b16 %v444
    %v4637 = vunpack.c.l.b16 %v445
    %v4638 = vunpack.c.h.b16 %v445
    %v4639 = vunpack.c.l.b16 %v446
    %v4640 = vunpack.c.h.b16 %v446
    %v4641 = vunpack.c.l.b16 %v447
    %v4642 = vunpack.c.h.b16 %v447
    %v4643 = vunpack.c.l.b16 %v448
    %v4644 = vunpack.c.h.b16 %v448
    %v4645 = vunpack.c.l.b16 %v449
    %v4646 = vunpack.c.h.b16 %v449
    %v4647 = vunpack.c.l.b16 %v450
    %v4648 = vunpack.c.h.b16 %v450
    %v4649 = vunpack.c.l.b16 %v451
    %v4650 = vunpack.c.h.b16 %v451
    %v4651 = vunpack.c.l.b16 %v452
    %v4652 = vunpack.c.h.b16 %v452
    %v4653 = vunpack.c.l.b16 %v453
    %v4654 = vunpack.c.h.b16 %v453
    %v4655 = vunpack.c.l.b16 %v454
    %v4656 = vunpack.c.h.b16 %v454
    %v4657 = vunpack.c.l.b16 %v455
    %v4658 = vunpack.c.h.b16 %v455
    %v4659 = vunpack.c.l.b16 %v456
    %v4660 = vunpack.c.h.b16 %v456
    %v4661 = vunpack.c.l.b16 %v457
    %v4662 = vunpack.c.h.b16 %v457
    %v4663 = vunpack.c.l.b16 %v458
    %v4664 = vunpack.c.h.b16 %v458
    %v4665 = vunpack.c.l.b16 %v459
    %v4666 = vunpack.c.h.b16 %v459
    %v4667 = vunpack.c.l.b16 %v460
    %v4668 = vunpack.c.h.b16 %v460
    %v4669 = vunpack.c.l.b16 %v461
    %v4670 = vunpack.c.h.b16 %v461
    %v4671 = vunpack.c.l.b16 %v462
    %v4672 = vunpack.c.h.b16 %v462
    %v4673 = vunpack.c.l.b16 %v463
    %v4674 = vunpack.c.h.b16 %v463
    %v4675 = vunpack.c.l.b16 %v464
    %v4676 = vunpack.c.h.b16 %v464
    %v4677 = vunpack.c.l.b16 %v465
    %v4678 = vunpack.c.h.b16 %v465
    %v4679 = vunpack.c.l.b16 %v466
    %v4680 = vunpack.c.h.b16 %v466
    %v4681 = vunpack.c.l.b16 %v467
    %v4682 = vunpack.c.h.b16 %v467
    %v4683 = vunpack.c.l.b16 %v468
    %v4684 = vunpack.c.h.b16 %v468
    %v4685 = vunpack.c.l.b16 %v469
    %v4686 = vunpack.c.h.b16 %v469
    %v4687 = vunpack.c.l.b16 %v470
    %v4688 = vunpack.c.h.b16 %v470
    %v4689 = vunpack.c.l.b16 %v471
    %v4690 = vunpack.c.h.b16 %v471
    %v4691 = vunpack.c.l.b16 %v472
    %v4692 = vunpack.c.h.b16 %v472
    %v4693 = vunpack.c.l.b16 %v473
    %v4694 = vunpack.c.h.b16 %v473
    %v4695 = vunpack.c.l.b16 %v474
    %v4696 = vunpack.c.h.b16 %v474
    %v4697 = vunpack.c.l.b16 %v475
    %v4698 = vunpack.c.h.b16 %v475
    %v4699 = vunpack.c.l.b16 %v476
    %v4700 = vunpack.c.h.b16 %v476
    %v4701 = vunpack.c.l.b16 %v477
    %v4702 = vunpack.c.h.b16 %v477
    %v4703 = vunpack.c.l.b16 %v478
    %v4704 = vunpack.c.h.b16 %v478
    %v4705 = vunpack.c.l.b16 %v479
    %v4706 = vunpack.c.h.b16 %v479
    %v4707 = vunpack.c.l.b16 %v480
    %v4708 = vunpack.c.h.b16 %v480
    %v4709 = vunpack.c.l.b16 %v481
    %v4710 = vunpack.c.h.b16 %v481
    %v4711 = vpack.c.b16 %v4015, %v4007
    %v4712 = vpack.c.b16 %v4016, %v4008
    %v4713 = vpack.c.b16 %v4017, %v4009
    %v4714 = vpack.c.b16 %v4018, %v4010
    %v4715 = vpack.c.b16 %v4019, %v4011
    %v4716 = vpack.c.b16 %v4020, %v4012
    %v4717 = vpack.c.b16 %v4021, %v4013
    %v4718 = vpack.c.b16 %v4022, %v4014
    %v4719 = vpack.c.b16 %v4031, %v4023
    %v4720 = vpack.c.b16 %v4032, %v4024
    %v4721 = vpack.c.b16 %v4033, %v4025
    %v4722 = vpack.c.b16 %v4034, %v4026
    %v4723 = vpack.c.b16 %v4035, %v4027
    %v4724 = vpack.c.b16 %v4036, %v4028
    %v4725 = vpack.c.b16 %v4037, %v4029
    %v4726 = vpack.c.b16 %v4038, %v4030
    %v4727 = vpack.c.b16 %v4047, %v4039
    %v4728 = vpack.c.b16 %v4048, %v4040
    %v4729 = vpack.c.b16 %v4049, %v4041
    %v4730 = vpack.c.b16 %v4050, %v4042
    %v4731 = vpack.c.b16 %v4051, %v4043
    %v4732 = vpack.c.b16 %v4052, %v4044
    %v4733 = vpack.c.b16 %v4053, %v4045
    %v4734 = vpack.c.b16 %v4054, %v4046
    %v4735 = vpack.c.b16 %v4063, %v4055
    %v4736 = vpack.c.b16 %v4064, %v4056
    %v4737 = vpack.c.b16 %v4065, %v4057
    %v4738 = vpack.c.b16 %v4066, %v4058
    %v4739 = vpack.c.b16 %v4067, %v4059
    %v4740 = vpack.c.b16 %v4068, %v4060
    %v4741 = vpack.c.b16 %v4069, %v4061
    %v4742 = vpack.c.b16 %v4070, %v4062
    %v4743 = vpack.c.b16 %v4079, %v4071
    %v4744 = vpack.c.b16 %v4080, %v4072
    %v4745 = vpack.c.b16 %v4081, %v4073
    %v4746 = vpack.c.b16 %v4082, %v4074
    %v4747 = vpack.c.b16 %v4083, %v4075
    %v4748 = vpack.c.b16 %v4084, %v4076
    %v4749 = vpack.c.b16 %v4085, %v4077
    %v4750 = vpack.c.b16 %v4086, %v4078
    %v4751 = vpack.c.b16 %v4095, %v4087
    %v4752 = vpack.c.b16 %v4096, %v4088
    %v4753 = vpack.c.b16 %v4097, %v4089
    %v4754 = vpack.c.b16 %v4098, %v4090
    %v4755 = vpack.c.b16 %v4099, %v4091
    %v4756 = vpack.c.b16 %v4100, %v4092
    %v4757 = vpack.c.b16 %v4101, %v4093
    %v4758 = vpack.c.b16 %v4102, %v4094
    %v4759 = vpack.c.b16 %v4111, %v4103
    %v4760 = vpack.c.b16 %v4112, %v4104
    %v4761 = vpack.c.b16 %v4113, %v4105
    %v4762 = vpack.c.b16 %v4114, %v4106
    %v4763 = vpack.c.b16 %v4115, %v4107
    %v4764 = vpack.c.b16 %v4116, %v4108
    %v4765 = vpack.c.b16 %v4117, %v4109
    %v4766 = vpack.c.b16 %v4118, %v4110
    %v4767 = vpack.c.b16 %v4127, %v4119
    %v4768 = vpack.c.b16 %v4128, %v4120
    %v4769 = vpack.c.b16 %v4129, %v4121
    %v4770 = vpack.c.b16 %v4130, %v4122
    %v4771 = vpack.c.b16 %v4131, %v4123
    %v4772 = vpack.c.b16 %v4132, %v4124
    %v4773 = vpack.c.b16 %v4133, %v4125
    %v4774 = vpack.c.b16 %v4134, %v4126
    %v4775 = vpack.c.b16 %v4143, %v4135
    %v4776 = vpack.c.b16 %v4144, %v4136
    %v4777 = vpack.c.b16 %v4145, %v4137
    %v4778 = vpack.c.b16 %v4146, %v4138
    %v4779 = vpack.c.b16 %v4147, %v4139
    %v4780 = vpack.c.b16 %v4148, %v4140
    %v4781 = vpack.c.b16 %v4149, %v4141
    %v4782 = vpack.c.b16 %v4150, %v4142
    %v4783 = vpack.c.b16 %v4159, %v4151
    %v4784 = vpack.c.b16 %v4160, %v4152
    %v4785 = vpack.c.b16 %v4161, %v4153
    %v4786 = vpack.c.b16 %v4162, %v4154
    %v4787 = vpack.c.b16 %v4163, %v4155
    %v4788 = vpack.c.b16 %v4164, %v4156
    %v4789 = vpack.c.b16 %v4165, %v4157
    %v4790 = vpack.c.b16 %v4166, %v4158
    %v4791 = vpack.c.b16 %v4175, %v4167
    %v4792 = vpack.c.b16 %v4176, %v4168
    %v4793 = vpack.c.b16 %v4177, %v4169
    %v4794 = vpack.c.b16 %v4178, %v4170
    %v4795 = vpack.c.b16 %v4179, %v4171
    %v4796 = vpack.c.b16 %v4180, %v4172
    %v4797 = vpack.c.b16 %v4181, %v4173
    %v4798 = vpack.c.b16 %v4182, %v4174
    %v4799 = vpack.c.b16 %v4191, %v4183
    %v4800 = vpack.c.b16 %v4192, %v4184
    %v4801 = vpack.c.b16 %v4193, %v4185
    %v4802 = vpack.c.b16 %v4194, %v4186
    %v4803 = vpack.c.b16 %v4195, %v4187
    %v4804 = vpack.c.b16 %v4196, %v4188
    %v4805 = vpack.c.b16 %v4197, %v4189
    %v4806 = vpack.c.b16 %v4198, %v4190
    %v4807 = vpack.c.b16 %v4207, %v4199
    %v4808 = vpack.c.b16 %v4208, %v4200
    %v4809 = vpack.c.b16 %v4209, %v4201
    %v4810 = vpack.c.b16 %v4210, %v4202
    %v4811 = vpack.c.b16 %v4211, %v4203
    %v4812 = vpack.c.b16 %v4212, %v4204
    %v4813 = vpack.c.b16 %v4213, %v4205
    %v4814 = vpack.c.b16 %v4214, %v4206
    %v4815 = vpack.c.b16 %v4223, %v4215
    %v4816 = vpack.c.b16 %v4224, %v4216
    %v4817 = vpack.c.b16 %v4225, %v4217
    %v4818 = vpack.c.b16 %v4226, %v4218
    %v4819 = vpack.c.b16 %v4227, %v4219
    %v4820 = vpack.c.b16 %v4228, %v4220
    %v4821 = vpack.c.b16 %v4229, %v4221
    %v4822 = vpack.c.b16 %v4230, %v4222
    %v4823 = vpack.c.b16 %v4239, %v4231
    %v4824 = vpack.c.b16 %v4240, %v4232
    %v4825 = vpack.c.b16 %v4241, %v4233
    %v4826 = vpack.c.b16 %v4242, %v4234
    %v4827 = vpack.c.b16 %v4243, %v4235
    %v4828 = vpack.c.b16 %v4244, %v4236
    %v4829 = vpack.c.b16 %v4245, %v4237
    %v4830 = vpack.c.b16 %v4246, %v4238
    %v4831 = vpack.c.b16 %v4255, %v4247
    %v4832 = vpack.c.b16 %v4256, %v4248
    %v4833 = vpack.c.b16 %v4257, %v4249
    %v4834 = vpack.c.b16 %v4258, %v4250
    %v4835 = vpack.c.b16 %v4259, %v4251
    %v4836 = vpack.c.b16 %v4260, %v4252
    %v4837 = vpack.c.b16 %v4261, %v4253
    %v4838 = vpack.c.b16 %v4262, %v4254
    %v4839 = vpack.c.b16 %v4271, %v4263
    %v4840 = vpack.c.b16 %v4272, %v4264
    %v4841 = vpack.c.b16 %v4273, %v4265
    %v4842 = vpack.c.b16 %v4274, %v4266
    %v4843 = vpack.c.b16 %v4275, %v4267
    %v4844 = vpack.c.b16 %v4276, %v4268
    %v4845 = vpack.c.b16 %v4277, %v4269
    %v4846 = vpack.c.b16 %v4278, %v4270
    %v4847 = vpack.c.b16 %v4287, %v4279
    %v4848 = vpack.c.b16 %v4288, %v4280
    %v4849 = vpack.c.b16 %v4289, %v4281
    %v4850 = vpack.c.b16 %v4290, %v4282
    %v4851 = vpack.c.b16 %v4291, %v4283
    %v4852 = vpack.c.b16 %v4292, %v4284
    %v4853 = vpack.c.b16 %v4293, %v4285
    %v4854 = vpack.c.b16 %v4294, %v4286
    %v4855 = vpack.c.b16 %v4303, %v4295
    %v4856 = vpack.c.b16 %v4304, %v4296
    %v4857 = vpack.c.b16 %v4305, %v4297
    %v4858 = vpack.c.b16 %v4306, %v4298
    %v4859 = vpack.c.b16 %v4307, %v4299
    %v4860 = vpack.c.b16 %v4308, %v4300
    %v4861 = vpack.c.b16 %v4309, %v4301
    %v4862 = vpack.c.b16 %v4310, %v4302
    %v4863 = vpack.c.b16 %v4319, %v4311
    %v4864 = vpack.c.b16 %v4320, %v4312
    %v4865 = vpack.c.b16 %v4321, %v4313
    %v4866 = vpack.c.b16 %v4322, %v4314
    %v4867 = vpack.c.b16 %v4323, %v4315
    %v4868 = vpack.c.b16 %v4324, %v4316
    %v4869 = vpack.c.b16 %v4325, %v4317
    %v4870 = vpack.c.b16 %v4326, %v4318
    %v4871 = vpack.c.b16 %v4335, %v4327
    %v4872 = vpack.c.b16 %v4336, %v4328
    %v4873 = vpack.c.b16 %v4337, %v4329
    %v4874 = vpack.c.b16 %v4338, %v4330
    %v4875 = vpack.c.b16 %v4339, %v4331
    %v4876 = vpack.c.b16 %v4340, %v4332
    %v4877 = vpack.c.b16 %v4341, %v4333
    %v4878 = vpack.c.b16 %v4342, %v4334
    %v4879 = vpack.c.b16 %v4351, %v4343
    %v4880 = vpack.c.b16 %v4352, %v4344
    %v4881 = vpack.c.b16 %v4353, %v4345
    %v4882 = vpack.c.b16 %v4354, %v4346
    %v4883 = vpack.c.b16 %v4355, %v4347
    %v4884 = vpack.c.b16 %v4356, %v4348
    %v4885 = vpack.c.b16 %v4357, %v4349
    %v4886 = vpack.c.b16 %v4358, %v4350
    %v4887 = vpack.c.b16 %v4367, %v4359
    %v4888 = vpack.c.b16 %v4368, %v4360
    %v4889 = vpack.c.b16 %v4369, %v4361
    %v4890 = vpack.c.b16 %v4370, %v4362
    %v4891 = vpack.c.b16 %v4371, %v4363
    %v4892 = vpack.c.b16 %v4372, %v4364
    %v4893 = vpack.c.b16 %v4373, %v4365
    %v4894 = vpack.c.b16 %v4374, %v4366
    %v4895 = vpack.c.b16 %v4383, %v4375
    %v4896 = vpack.c.b16 %v4384, %v4376
    %v4897 = vpack.c.b16 %v4385, %v4377
    %v4898 = vpack.c.b16 %v4386, %v4378
    %v4899 = vpack.c.b16 %v4387, %v4379
    %v4900 = vpack.c.b16 %v4388, %v4380
    %v4901 = vpack.c.b16 %v4389, %v4381
    %v4902 = vpack.c.b16 %v4390, %v4382
    %v4903 = vpack.c.b16 %v4399, %v4391
    %v4904 = vpack.c.b16 %v4400, %v4392
    %v4905 = vpack.c.b16 %v4401, %v4393
    %v4906 = vpack.c.b16 %v4402, %v4394
    %v4907 = vpack.c.b16 %v4403, %v4395
    %v4908 = vpack.c.b16 %v4404, %v4396
    %v4909 = vpack.c.b16 %v4405, %v4397
    %v4910 = vpack.c.b16 %v4406, %v4398
    %v4911 = vpack.c.b16 %v4415, %v4407
    %v4912 = vpack.c.b16 %v4416, %v4408
    %v4913 = vpack.c.b16 %v4417, %v4409
    %v4914 = vpack.c.b16 %v4418, %v4410
    %v4915 = vpack.c.b16 %v4419, %v4411
    %v4916 = vpack.c.b16 %v4420, %v4412
    %v4917 = vpack.c.b16 %v4421, %v4413
    %v4918 = vpack.c.b16 %v4422, %v4414
    %v4919 = vpack.c.b16 %v4431, %v4423
    %v4920 = vpack.c.b16 %v4432, %v4424
    %v4921 = vpack.c.b16 %v4433, %v4425
    %v4922 = vpack.c.b16 %v4434, %v4426
    %v4923 = vpack.c.b16 %v4435, %v4427
    %v4924 = vpack.c.b16 %v4436, %v4428
    %v4925 = vpack.c.b16 %v4437, %v4429
    %v4926 = vpack.c.b16 %v4438, %v4430
    %v4927 = vpack.c.b16 %v4447, %v4439
    %v4928 = vpack.c.b16 %v4448, %v4440
    %v4929 = vpack.c.b16 %v4449, %v4441
    %v4930 = vpack.c.b16 %v4450, %v4442
    %v4931 = vpack.c.b16 %v4451, %v4443
    %v4932 = vpack.c.b16 %v4452, %v4444
    %v4933 = vpack.c.b16 %v4453, %v4445
    %v4934 = vpack.c.b16 %v4454, %v4446
    %v4935 = vpack.c.b16 %v4463, %v4455
    %v4936 = vpack.c.b16 %v4464, %v4456
    %v4937 = vpack.c.b16 %v4465, %v4457
    %v4938 = vpack.c.b16 %v4466, %v4458
    %v4939 = vpack.c.b16 %v4467, %v4459
    %v4940 = vpack.c.b16 %v4468, %v4460
    %v4941 = vpack.c.b16 %v4469, %v4461
    %v4942 = vpack.c.b16 %v4470, %v4462
    %v4943 = vpack.c.b16 %v4479, %v4471
    %v4944 = vpack.c.b16 %v4480, %v4472
    %v4945 = vpack.c.b16 %v4481, %v4473
    %v4946 = vpack.c.b16 %v4482, %v4474
    %v4947 = vpack.c.b16 %v4483, %v4475
    %v4948 = vpack.c.b16 %v4484, %v4476
    %v4949 = vpack.c.b16 %v4485, %v4477
    %v4950 = vpack.c.b16 %v4486, %v4478
    %v4951 = vpack.c.b16 %v4495, %v4487
    %v4952 = vpack.c.b16 %v4496, %v4488
    %v4953 = vpack.c.b16 %v4497, %v4489
    %v4954 = vpack.c.b16 %v4498, %v4490
    %v4955 = vpack.c.b16 %v4499, %v4491
    %v4956 = vpack.c.b16 %v4500, %v4492
    %v4957 = vpack.c.b16 %v4501, %v4493
    %v4958 = vpack.c.b16 %v4502, %v4494
    %v4959 = vpack.c.b16 %v4511, %v4503
    %v4960 = vpack.c.b16 %v4512, %v4504
    %v4961 = vpack.c.b16 %v4513, %v4505
    %v4962 = vpack.c.b16 %v4514, %v4506
    %v4963 = vpack.c.b16 %v4515, %v4507
    %v4964 = vpack.c.b16 %v4516, %v4508
    %v4965 = vpack.c.b16 %v4517, %v4509
    %v4966 = vpack.c.b16 %v4518, %v4510
    %v4967 = vpack.c.b16 %v4527, %v4519
    %v4968 = vpack.c.b16 %v4528, %v4520
    %v4969 = vpack.c.b16 %v4529, %v4521
    %v4970 = vpack.c.b16 %v4530, %v4522
    %v4971 = vpack.c.b16 %v4531, %v4523
    %v4972 = vpack.c.b16 %v4532, %v4524
    %v4973 = vpack.c.b16 %v4533, %v4525
    %v4974 = vpack.c.b16 %v4534, %v4526
    %v4975 = vpack.c.b16 %v4543, %v4535
    %v4976 = vpack.c.b16 %v4544, %v4536
    %v4977 = vpack.c.b16 %v4545, %v4537
    %v4978 = vpack.c.b16 %v4546, %v4538
    %v4979 = vpack.c.b16 %v4547, %v4539
    %v4980 = vpack.c.b16 %v4548, %v4540
    %v4981 = vpack.c.b16 %v4549, %v4541
    %v4982 = vpack.c.b16 %v4550, %v4542
    %v4983 = vpack.c.b16 %v4559, %v4551
    %v4984 = vpack.c.b16 %v4560, %v4552
    %v4985 = vpack.c.b16 %v4561, %v4553
    %v4986 = vpack.c.b16 %v4562, %v4554
    %v4987 = vpack.c.b16 %v4563, %v4555
    %v4988 = vpack.c.b16 %v4564, %v4556
    %v4989 = vpack.c.b16 %v4565, %v4557
    %v4990 = vpack.c.b16 %v4566, %v4558
    %v4991 = vpack.c.b16 %v4575, %v4567
    %v4992 = vpack.c.b16 %v4576, %v4568
    %v4993 = vpack.c.b16 %v4577, %v4569
    %v4994 = vpack.c.b16 %v4578, %v4570
    %v4995 = vpack.c.b16 %v4579, %v4571
    %v4996 = vpack.c.b16 %v4580, %v4572
    %v4997 = vpack.c.b16 %v4581, %v4573
    %v4998 = vpack.c.b16 %v4582, %v4574
    %v4999 = vpack.c.b16 %v4591, %v4583
    %v5000 = vpack.c.b16 %v4592, %v4584
    %v5001 = vpack.c.b16 %v4593, %v4585
    %v5002 = vpack.c.b16 %v4594, %v4586
    %v5003 = vpack.c.b16 %v4595, %v4587
    %v5004 = vpack.c.b16 %v4596, %v4588
    %v5005 = vpack.c.b16 %v4597, %v4589
    %v5006 = vpack.c.b16 %v4598, %v4590
    %v5007 = vpack.c.b16 %v4607, %v4599
    %v5008 = vpack.c.b16 %v4608, %v4600
    %v5009 = vpack.c.b16 %v4609, %v4601
    %v5010 = vpack.c.b16 %v4610, %v4602
    %v5011 = vpack.c.b16 %v4611, %v4603
    %v5012 = vpack.c.b16 %v4612, %v4604
    %v5013 = vpack.c.b16 %v4613, %v4605
    %v5014 = vpack.c.b16 %v4614, %v4606
    %v5015 = vpack.c.b16 %v4623, %v4615
    %v5016 = vpack.c.b16 %v4624, %v4616
    %v5017 = vpack.c.b16 %v4625, %v4617
    %v5018 = vpack.c.b16 %v4626, %v4618
    %v5019 = vpack.c.b16 %v4627, %v4619
    %v5020 = vpack.c.b16 %v4628, %v4620
    %v5021 = vpack.c.b16 %v4629, %v4621
    %v5022 = vpack.c.b16 %v4630, %v4622
    %v5023 = vpack.c.b16 %v4639, %v4631
    %v5024 = vpack.c.b16 %v4640, %v4632
    %v5025 = vpack.c.b16 %v4641, %v4633
    %v5026 = vpack.c.b16 %v4642, %v4634
    %v5027 = vpack.c.b16 %v4643, %v4635
    %v5028 = vpack.c.b16 %v4644, %v4636
    %v5029 = vpack.c.b16 %v4645, %v4637
    %v5030 = vpack.c.b16 %v4646, %v4638
    %v5031 = vpack.c.b16 %v4655, %v4647
    %v5032 = vpack.c.b16 %v4656, %v4648
    %v5033 = vpack.c.b16 %v4657, %v4649
    %v5034 = vpack.c.b16 %v4658, %v4650
    %v5035 = vpack.c.b16 %v4659, %v4651
    %v5036 = vpack.c.b16 %v4660, %v4652
    %v5037 = vpack.c.b16 %v4661, %v4653
    %v5038 = vpack.c.b16 %v4662, %v4654
    %v5039 = vpack.c.b16 %v4671, %v4663
    %v5040 = vpack.c.b16 %v4672, %v4664
    %v5041 = vpack.c.b16 %v4673, %v4665
    %v5042 = vpack.c.b16 %v4674, %v4666
    %v5043 = vpack.c.b16 %v4675, %v4667
    %v5044 = vpack.c.b16 %v4676, %v4668
    %v5045 = vpack.c.b16 %v4677, %v4669
    %v5046 = vpack.c.b16 %v4678, %v4670
    %v5047 = vpack.c.b16 %v4687, %v4679
    %v5048 = vpack.c.b16 %v4688, %v4680
    %v5049 = vpack.c.b16 %v4689, %v4681
    %v5050 = vpack.c.b16 %v4690, %v4682
    %v5051 = vpack.c.b16 %v4691, %v4683
    %v5052 = vpack.c.b16 %v4692, %v4684
    %v5053 = vpack.c.b16 %v4693, %v4685
    %v5054 = vpack.c.b16 %v4694, %v4686
    %v5055 = vpack.c.b16 %v4703, %v4695
    %v5056 = vpack.c.b16 %v4704, %v4696
    %v5057 = vpack.c.b16 %v4705, %v4697
    %v5058 = vpack.c.b16 %v4706, %v4698
    %v5059 = vpack.c.b16 %v4707, %v4699
    %v5060 = vpack.c.b16 %v4708, %v4700
    %v5061 = vpack.c.b16 %v4709, %v4701
    %v5062 = vpack.c.b16 %v4710, %v4702
    %vm5415 = vcmask 523264
    %v5417 = vsel %vm5415, %v3649, 0
    %5419 = vmatprep.subr.bf16.mxu0 %v4768
    %5420 = vmatpush1.bf16.msra.mxu0 %v4767
    %5421 = vmatprep.subr.bf16.mxu0 %v4760
    %5422 = vmatpush1.bf16.msra.mxu0 %v4759
    %5423 = vmatprep.subr.bf16.mxu0 %v4752
    %5424 = vmatpush1.bf16.msra.mxu0 %v4751
    %5425 = vmatprep.subr.bf16.mxu0 %v4744
    %5426 = vmatpush1.bf16.msra.mxu0 %v4743
    %5427 = vmatprep.subr.bf16.mxu0 %v4736
    %5428 = vmatpush1.bf16.msra.mxu0 %v4735
    %5429 = vmatprep.subr.bf16.mxu0 %v4728
    %5430 = vmatpush1.bf16.msra.mxu0 %v4727
    %5431 = vmatprep.subr.bf16.mxu0 %v4720
    %5432 = vmatpush1.bf16.msra.mxu0 %v4719
    %5433 = vmatprep.subr.bf16.mxu0 %v4712
    %5434 = vmatpush1.bf16.msra.mxu0 %v4711
    %5435 = vmatprep.subr.bf16.mxu0 %v4832
    %5436 = vmatpush2.bf16.msra.mxu0 %v4831
    %5437 = vmatprep.subr.bf16.mxu0 %v4824
    %5438 = vmatpush2.bf16.msra.mxu0 %v4823
    %5439 = vmatprep.subr.bf16.mxu0 %v4816
    %5440 = vmatpush2.bf16.msra.mxu0 %v4815
    %5441 = vmatprep.subr.bf16.mxu0 %v4808
    %5442 = vmatpush2.bf16.msra.mxu0 %v4807
    %5443 = vmatprep.subr.bf16.mxu0 %v4800
    %5444 = vmatpush2.bf16.msra.mxu0 %v4799
    %5445 = vmatprep.subr.bf16.mxu0 %v4792
    %5446 = vmatpush2.bf16.msra.mxu0 %v4791
    %5447 = vmatprep.subr.bf16.mxu0 %v4784
    %5448 = vmatpush2.bf16.msra.mxu0 %v4783
    %5449 = vmatprep.subr.bf16.mxu0 %v4776
    %5450 = vmatpush2.bf16.msra.mxu0 %v4775
    %5451 = vmatprep.mubr.bf16.mxu0 %v3645
    %5452 = vmatmul.mubr.bf16.gmra.mxu0 %v3644
    %v5453 = vpop.f32.mrf.mxu0
    %v5454 = vadd.f32 %v3260, %v5453
    %v5455 = vpop.f32.mrf.mxu0
    %v5456 = vadd.f32 %v3262, %v5455
    %v5457 = vpop.f32.mrf.mxu0
    %v5458 = vpop.f32.mrf.mxu0
    %5459 = vdwg.mxu0
    %5460 = vmatprep.subr.bf16.mxu0 %v4896
    %5461 = vmatpush1.bf16.msra.mxu0 %v4895
    %5462 = vmatprep.subr.bf16.mxu0 %v4888
    %5463 = vmatpush1.bf16.msra.mxu0 %v4887
    %5464 = vmatprep.subr.bf16.mxu0 %v4880
    %5465 = vmatpush1.bf16.msra.mxu0 %v4879
    %5466 = vmatprep.subr.bf16.mxu0 %v4872
    %5467 = vmatpush1.bf16.msra.mxu0 %v4871
    %5468 = vmatprep.subr.bf16.mxu0 %v4864
    %5469 = vmatpush1.bf16.msra.mxu0 %v4863
    %5470 = vmatprep.subr.bf16.mxu0 %v4856
    %5471 = vmatpush1.bf16.msra.mxu0 %v4855
    %5472 = vmatprep.subr.bf16.mxu0 %v4848
    %5473 = vmatpush1.bf16.msra.mxu0 %v4847
    %5474 = vmatprep.subr.bf16.mxu0 %v4840
    %5475 = vmatpush1.bf16.msra.mxu0 %v4839
    %5476 = vmatprep.subr.bf16.mxu0 %v4960
    %5477 = vmatpush2.bf16.msra.mxu0 %v4959
    %5478 = vmatprep.subr.bf16.mxu0 %v4952
    %5479 = vmatpush2.bf16.msra.mxu0 %v4951
    %5480 = vmatprep.subr.bf16.mxu0 %v4944
    %5481 = vmatpush2.bf16.msra.mxu0 %v4943
    %5482 = vmatprep.subr.bf16.mxu0 %v4936
    %5483 = vmatpush2.bf16.msra.mxu0 %v4935
    %5484 = vmatprep.subr.bf16.mxu0 %v4928
    %5485 = vmatpush2.bf16.msra.mxu0 %v4927
    %5486 = vmatprep.subr.bf16.mxu0 %v4920
    %5487 = vmatpush2.bf16.msra.mxu0 %v4919
    %5488 = vmatprep.subr.bf16.mxu0 %v4912
    %5489 = vmatpush2.bf16.msra.mxu0 %v4911
    %5490 = vmatprep.subr.bf16.mxu0 %v4904
    %5491 = vmatpush2.bf16.msra.mxu0 %v4903
    %5492 = vmatprep.mubr.bf16.mxu0 %v3647
    %5493 = vmatmul.mubr.bf16.gmra.mxu0 %v3646
    %v5494 = vpop.f32.mrf.mxu0
    %v5495 = vadd.f32 %v5454, %v5494
    %v5496 = vpop.f32.mrf.mxu0
    %v5497 = vadd.f32 %v5456, %v5496
    %v5498 = vpop.f32.mrf.mxu0
    %v5499 = vpop.f32.mrf.mxu0
    %5500 = vdwg.mxu0
    %5501 = vmatprep.subr.bf16.mxu0 %v5024
    %5502 = vmatpush1.bf16.msra.mxu0 %v5023
    %5503 = vmatprep.subr.bf16.mxu0 %v5016
    %5504 = vmatpush1.bf16.msra.mxu0 %v5015
    %5505 = vmatprep.subr.bf16.mxu0 %v5008
    %5506 = vmatpush1.bf16.msra.mxu0 %v5007
    %5507 = vmatprep.subr.bf16.mxu0 %v5000
    %5508 = vmatpush1.bf16.msra.mxu0 %v4999
    %5509 = vmatprep.subr.bf16.mxu0 %v4992
    %5510 = vmatpush1.bf16.msra.mxu0 %v4991
    %5511 = vmatprep.subr.bf16.mxu0 %v4984
    %5512 = vmatpush1.bf16.msra.mxu0 %v4983
    %5513 = vmatprep.subr.bf16.mxu0 %v4976
    %5514 = vmatpush1.bf16.msra.mxu0 %v4975
    %5515 = vmatprep.subr.bf16.mxu0 %v4968
    %5516 = vmatpush1.bf16.msra.mxu0 %v4967
    %5517 = vmatprep.subr.bf16.mxu0 0
    %5518 = vmatpush2.bf16.msra.mxu0 0
    %5519 = vmatprep.subr.bf16.mxu0 0
    %5520 = vmatpush2.bf16.msra.mxu0 0
    %5521 = vmatprep.subr.bf16.mxu0 0
    %5522 = vmatpush2.bf16.msra.mxu0 0
    %5523 = vmatprep.subr.bf16.mxu0 0
    %5524 = vmatpush2.bf16.msra.mxu0 0
    %5525 = vmatprep.subr.bf16.mxu0 %v5056
    %5526 = vmatpush2.bf16.msra.mxu0 %v5055
    %5527 = vmatprep.subr.bf16.mxu0 %v5048
    %5528 = vmatpush2.bf16.msra.mxu0 %v5047
    %5529 = vmatprep.subr.bf16.mxu0 %v5040
    %5530 = vmatpush2.bf16.msra.mxu0 %v5039
    %5531 = vmatprep.subr.bf16.mxu0 %v5032
    %5532 = vmatpush2.bf16.msra.mxu0 %v5031
    %5533 = vmatprep.mubr.bf16.mxu0 %v5417
    %5534 = vmatmul.mubr.bf16.gmra.mxu0 %v3648
    %v5535 = vpop.f32.mrf.mxu0
    %v5536 = vadd.f32 %v5495, %v5535
    %v5537 = vpop.f32.mrf.mxu0
    %v5538 = vadd.f32 %v5497, %v5537
    %v5539 = vpop.f32.mrf.mxu0
    %v5540 = vpop.f32.mrf.mxu0
    %5541 = vdwg.mxu0
    %5542 = vmatprep.subr.bf16.mxu0 %v4770
    %5543 = vmatpush1.bf16.msra.mxu0 %v4769
    %5544 = vmatprep.subr.bf16.mxu0 %v4762
    %5545 = vmatpush1.bf16.msra.mxu0 %v4761
    %5546 = vmatprep.subr.bf16.mxu0 %v4754
    %5547 = vmatpush1.bf16.msra.mxu0 %v4753
    %5548 = vmatprep.subr.bf16.mxu0 %v4746
    %5549 = vmatpush1.bf16.msra.mxu0 %v4745
    %5550 = vmatprep.subr.bf16.mxu0 %v4738
    %5551 = vmatpush1.bf16.msra.mxu0 %v4737
    %5552 = vmatprep.subr.bf16.mxu0 %v4730
    %5553 = vmatpush1.bf16.msra.mxu0 %v4729
    %5554 = vmatprep.subr.bf16.mxu0 %v4722
    %5555 = vmatpush1.bf16.msra.mxu0 %v4721
    %5556 = vmatprep.subr.bf16.mxu0 %v4714
    %5557 = vmatpush1.bf16.msra.mxu0 %v4713
    %5558 = vmatprep.subr.bf16.mxu0 %v4834
    %5559 = vmatpush2.bf16.msra.mxu0 %v4833
    %5560 = vmatprep.subr.bf16.mxu0 %v4826
    %5561 = vmatpush2.bf16.msra.mxu0 %v4825
    %5562 = vmatprep.subr.bf16.mxu0 %v4818
    %5563 = vmatpush2.bf16.msra.mxu0 %v4817
    %5564 = vmatprep.subr.bf16.mxu0 %v4810
    %5565 = vmatpush2.bf16.msra.mxu0 %v4809
    %5566 = vmatprep.subr.bf16.mxu0 %v4802
    %5567 = vmatpush2.bf16.msra.mxu0 %v4801
    %5568 = vmatprep.subr.bf16.mxu0 %v4794
    %5569 = vmatpush2.bf16.msra.mxu0 %v4793
    %5570 = vmatprep.subr.bf16.mxu0 %v4786
    %5571 = vmatpush2.bf16.msra.mxu0 %v4785
    %5572 = vmatprep.subr.bf16.mxu0 %v4778
    %5573 = vmatpush2.bf16.msra.mxu0 %v4777
    %5574 = vmatprep.mubr.bf16.mxu0 %v3645
    %5575 = vmatmul.mubr.bf16.gmra.mxu0 %v3644
    %v5576 = vpop.f32.mrf.mxu0
    %v5577 = vadd.f32 %v3383, %v5576
    %v5578 = vpop.f32.mrf.mxu0
    %v5579 = vadd.f32 %v3385, %v5578
    %v5580 = vpop.f32.mrf.mxu0
    %v5581 = vpop.f32.mrf.mxu0
    %5582 = vdwg.mxu0
    %5583 = vmatprep.subr.bf16.mxu0 %v4898
    %5584 = vmatpush1.bf16.msra.mxu0 %v4897
    %5585 = vmatprep.subr.bf16.mxu0 %v4890
    %5586 = vmatpush1.bf16.msra.mxu0 %v4889
    %5587 = vmatprep.subr.bf16.mxu0 %v4882
    %5588 = vmatpush1.bf16.msra.mxu0 %v4881
    %5589 = vmatprep.subr.bf16.mxu0 %v4874
    %5590 = vmatpush1.bf16.msra.mxu0 %v4873
    %5591 = vmatprep.subr.bf16.mxu0 %v4866
    %5592 = vmatpush1.bf16.msra.mxu0 %v4865
    %5593 = vmatprep.subr.bf16.mxu0 %v4858
    %5594 = vmatpush1.bf16.msra.mxu0 %v4857
    %5595 = vmatprep.subr.bf16.mxu0 %v4850
    %5596 = vmatpush1.bf16.msra.mxu0 %v4849
    %5597 = vmatprep.subr.bf16.mxu0 %v4842
    %5598 = vmatpush1.bf16.msra.mxu0 %v4841
    %5599 = vmatprep.subr.bf16.mxu0 %v4962
    %5600 = vmatpush2.bf16.msra.mxu0 %v4961
    %5601 = vmatprep.subr.bf16.mxu0 %v4954
    %5602 = vmatpush2.bf16.msra.mxu0 %v4953
    %5603 = vmatprep.subr.bf16.mxu0 %v4946
    %5604 = vmatpush2.bf16.msra.mxu0 %v4945
    %5605 = vmatprep.subr.bf16.mxu0 %v4938
    %5606 = vmatpush2.bf16.msra.mxu0 %v4937
    %5607 = vmatprep.subr.bf16.mxu0 %v4930
    %5608 = vmatpush2.bf16.msra.mxu0 %v4929
    %5609 = vmatprep.subr.bf16.mxu0 %v4922
    %5610 = vmatpush2.bf16.msra.mxu0 %v4921
    %5611 = vmatprep.subr.bf16.mxu0 %v4914
    %5612 = vmatpush2.bf16.msra.mxu0 %v4913
    %5613 = vmatprep.subr.bf16.mxu0 %v4906
    %5614 = vmatpush2.bf16.msra.mxu0 %v4905
    %5615 = vmatprep.mubr.bf16.mxu0 %v3647
    %5616 = vmatmul.mubr.bf16.gmra.mxu0 %v3646
    %v5617 = vpop.f32.mrf.mxu0
    %v5618 = vadd.f32 %v5577, %v5617
    %v5619 = vpop.f32.mrf.mxu0
    %v5620 = vadd.f32 %v5579, %v5619
    %v5621 = vpop.f32.mrf.mxu0
    %v5622 = vpop.f32.mrf.mxu0
    %5623 = vdwg.mxu0
    %5624 = vmatprep.subr.bf16.mxu0 %v5026
    %5625 = vmatpush1.bf16.msra.mxu0 %v5025
    %5626 = vmatprep.subr.bf16.mxu0 %v5018
    %5627 = vmatpush1.bf16.msra.mxu0 %v5017
    %5628 = vmatprep.subr.bf16.mxu0 %v5010
    %5629 = vmatpush1.bf16.msra.mxu0 %v5009
    %5630 = vmatprep.subr.bf16.mxu0 %v5002
    %5631 = vmatpush1.bf16.msra.mxu0 %v5001
    %5632 = vmatprep.subr.bf16.mxu0 %v4994
    %5633 = vmatpush1.bf16.msra.mxu0 %v4993
    %5634 = vmatprep.subr.bf16.mxu0 %v4986
    %5635 = vmatpush1.bf16.msra.mxu0 %v4985
    %5636 = vmatprep.subr.bf16.mxu0 %v4978
    %5637 = vmatpush1.bf16.msra.mxu0 %v4977
    %5638 = vmatprep.subr.bf16.mxu0 %v4970
    %5639 = vmatpush1.bf16.msra.mxu0 %v4969
    %5640 = vmatprep.subr.bf16.mxu0 0
    %5641 = vmatpush2.bf16.msra.mxu0 0
    %5642 = vmatprep.subr.bf16.mxu0 0
    %5643 = vmatpush2.bf16.msra.mxu0 0
    %5644 = vmatprep.subr.bf16.mxu0 0
    %5645 = vmatpush2.bf16.msra.mxu0 0
    %5646 = vmatprep.subr.bf16.mxu0 0
    %5647 = vmatpush2.bf16.msra.mxu0 0
    %5648 = vmatprep.subr.bf16.mxu0 %v5058
    %5649 = vmatpush2.bf16.msra.mxu0 %v5057
    %5650 = vmatprep.subr.bf16.mxu0 %v5050
    %5651 = vmatpush2.bf16.msra.mxu0 %v5049
    %5652 = vmatprep.subr.bf16.mxu0 %v5042
    %5653 = vmatpush2.bf16.msra.mxu0 %v5041
    %5654 = vmatprep.subr.bf16.mxu0 %v5034
    %5655 = vmatpush2.bf16.msra.mxu0 %v5033
    %5656 = vmatprep.mubr.bf16.mxu0 %v5417
    %5657 = vmatmul.mubr.bf16.gmra.mxu0 %v3648
    %v5658 = vpop.f32.mrf.mxu0
    %v5659 = vadd.f32 %v5618, %v5658
    %v5660 = vpop.f32.mrf.mxu0
    %v5661 = vadd.f32 %v5620, %v5660
    %v5662 = vpop.f32.mrf.mxu0
    %v5663 = vpop.f32.mrf.mxu0
    %5664 = vdwg.mxu0
    %5665 = vmatprep.subr.bf16.mxu0 %v4772
    %5666 = vmatpush1.bf16.msra.mxu0 %v4771
    %5667 = vmatprep.subr.bf16.mxu0 %v4764
    %5668 = vmatpush1.bf16.msra.mxu0 %v4763
    %5669 = vmatprep.subr.bf16.mxu0 %v4756
    %5670 = vmatpush1.bf16.msra.mxu0 %v4755
    %5671 = vmatprep.subr.bf16.mxu0 %v4748
    %5672 = vmatpush1.bf16.msra.mxu0 %v4747
    %5673 = vmatprep.subr.bf16.mxu0 %v4740
    %5674 = vmatpush1.bf16.msra.mxu0 %v4739
    %5675 = vmatprep.subr.bf16.mxu0 %v4732
    %5676 = vmatpush1.bf16.msra.mxu0 %v4731
    %5677 = vmatprep.subr.bf16.mxu0 %v4724
    %5678 = vmatpush1.bf16.msra.mxu0 %v4723
    %5679 = vmatprep.subr.bf16.mxu0 %v4716
    %5680 = vmatpush1.bf16.msra.mxu0 %v4715
    %5681 = vmatprep.subr.bf16.mxu0 %v4836
    %5682 = vmatpush2.bf16.msra.mxu0 %v4835
    %5683 = vmatprep.subr.bf16.mxu0 %v4828
    %5684 = vmatpush2.bf16.msra.mxu0 %v4827
    %5685 = vmatprep.subr.bf16.mxu0 %v4820
    %5686 = vmatpush2.bf16.msra.mxu0 %v4819
    %5687 = vmatprep.subr.bf16.mxu0 %v4812
    %5688 = vmatpush2.bf16.msra.mxu0 %v4811
    %5689 = vmatprep.subr.bf16.mxu0 %v4804
    %5690 = vmatpush2.bf16.msra.mxu0 %v4803
    %5691 = vmatprep.subr.bf16.mxu0 %v4796
    %5692 = vmatpush2.bf16.msra.mxu0 %v4795
    %5693 = vmatprep.subr.bf16.mxu0 %v4788
    %5694 = vmatpush2.bf16.msra.mxu0 %v4787
    %5695 = vmatprep.subr.bf16.mxu0 %v4780
    %5696 = vmatpush2.bf16.msra.mxu0 %v4779
    %5697 = vmatprep.mubr.bf16.mxu0 %v3645
    %5698 = vmatmul.mubr.bf16.gmra.mxu0 %v3644
    %v5699 = vpop.f32.mrf.mxu0
    %v5700 = vadd.f32 %v3506, %v5699
    %v5701 = vpop.f32.mrf.mxu0
    %v5702 = vadd.f32 %v3508, %v5701
    %v5703 = vpop.f32.mrf.mxu0
    %v5704 = vpop.f32.mrf.mxu0
    %5705 = vdwg.mxu0
    %5706 = vmatprep.subr.bf16.mxu0 %v4900
    %5707 = vmatpush1.bf16.msra.mxu0 %v4899
    %5708 = vmatprep.subr.bf16.mxu0 %v4892
    %5709 = vmatpush1.bf16.msra.mxu0 %v4891
    %5710 = vmatprep.subr.bf16.mxu0 %v4884
    %5711 = vmatpush1.bf16.msra.mxu0 %v4883
    %5712 = vmatprep.subr.bf16.mxu0 %v4876
    %5713 = vmatpush1.bf16.msra.mxu0 %v4875
    %5714 = vmatprep.subr.bf16.mxu0 %v4868
    %5715 = vmatpush1.bf16.msra.mxu0 %v4867
    %5716 = vmatprep.subr.bf16.mxu0 %v4860
    %5717 = vmatpush1.bf16.msra.mxu0 %v4859
    %5718 = vmatprep.subr.bf16.mxu0 %v4852
    %5719 = vmatpush1.bf16.msra.mxu0 %v4851
    %5720 = vmatprep.subr.bf16.mxu0 %v4844
    %5721 = vmatpush1.bf16.msra.mxu0 %v4843
    %5722 = vmatprep.subr.bf16.mxu0 %v4964
    %5723 = vmatpush2.bf16.msra.mxu0 %v4963
    %5724 = vmatprep.subr.bf16.mxu0 %v4956
    %5725 = vmatpush2.bf16.msra.mxu0 %v4955
    %5726 = vmatprep.subr.bf16.mxu0 %v4948
    %5727 = vmatpush2.bf16.msra.mxu0 %v4947
    %5728 = vmatprep.subr.bf16.mxu0 %v4940
    %5729 = vmatpush2.bf16.msra.mxu0 %v4939
    %5730 = vmatprep.subr.bf16.mxu0 %v4932
    %5731 = vmatpush2.bf16.msra.mxu0 %v4931
    %5732 = vmatprep.subr.bf16.mxu0 %v4924
    %5733 = vmatpush2.bf16.msra.mxu0 %v4923
    %5734 = vmatprep.subr.bf16.mxu0 %v4916
    %5735 = vmatpush2.bf16.msra.mxu0 %v4915
    %5736 = vmatprep.subr.bf16.mxu0 %v4908
    %5737 = vmatpush2.bf16.msra.mxu0 %v4907
    %5738 = vmatprep.mubr.bf16.mxu0 %v3647
    %5739 = vmatmul.mubr.bf16.gmra.mxu0 %v3646
    %v5740 = vpop.f32.mrf.mxu0
    %v5741 = vadd.f32 %v5700, %v5740
    %v5742 = vpop.f32.mrf.mxu0
    %v5743 = vadd.f32 %v5702, %v5742
    %v5744 = vpop.f32.mrf.mxu0
    %v5745 = vpop.f32.mrf.mxu0
    %5746 = vdwg.mxu0
    %5747 = vmatprep.subr.bf16.mxu0 %v5028
    %5748 = vmatpush1.bf16.msra.mxu0 %v5027
    %5749 = vmatprep.subr.bf16.mxu0 %v5020
    %5750 = vmatpush1.bf16.msra.mxu0 %v5019
    %5751 = vmatprep.subr.bf16.mxu0 %v5012
    %5752 = vmatpush1.bf16.msra.mxu0 %v5011
    %5753 = vmatprep.subr.bf16.mxu0 %v5004
    %5754 = vmatpush1.bf16.msra.mxu0 %v5003
    %5755 = vmatprep.subr.bf16.mxu0 %v4996
    %5756 = vmatpush1.bf16.msra.mxu0 %v4995
    %5757 = vmatprep.subr.bf16.mxu0 %v4988
    %5758 = vmatpush1.bf16.msra.mxu0 %v4987
    %5759 = vmatprep.subr.bf16.mxu0 %v4980
    %5760 = vmatpush1.bf16.msra.mxu0 %v4979
    %5761 = vmatprep.subr.bf16.mxu0 %v4972
    %5762 = vmatpush1.bf16.msra.mxu0 %v4971
    %5763 = vmatprep.subr.bf16.mxu0 0
    %5764 = vmatpush2.bf16.msra.mxu0 0
    %5765 = vmatprep.subr.bf16.mxu0 0
    %5766 = vmatpush2.bf16.msra.mxu0 0
    %5767 = vmatprep.subr.bf16.mxu0 0
    %5768 = vmatpush2.bf16.msra.mxu0 0
    %5769 = vmatprep.subr.bf16.mxu0 0
    %5770 = vmatpush2.bf16.msra.mxu0 0
    %5771 = vmatprep.subr.bf16.mxu0 %v5060
    %5772 = vmatpush2.bf16.msra.mxu0 %v5059
    %5773 = vmatprep.subr.bf16.mxu0 %v5052
    %5774 = vmatpush2.bf16.msra.mxu0 %v5051
    %5775 = vmatprep.subr.bf16.mxu0 %v5044
    %5776 = vmatpush2.bf16.msra.mxu0 %v5043
    %5777 = vmatprep.subr.bf16.mxu0 %v5036
    %5778 = vmatpush2.bf16.msra.mxu0 %v5035
    %5779 = vmatprep.mubr.bf16.mxu0 %v5417
    %5780 = vmatmul.mubr.bf16.gmra.mxu0 %v3648
    %v5781 = vpop.f32.mrf.mxu0
    %v5782 = vadd.f32 %v5741, %v5781
    %v5783 = vpop.f32.mrf.mxu0
    %v5784 = vadd.f32 %v5743, %v5783
    %v5785 = vpop.f32.mrf.mxu0
    %v5786 = vpop.f32.mrf.mxu0
    %5787 = vdwg.mxu0
    %5788 = vmatprep.subr.bf16.mxu0 %v4774
    %5789 = vmatpush1.bf16.msra.mxu0 %v4773
    %5790 = vmatprep.subr.bf16.mxu0 %v4766
    %5791 = vmatpush1.bf16.msra.mxu0 %v4765
    %5792 = vmatprep.subr.bf16.mxu0 %v4758
    %5793 = vmatpush1.bf16.msra.mxu0 %v4757
    %5794 = vmatprep.subr.bf16.mxu0 %v4750
    %5795 = vmatpush1.bf16.msra.mxu0 %v4749
    %5796 = vmatprep.subr.bf16.mxu0 %v4742
    %5797 = vmatpush1.bf16.msra.mxu0 %v4741
    %5798 = vmatprep.subr.bf16.mxu0 %v4734
    %5799 = vmatpush1.bf16.msra.mxu0 %v4733
    %5800 = vmatprep.subr.bf16.mxu0 %v4726
    %5801 = vmatpush1.bf16.msra.mxu0 %v4725
    %5802 = vmatprep.subr.bf16.mxu0 %v4718
    %5803 = vmatpush1.bf16.msra.mxu0 %v4717
    %5804 = vmatprep.subr.bf16.mxu0 %v4838
    %5805 = vmatpush2.bf16.msra.mxu0 %v4837
    %5806 = vmatprep.subr.bf16.mxu0 %v4830
    %5807 = vmatpush2.bf16.msra.mxu0 %v4829
    %5808 = vmatprep.subr.bf16.mxu0 %v4822
    %5809 = vmatpush2.bf16.msra.mxu0 %v4821
    %5810 = vmatprep.subr.bf16.mxu0 %v4814
    %5811 = vmatpush2.bf16.msra.mxu0 %v4813
    %5812 = vmatprep.subr.bf16.mxu0 %v4806
    %5813 = vmatpush2.bf16.msra.mxu0 %v4805
    %5814 = vmatprep.subr.bf16.mxu0 %v4798
    %5815 = vmatpush2.bf16.msra.mxu0 %v4797
    %5816 = vmatprep.subr.bf16.mxu0 %v4790
    %5817 = vmatpush2.bf16.msra.mxu0 %v4789
    %5818 = vmatprep.subr.bf16.mxu0 %v4782
    %5819 = vmatpush2.bf16.msra.mxu0 %v4781
    %5820 = vmatprep.mubr.bf16.mxu0 %v3645
    %5821 = vmatmul.mubr.bf16.gmra.mxu0 %v3644
    %v5822 = vpop.f32.mrf.mxu0
    %v5823 = vadd.f32 %v3629, %v5822
    %v5824 = vpop.f32.mrf.mxu0
    %v5825 = vadd.f32 %v3631, %v5824
    %v5826 = vpop.f32.mrf.mxu0
    %v5827 = vpop.f32.mrf.mxu0
    %5828 = vdwg.mxu0
    %5829 = vmatprep.subr.bf16.mxu0 %v4902
    %5830 = vmatpush1.bf16.msra.mxu0 %v4901
    %5831 = vmatprep.subr.bf16.mxu0 %v4894
    %5832 = vmatpush1.bf16.msra.mxu0 %v4893
    %5833 = vmatprep.subr.bf16.mxu0 %v4886
    %5834 = vmatpush1.bf16.msra.mxu0 %v4885
    %5835 = vmatprep.subr.bf16.mxu0 %v4878
    %5836 = vmatpush1.bf16.msra.mxu0 %v4877
    %5837 = vmatprep.subr.bf16.mxu0 %v4870
    %5838 = vmatpush1.bf16.msra.mxu0 %v4869
    %5839 = vmatprep.subr.bf16.mxu0 %v4862
    %5840 = vmatpush1.bf16.msra.mxu0 %v4861
    %5841 = vmatprep.subr.bf16.mxu0 %v4854
    %5842 = vmatpush1.bf16.msra.mxu0 %v4853
    %5843 = vmatprep.subr.bf16.mxu0 %v4846
    %5844 = vmatpush1.bf16.msra.mxu0 %v4845
    %5845 = vmatprep.subr.bf16.mxu0 %v4966
    %5846 = vmatpush2.bf16.msra.mxu0 %v4965
    %5847 = vmatprep.subr.bf16.mxu0 %v4958
    %5848 = vmatpush2.bf16.msra.mxu0 %v4957
    %5849 = vmatprep.subr.bf16.mxu0 %v4950
    %5850 = vmatpush2.bf16.msra.mxu0 %v4949
    %5851 = vmatprep.subr.bf16.mxu0 %v4942
    %5852 = vmatpush2.bf16.msra.mxu0 %v4941
    %5853 = vmatprep.subr.bf16.mxu0 %v4934
    %5854 = vmatpush2.bf16.msra.mxu0 %v4933
    %5855 = vmatprep.subr.bf16.mxu0 %v4926
    %5856 = vmatpush2.bf16.msra.mxu0 %v4925
    %5857 = vmatprep.subr.bf16.mxu0 %v4918
    %5858 = vmatpush2.bf16.msra.mxu0 %v4917
    %5859 = vmatprep.subr.bf16.mxu0 %v4910
    %5860 = vmatpush2.bf16.msra.mxu0 %v4909
    %5861 = vmatprep.mubr.bf16.mxu0 %v3647
    %5862 = vmatmul.mubr.bf16.gmra.mxu0 %v3646
    %v5863 = vpop.f32.mrf.mxu0
    %v5864 = vadd.f32 %v5823, %v5863
    %v5865 = vpop.f32.mrf.mxu0
    %v5866 = vadd.f32 %v5825, %v5865
    %v5867 = vpop.f32.mrf.mxu0
    %v5868 = vpop.f32.mrf.mxu0
    %5869 = vdwg.mxu0
    %5870 = vmatprep.subr.bf16.mxu0 %v5030
    %5871 = vmatpush1.bf16.msra.mxu0 %v5029
    %5872 = vmatprep.subr.bf16.mxu0 %v5022
    %5873 = vmatpush1.bf16.msra.mxu0 %v5021
    %5874 = vmatprep.subr.bf16.mxu0 %v5014
    %5875 = vmatpush1.bf16.msra.mxu0 %v5013
    %5876 = vmatprep.subr.bf16.mxu0 %v5006
    %5877 = vmatpush1.bf16.msra.mxu0 %v5005
    %5878 = vmatprep.subr.bf16.mxu0 %v4998
    %5879 = vmatpush1.bf16.msra.mxu0 %v4997
    %5880 = vmatprep.subr.bf16.mxu0 %v4990
    %5881 = vmatpush1.bf16.msra.mxu0 %v4989
    %5882 = vmatprep.subr.bf16.mxu0 %v4982
    %5883 = vmatpush1.bf16.msra.mxu0 %v4981
    %5884 = vmatprep.subr.bf16.mxu0 %v4974
    %5885 = vmatpush1.bf16.msra.mxu0 %v4973
    %5886 = vmatprep.subr.bf16.mxu0 0
    %5887 = vmatpush2.bf16.msra.mxu0 0
    %5888 = vmatprep.subr.bf16.mxu0 0
    %5889 = vmatpush2.bf16.msra.mxu0 0
    %5890 = vmatprep.subr.bf16.mxu0 0
    %5891 = vmatpush2.bf16.msra.mxu0 0
    %5892 = vmatprep.subr.bf16.mxu0 0
    %5893 = vmatpush2.bf16.msra.mxu0 0
    %5894 = vmatprep.subr.bf16.mxu0 %v5062
    %5895 = vmatpush2.bf16.msra.mxu0 %v5061
    %5896 = vmatprep.subr.bf16.mxu0 %v5054
    %5897 = vmatpush2.bf16.msra.mxu0 %v5053
    %5898 = vmatprep.subr.bf16.mxu0 %v5046
    %5899 = vmatpush2.bf16.msra.mxu0 %v5045
    %5900 = vmatprep.subr.bf16.mxu0 %v5038
    %5901 = vmatpush2.bf16.msra.mxu0 %v5037
    %5902 = vmatprep.mubr.bf16.mxu0 %v5417
    %5903 = vmatmul.mubr.bf16.gmra.mxu0 %v3648
    %v5904 = vpop.f32.mrf.mxu0
    %v5905 = vadd.f32 %v5864, %v5904
    %v5906 = vpop.f32.mrf.mxu0
    %v5907 = vadd.f32 %v5866, %v5906
    %v5908 = vpop.f32.mrf.mxu0
    %v5909 = vpop.f32.mrf.mxu0
    %5910 = vdwg.mxu0
    %v5911 = vld [vmem:[#allocation8] sm:$0xff]
    %v5913 = vlaneseq
    %v5914 = vshrl.u32 %v5913, 7
    %v5915 = vsub.s32 0, %v5914
    %v5916 = vrot.slane %v5911, %v5915
    %v5917 = vlaneseq
    %v5918 = vshrl.u32 %v5917, 7
    %v5919 = vsub.s32 1, %v5918
    %v5920 = vrot.slane %v5911, %v5919
    %v5921 = vlaneseq
    %v5922 = vshrl.u32 %v5921, 7
    %v5923 = vsub.s32 2, %v5922
    %v5924 = vrot.slane %v5911, %v5923
    %v5925 = vlaneseq
    %v5926 = vshrl.u32 %v5925, 7
    %v5927 = vsub.s32 3, %v5926
    %v5928 = vrot.slane %v5911, %v5927
    %v5929 = vlaneseq
    %v5930 = vshrl.u32 %v5929, 7
    %v5931 = vsub.s32 4, %v5930
    %v5932 = vrot.slane %v5911, %v5931
    %v5933 = vlaneseq
    %v5934 = vshrl.u32 %v5933, 7
    %v5935 = vsub.s32 5, %v5934
    %v5936 = vrot.slane %v5911, %v5935
    %v5937 = vlaneseq
    %v5938 = vshrl.u32 %v5937, 7
    %v5939 = vsub.s32 6, %v5938
    %v5940 = vrot.slane %v5911, %v5939
    %v5941 = vlaneseq
    %v5942 = vshrl.u32 %v5941, 7
    %v5943 = vsub.s32 7, %v5942
    %v5944 = vrot.slane %v5911, %v5943
    %v5953 = vadd.f32 %v5536, %v5916
    %v5954 = vadd.f32 %v5538, %v5920
    %v5955 = vadd.f32 %v5659, %v5924
    %v5956 = vadd.f32 %v5661, %v5928
    %v5957 = vadd.f32 %v5782, %v5932
    %v5958 = vadd.f32 %v5784, %v5936
    %v5959 = vadd.f32 %v5905, %v5940
    %v5960 = vadd.f32 %v5907, %v5944
    %v5961 = vmax.f32 %v5953, 0.0
    %v5962 = vmax.f32 %v5954, 0.0
    %v5963 = vmax.f32 %v5955, 0.0
    %v5964 = vmax.f32 %v5956, 0.0
    %v5965 = vmax.f32 %v5957, 0.0
    %v5966 = vmax.f32 %v5958, 0.0
    %v5967 = vmax.f32 %v5959, 0.0
    %v5968 = vmax.f32 %v5960, 0.0
    %v5969 = vpack.c.bf16 %v5961, %v5961
    %v5970 = vpack.c.bf16 %v5962, %v5962
    %v5971 = vpack.c.bf16 %v5963, %v5963
    %v5972 = vpack.c.bf16 %v5964, %v5964
    %v5973 = vpack.c.bf16 %v5965, %v5965
    %v5974 = vpack.c.bf16 %v5966, %v5966
    %v5975 = vpack.c.bf16 %v5967, %v5967
    %v5976 = vpack.c.bf16 %v5968, %v5968
    %v5977 = vld [vmem:[#allocation10] sm:$0xff]
    %v5978 = vld [vmem:[#allocation10 + $0x8] sm:$0xff]
    %v5979 = vld [vmem:[#allocation10 + $0x10] sm:$0xff]
    %v5980 = vld [vmem:[#allocation10 + $0x18] sm:$0xff]
    %v5981 = vld [vmem:[#allocation10 + $0x20] sm:$0xff]
    %v5982 = vld [vmem:[#allocation10 + $0x28] sm:$0xff]
    %v5983 = vld [vmem:[#allocation10 + $0x30] sm:$0xff]
    %v5984 = vld [vmem:[#allocation10 + $0x38] sm:$0xff]
    %v5985 = vld [vmem:[#allocation10 + $0x40] sm:$0xff]
    %v5986 = vld [vmem:[#allocation10 + $0x48] sm:$0xff]
    %v5987 = vld [vmem:[#allocation10 + $0x50] sm:$0xff]
    %v5988 = vld [vmem:[#allocation10 + $0x58] sm:$0xff]
    %v5989 = vld [vmem:[#allocation10 + $0x60] sm:$0xff]
    %v5990 = vld [vmem:[#allocation10 + $0x68] sm:$0xff]
    %v5991 = vld [vmem:[#allocation10 + $0x70] sm:$0xff]
    %v5992 = vld [vmem:[#allocation10 + $0x78] sm:$0xff]
    %v5993 = vld [vmem:[#allocation10 + $0x80] sm:$0xff]
    %v5994 = vld [vmem:[#allocation10 + $0x88] sm:$0xff]
    %v5995 = vld [vmem:[#allocation10 + $0x90] sm:$0xff]
    %v5996 = vld [vmem:[#allocation10 + $0x98] sm:$0xff]
    %v5997 = vld [vmem:[#allocation10 + $0xa0] sm:$0xff]
    %v5998 = vld [vmem:[#allocation10 + $0xa8] sm:$0xff]
    %v5999 = vld [vmem:[#allocation10 + $0xb0] sm:$0xff]
    %v6000 = vld [vmem:[#allocation10 + $0xb8] sm:$0xff]
    %v6001 = vld [vmem:[#allocation10 + $0xc0] sm:$0xff]
    %v6002 = vld [vmem:[#allocation10 + $0xc8] sm:$0xff]
    %v6003 = vld [vmem:[#allocation10 + $0xd0] sm:$0xff]
    %v6004 = vld [vmem:[#allocation10 + $0xd8] sm:$0xff]
    %v6005 = vld [vmem:[#allocation10 + $0xe0] sm:$0xff]
    %v6006 = vld [vmem:[#allocation10 + $0xe8] sm:$0xff]
    %v6007 = vld [vmem:[#allocation10 + $0xf0] sm:$0xff]
    %v6008 = vld [vmem:[#allocation10 + $0xf8] sm:$0xff]
    %v6009 = vld [vmem:[#allocation10 + $0x100] sm:$0xff]
    %v6010 = vld [vmem:[#allocation10 + $0x108] sm:$0xff]
    %v6011 = vld [vmem:[#allocation10 + $0x110] sm:$0xff]
    %v6012 = vld [vmem:[#allocation10 + $0x118] sm:$0xff]
    %v6013 = vld [vmem:[#allocation10 + $0x120] sm:$0xff]
    %v6014 = vld [vmem:[#allocation10 + $0x128] sm:$0xff]
    %v6015 = vld [vmem:[#allocation10 + $0x130] sm:$0xff]
    %v6016 = vld [vmem:[#allocation10 + $0x138] sm:$0xff]
    %v6017 = vld [vmem:[#allocation10 + $0x140] sm:$0xff]
    %v6018 = vld [vmem:[#allocation10 + $0x148] sm:$0xff]
    %v6019 = vld [vmem:[#allocation10 + $0x150] sm:$0xff]
    %v6020 = vld [vmem:[#allocation10 + $0x158] sm:$0xff]
    %v6021 = vld [vmem:[#allocation10 + $0x160] sm:$0xff]
    %v6022 = vld [vmem:[#allocation10 + $0x168] sm:$0xff]
    %v6023 = vld [vmem:[#allocation10 + $0x170] sm:$0xff]
    %v6024 = vld [vmem:[#allocation10 + $0x178] sm:$0xff]
    %v6025 = vld [vmem:[#allocation10 + $0x180] sm:$0xff]
    %v6026 = vld [vmem:[#allocation10 + $0x188] sm:$0xff]
    %v6027 = vld [vmem:[#allocation10 + $0x190] sm:$0xff]
    %v6028 = vld [vmem:[#allocation10 + $0x198] sm:$0xff]
    %v6029 = vld [vmem:[#allocation10 + $0x1a0] sm:$0xff]
    %v6030 = vld [vmem:[#allocation10 + $0x1a8] sm:$0xff]
    %v6031 = vld [vmem:[#allocation10 + $0x1b0] sm:$0xff]
    %v6032 = vld [vmem:[#allocation10 + $0x1b8] sm:$0xff]
    %v6033 = vld [vmem:[#allocation10 + $0x1c0] sm:$0xff]
    %v6034 = vld [vmem:[#allocation10 + $0x1c8] sm:$0xff]
    %v6035 = vld [vmem:[#allocation10 + $0x1d0] sm:$0xff]
    %v6036 = vld [vmem:[#allocation10 + $0x1d8] sm:$0xff]
    %v6037 = vld [vmem:[#allocation10 + $0x1e0] sm:$0xff]
    %v6038 = vld [vmem:[#allocation10 + $0x1e8] sm:$0xff]
    %v6039 = vld [vmem:[#allocation10 + $0x1f0] sm:$0xff]
    %v6040 = vld [vmem:[#allocation10 + $0x1f8] sm:$0xff]
    %v6041 = vld [vmem:[#allocation10 + $0x200] sm:$0xff]
    %v6042 = vld [vmem:[#allocation10 + $0x208] sm:$0xff]
    %v6043 = vld [vmem:[#allocation10 + $0x210] sm:$0xff]
    %v6044 = vld [vmem:[#allocation10 + $0x218] sm:$0xff]
    %v6045 = vld [vmem:[#allocation10 + $0x220] sm:$0xff]
    %v6046 = vld [vmem:[#allocation10 + $0x228] sm:$0xff]
    %v6047 = vld [vmem:[#allocation10 + $0x230] sm:$0xff]
    %v6048 = vld [vmem:[#allocation10 + $0x238] sm:$0xff]
    %v6049 = vld [vmem:[#allocation10 + $0x240] sm:$0xff]
    %v6050 = vld [vmem:[#allocation10 + $0x248] sm:$0xff]
    %v6051 = vld [vmem:[#allocation10 + $0x250] sm:$0xff]
    %v6052 = vld [vmem:[#allocation10 + $0x258] sm:$0xff]
    %v6053 = vld [vmem:[#allocation10 + $0x260] sm:$0xff]
    %v6054 = vld [vmem:[#allocation10 + $0x268] sm:$0xff]
    %v6055 = vld [vmem:[#allocation10 + $0x270] sm:$0xff]
    %v6056 = vld [vmem:[#allocation10 + $0x278] sm:$0xff]
    %v6057 = vld [vmem:[#allocation10 + $0x280] sm:$0xff]
    %v6058 = vld [vmem:[#allocation10 + $0x288] sm:$0xff]
    %v6059 = vld [vmem:[#allocation10 + $0x290] sm:$0xff]
    %v6060 = vld [vmem:[#allocation10 + $0x298] sm:$0xff]
    %v6061 = vld [vmem:[#allocation10 + $0x2a0] sm:$0xff]
    %v6062 = vld [vmem:[#allocation10 + $0x2a8] sm:$0xff]
    %v6063 = vld [vmem:[#allocation10 + $0x2b0] sm:$0xff]
    %v6064 = vld [vmem:[#allocation10 + $0x2b8] sm:$0xff]
    %v6065 = vld [vmem:[#allocation10 + $0x2c0] sm:$0xff]
    %v6066 = vld [vmem:[#allocation10 + $0x2c8] sm:$0xff]
    %v6067 = vld [vmem:[#allocation10 + $0x2d0] sm:$0xff]
    %v6068 = vld [vmem:[#allocation10 + $0x2d8] sm:$0xff]
    %v6069 = vld [vmem:[#allocation10 + $0x2e0] sm:$0xff]
    %v6070 = vld [vmem:[#allocation10 + $0x2e8] sm:$0xff]
    %v6071 = vld [vmem:[#allocation10 + $0x2f0] sm:$0xff]
    %v6072 = vld [vmem:[#allocation10 + $0x2f8] sm:$0xff]
    %v6073 = vld [vmem:[#allocation10 + $0x300] sm:$0xff]
    %v6074 = vld [vmem:[#allocation10 + $0x308] sm:$0xff]
    %v6075 = vld [vmem:[#allocation10 + $0x310] sm:$0xff]
    %v6076 = vld [vmem:[#allocation10 + $0x318] sm:$0xff]
    %v6077 = vld [vmem:[#allocation10 + $0x320] sm:$0xff]
    %v6078 = vld [vmem:[#allocation10 + $0x328] sm:$0xff]
    %v6079 = vld [vmem:[#allocation10 + $0x330] sm:$0xff]
    %v6080 = vld [vmem:[#allocation10 + $0x338] sm:$0xff]
    %v6081 = vld [vmem:[#allocation10 + $0x340] sm:$0xff]
    %v6082 = vld [vmem:[#allocation10 + $0x348] sm:$0xff]
    %v6083 = vld [vmem:[#allocation10 + $0x350] sm:$0xff]
    %v6084 = vld [vmem:[#allocation10 + $0x358] sm:$0xff]
    %v6085 = vld [vmem:[#allocation10 + $0x360] sm:$0xff]
    %v6086 = vld [vmem:[#allocation10 + $0x368] sm:$0xff]
    %v6087 = vld [vmem:[#allocation10 + $0x370] sm:$0xff]
    %v6088 = vld [vmem:[#allocation10 + $0x378] sm:$0xff]
    %v6089 = vld [vmem:[#allocation10 + $0x380] sm:$0xff]
    %v6090 = vld [vmem:[#allocation10 + $0x388] sm:$0xff]
    %v6091 = vld [vmem:[#allocation10 + $0x390] sm:$0xff]
    %v6092 = vld [vmem:[#allocation10 + $0x398] sm:$0xff]
    %v6093 = vld [vmem:[#allocation10 + $0x3a0] sm:$0xff]
    %v6094 = vld [vmem:[#allocation10 + $0x3a8] sm:$0xff]
    %v6095 = vld [vmem:[#allocation10 + $0x3b0] sm:$0xff]
    %v6096 = vld [vmem:[#allocation10 + $0x3b8] sm:$0xff]
    %v6097 = vld [vmem:[#allocation10 + $0x3c0] sm:$0xff]
    %v6098 = vld [vmem:[#allocation10 + $0x3c8] sm:$0xff]
    %v6099 = vld [vmem:[#allocation10 + $0x3d0] sm:$0xff]
    %v6100 = vld [vmem:[#allocation10 + $0x3d8] sm:$0xff]
    %v6101 = vld [vmem:[#allocation10 + $0x3e0] sm:$0xff]
    %v6102 = vld [vmem:[#allocation10 + $0x3e8] sm:$0xff]
    %v6103 = vld [vmem:[#allocation10 + $0x3f0] sm:$0xff]
    %v6104 = vld [vmem:[#allocation10 + $0x3f8] sm:$0xff]
    %v6105 = vld [vmem:[#allocation11] sm:$0x3]
    %v6107 = vlaneseq
    %v6108 = vshrl.u32 %v6107, 7
    %v6109 = vsub.s32 0, %v6108
    %v6110 = vrot.slane %v6105, %v6109
    %v6111 = vlaneseq
    %v6112 = vshrl.u32 %v6111, 7
    %v6113 = vsub.s32 1, %v6112
    %v6114 = vrot.slane %v6105, %v6113
    %v6245 = vunpack.c.l.b16 %v5977
    %v6246 = vunpack.c.h.b16 %v5977
    %v6247 = vunpack.c.l.b16 %v5978
    %v6248 = vunpack.c.h.b16 %v5978
    %v6249 = vunpack.c.l.b16 %v5979
    %v6250 = vunpack.c.h.b16 %v5979
    %v6251 = vunpack.c.l.b16 %v5980
    %v6252 = vunpack.c.h.b16 %v5980
    %v6253 = vunpack.c.l.b16 %v5981
    %v6254 = vunpack.c.h.b16 %v5981
    %v6255 = vunpack.c.l.b16 %v5982
    %v6256 = vunpack.c.h.b16 %v5982
    %v6257 = vunpack.c.l.b16 %v5983
    %v6258 = vunpack.c.h.b16 %v5983
    %v6259 = vunpack.c.l.b16 %v5984
    %v6260 = vunpack.c.h.b16 %v5984
    %v6261 = vunpack.c.l.b16 %v5985
    %v6262 = vunpack.c.h.b16 %v5985
    %v6263 = vunpack.c.l.b16 %v5986
    %v6264 = vunpack.c.h.b16 %v5986
    %v6265 = vunpack.c.l.b16 %v5987
    %v6266 = vunpack.c.h.b16 %v5987
    %v6267 = vunpack.c.l.b16 %v5988
    %v6268 = vunpack.c.h.b16 %v5988
    %v6269 = vunpack.c.l.b16 %v5989
    %v6270 = vunpack.c.h.b16 %v5989
    %v6271 = vunpack.c.l.b16 %v5990
    %v6272 = vunpack.c.h.b16 %v5990
    %v6273 = vunpack.c.l.b16 %v5991
    %v6274 = vunpack.c.h.b16 %v5991
    %v6275 = vunpack.c.l.b16 %v5992
    %v6276 = vunpack.c.h.b16 %v5992
    %v6277 = vunpack.c.l.b16 %v5993
    %v6278 = vunpack.c.h.b16 %v5993
    %v6279 = vunpack.c.l.b16 %v5994
    %v6280 = vunpack.c.h.b16 %v5994
    %v6281 = vunpack.c.l.b16 %v5995
    %v6282 = vunpack.c.h.b16 %v5995
    %v6283 = vunpack.c.l.b16 %v5996
    %v6284 = vunpack.c.h.b16 %v5996
    %v6285 = vunpack.c.l.b16 %v5997
    %v6286 = vunpack.c.h.b16 %v5997
    %v6287 = vunpack.c.l.b16 %v5998
    %v6288 = vunpack.c.h.b16 %v5998
    %v6289 = vunpack.c.l.b16 %v5999
    %v6290 = vunpack.c.h.b16 %v5999
    %v6291 = vunpack.c.l.b16 %v6000
    %v6292 = vunpack.c.h.b16 %v6000
    %v6293 = vunpack.c.l.b16 %v6001
    %v6294 = vunpack.c.h.b16 %v6001
    %v6295 = vunpack.c.l.b16 %v6002
    %v6296 = vunpack.c.h.b16 %v6002
    %v6297 = vunpack.c.l.b16 %v6003
    %v6298 = vunpack.c.h.b16 %v6003
    %v6299 = vunpack.c.l.b16 %v6004
    %v6300 = vunpack.c.h.b16 %v6004
    %v6301 = vunpack.c.l.b16 %v6005
    %v6302 = vunpack.c.h.b16 %v6005
    %v6303 = vunpack.c.l.b16 %v6006
    %v6304 = vunpack.c.h.b16 %v6006
    %v6305 = vunpack.c.l.b16 %v6007
    %v6306 = vunpack.c.h.b16 %v6007
    %v6307 = vunpack.c.l.b16 %v6008
    %v6308 = vunpack.c.h.b16 %v6008
    %v6309 = vunpack.c.l.b16 %v6009
    %v6310 = vunpack.c.h.b16 %v6009
    %v6311 = vunpack.c.l.b16 %v6010
    %v6312 = vunpack.c.h.b16 %v6010
    %v6313 = vunpack.c.l.b16 %v6011
    %v6314 = vunpack.c.h.b16 %v6011
    %v6315 = vunpack.c.l.b16 %v6012
    %v6316 = vunpack.c.h.b16 %v6012
    %v6317 = vunpack.c.l.b16 %v6013
    %v6318 = vunpack.c.h.b16 %v6013
    %v6319 = vunpack.c.l.b16 %v6014
    %v6320 = vunpack.c.h.b16 %v6014
    %v6321 = vunpack.c.l.b16 %v6015
    %v6322 = vunpack.c.h.b16 %v6015
    %v6323 = vunpack.c.l.b16 %v6016
    %v6324 = vunpack.c.h.b16 %v6016
    %v6325 = vunpack.c.l.b16 %v6017
    %v6326 = vunpack.c.h.b16 %v6017
    %v6327 = vunpack.c.l.b16 %v6018
    %v6328 = vunpack.c.h.b16 %v6018
    %v6329 = vunpack.c.l.b16 %v6019
    %v6330 = vunpack.c.h.b16 %v6019
    %v6331 = vunpack.c.l.b16 %v6020
    %v6332 = vunpack.c.h.b16 %v6020
    %v6333 = vunpack.c.l.b16 %v6021
    %v6334 = vunpack.c.h.b16 %v6021
    %v6335 = vunpack.c.l.b16 %v6022
    %v6336 = vunpack.c.h.b16 %v6022
    %v6337 = vunpack.c.l.b16 %v6023
    %v6338 = vunpack.c.h.b16 %v6023
    %v6339 = vunpack.c.l.b16 %v6024
    %v6340 = vunpack.c.h.b16 %v6024
    %v6341 = vunpack.c.l.b16 %v6025
    %v6342 = vunpack.c.h.b16 %v6025
    %v6343 = vunpack.c.l.b16 %v6026
    %v6344 = vunpack.c.h.b16 %v6026
    %v6345 = vunpack.c.l.b16 %v6027
    %v6346 = vunpack.c.h.b16 %v6027
    %v6347 = vunpack.c.l.b16 %v6028
    %v6348 = vunpack.c.h.b16 %v6028
    %v6349 = vunpack.c.l.b16 %v6029
    %v6350 = vunpack.c.h.b16 %v6029
    %v6351 = vunpack.c.l.b16 %v6030
    %v6352 = vunpack.c.h.b16 %v6030
    %v6353 = vunpack.c.l.b16 %v6031
    %v6354 = vunpack.c.h.b16 %v6031
    %v6355 = vunpack.c.l.b16 %v6032
    %v6356 = vunpack.c.h.b16 %v6032
    %v6357 = vunpack.c.l.b16 %v6033
    %v6358 = vunpack.c.h.b16 %v6033
    %v6359 = vunpack.c.l.b16 %v6034
    %v6360 = vunpack.c.h.b16 %v6034
    %v6361 = vunpack.c.l.b16 %v6035
    %v6362 = vunpack.c.h.b16 %v6035
    %v6363 = vunpack.c.l.b16 %v6036
    %v6364 = vunpack.c.h.b16 %v6036
    %v6365 = vunpack.c.l.b16 %v6037
    %v6366 = vunpack.c.h.b16 %v6037
    %v6367 = vunpack.c.l.b16 %v6038
    %v6368 = vunpack.c.h.b16 %v6038
    %v6369 = vunpack.c.l.b16 %v6039
    %v6370 = vunpack.c.h.b16 %v6039
    %v6371 = vunpack.c.l.b16 %v6040
    %v6372 = vunpack.c.h.b16 %v6040
    %v6373 = vunpack.c.l.b16 %v6041
    %v6374 = vunpack.c.h.b16 %v6041
    %v6375 = vunpack.c.l.b16 %v6042
    %v6376 = vunpack.c.h.b16 %v6042
    %v6377 = vunpack.c.l.b16 %v6043
    %v6378 = vunpack.c.h.b16 %v6043
    %v6379 = vunpack.c.l.b16 %v6044
    %v6380 = vunpack.c.h.b16 %v6044
    %v6381 = vunpack.c.l.b16 %v6045
    %v6382 = vunpack.c.h.b16 %v6045
    %v6383 = vunpack.c.l.b16 %v6046
    %v6384 = vunpack.c.h.b16 %v6046
    %v6385 = vunpack.c.l.b16 %v6047
    %v6386 = vunpack.c.h.b16 %v6047
    %v6387 = vunpack.c.l.b16 %v6048
    %v6388 = vunpack.c.h.b16 %v6048
    %v6389 = vunpack.c.l.b16 %v6049
    %v6390 = vunpack.c.h.b16 %v6049
    %v6391 = vunpack.c.l.b16 %v6050
    %v6392 = vunpack.c.h.b16 %v6050
    %v6393 = vunpack.c.l.b16 %v6051
    %v6394 = vunpack.c.h.b16 %v6051
    %v6395 = vunpack.c.l.b16 %v6052
    %v6396 = vunpack.c.h.b16 %v6052
    %v6397 = vunpack.c.l.b16 %v6053
    %v6398 = vunpack.c.h.b16 %v6053
    %v6399 = vunpack.c.l.b16 %v6054
    %v6400 = vunpack.c.h.b16 %v6054
    %v6401 = vunpack.c.l.b16 %v6055
    %v6402 = vunpack.c.h.b16 %v6055
    %v6403 = vunpack.c.l.b16 %v6056
    %v6404 = vunpack.c.h.b16 %v6056
    %v6405 = vunpack.c.l.b16 %v6057
    %v6406 = vunpack.c.h.b16 %v6057
    %v6407 = vunpack.c.l.b16 %v6058
    %v6408 = vunpack.c.h.b16 %v6058
    %v6409 = vunpack.c.l.b16 %v6059
    %v6410 = vunpack.c.h.b16 %v6059
    %v6411 = vunpack.c.l.b16 %v6060
    %v6412 = vunpack.c.h.b16 %v6060
    %v6413 = vunpack.c.l.b16 %v6061
    %v6414 = vunpack.c.h.b16 %v6061
    %v6415 = vunpack.c.l.b16 %v6062
    %v6416 = vunpack.c.h.b16 %v6062
    %v6417 = vunpack.c.l.b16 %v6063
    %v6418 = vunpack.c.h.b16 %v6063
    %v6419 = vunpack.c.l.b16 %v6064
    %v6420 = vunpack.c.h.b16 %v6064
    %v6421 = vunpack.c.l.b16 %v6065
    %v6422 = vunpack.c.h.b16 %v6065
    %v6423 = vunpack.c.l.b16 %v6066
    %v6424 = vunpack.c.h.b16 %v6066
    %v6425 = vunpack.c.l.b16 %v6067
    %v6426 = vunpack.c.h.b16 %v6067
    %v6427 = vunpack.c.l.b16 %v6068
    %v6428 = vunpack.c.h.b16 %v6068
    %v6429 = vunpack.c.l.b16 %v6069
    %v6430 = vunpack.c.h.b16 %v6069
    %v6431 = vunpack.c.l.b16 %v6070
    %v6432 = vunpack.c.h.b16 %v6070
    %v6433 = vunpack.c.l.b16 %v6071
    %v6434 = vunpack.c.h.b16 %v6071
    %v6435 = vunpack.c.l.b16 %v6072
    %v6436 = vunpack.c.h.b16 %v6072
    %v6437 = vunpack.c.l.b16 %v6073
    %v6438 = vunpack.c.h.b16 %v6073
    %v6439 = vunpack.c.l.b16 %v6074
    %v6440 = vunpack.c.h.b16 %v6074
    %v6441 = vunpack.c.l.b16 %v6075
    %v6442 = vunpack.c.h.b16 %v6075
    %v6443 = vunpack.c.l.b16 %v6076
    %v6444 = vunpack.c.h.b16 %v6076
    %v6445 = vunpack.c.l.b16 %v6077
    %v6446 = vunpack.c.h.b16 %v6077
    %v6447 = vunpack.c.l.b16 %v6078
    %v6448 = vunpack.c.h.b16 %v6078
    %v6449 = vunpack.c.l.b16 %v6079
    %v6450 = vunpack.c.h.b16 %v6079
    %v6451 = vunpack.c.l.b16 %v6080
    %v6452 = vunpack.c.h.b16 %v6080
    %v6453 = vunpack.c.l.b16 %v6081
    %v6454 = vunpack.c.h.b16 %v6081
    %v6455 = vunpack.c.l.b16 %v6082
    %v6456 = vunpack.c.h.b16 %v6082
    %v6457 = vunpack.c.l.b16 %v6083
    %v6458 = vunpack.c.h.b16 %v6083
    %v6459 = vunpack.c.l.b16 %v6084
    %v6460 = vunpack.c.h.b16 %v6084
    %v6461 = vunpack.c.l.b16 %v6085
    %v6462 = vunpack.c.h.b16 %v6085
    %v6463 = vunpack.c.l.b16 %v6086
    %v6464 = vunpack.c.h.b16 %v6086
    %v6465 = vunpack.c.l.b16 %v6087
    %v6466 = vunpack.c.h.b16 %v6087
    %v6467 = vunpack.c.l.b16 %v6088
    %v6468 = vunpack.c.h.b16 %v6088
    %v6469 = vunpack.c.l.b16 %v6089
    %v6470 = vunpack.c.h.b16 %v6089
    %v6471 = vunpack.c.l.b16 %v6090
    %v6472 = vunpack.c.h.b16 %v6090
    %v6473 = vunpack.c.l.b16 %v6091
    %v6474 = vunpack.c.h.b16 %v6091
    %v6475 = vunpack.c.l.b16 %v6092
    %v6476 = vunpack.c.h.b16 %v6092
    %v6477 = vunpack.c.l.b16 %v6093
    %v6478 = vunpack.c.h.b16 %v6093
    %v6479 = vunpack.c.l.b16 %v6094
    %v6480 = vunpack.c.h.b16 %v6094
    %v6481 = vunpack.c.l.b16 %v6095
    %v6482 = vunpack.c.h.b16 %v6095
    %v6483 = vunpack.c.l.b16 %v6096
    %v6484 = vunpack.c.h.b16 %v6096
    %v6485 = vunpack.c.l.b16 %v6097
    %v6486 = vunpack.c.h.b16 %v6097
    %v6487 = vunpack.c.l.b16 %v6098
    %v6488 = vunpack.c.h.b16 %v6098
    %v6489 = vunpack.c.l.b16 %v6099
    %v6490 = vunpack.c.h.b16 %v6099
    %v6491 = vunpack.c.l.b16 %v6100
    %v6492 = vunpack.c.h.b16 %v6100
    %v6493 = vunpack.c.l.b16 %v6101
    %v6494 = vunpack.c.h.b16 %v6101
    %v6495 = vunpack.c.l.b16 %v6102
    %v6496 = vunpack.c.h.b16 %v6102
    %v6497 = vunpack.c.l.b16 %v6103
    %v6498 = vunpack.c.h.b16 %v6103
    %v6499 = vunpack.c.l.b16 %v6104
    %v6500 = vunpack.c.h.b16 %v6104
    %v6501 = vpack.c.b16 %v6247, %v6245
    %v6502 = vpack.c.b16 %v6248, %v6246
    %v6503 = vpack.c.b16 %v6251, %v6249
    %v6504 = vpack.c.b16 %v6252, %v6250
    %v6505 = vpack.c.b16 %v6255, %v6253
    %v6506 = vpack.c.b16 %v6256, %v6254
    %v6507 = vpack.c.b16 %v6259, %v6257
    %v6508 = vpack.c.b16 %v6260, %v6258
    %v6509 = vpack.c.b16 %v6263, %v6261
    %v6510 = vpack.c.b16 %v6264, %v6262
    %v6511 = vpack.c.b16 %v6267, %v6265
    %v6512 = vpack.c.b16 %v6268, %v6266
    %v6513 = vpack.c.b16 %v6271, %v6269
    %v6514 = vpack.c.b16 %v6272, %v6270
    %v6515 = vpack.c.b16 %v6275, %v6273
    %v6516 = vpack.c.b16 %v6276, %v6274
    %v6517 = vpack.c.b16 %v6279, %v6277
    %v6518 = vpack.c.b16 %v6280, %v6278
    %v6519 = vpack.c.b16 %v6283, %v6281
    %v6520 = vpack.c.b16 %v6284, %v6282
    %v6521 = vpack.c.b16 %v6287, %v6285
    %v6522 = vpack.c.b16 %v6288, %v6286
    %v6523 = vpack.c.b16 %v6291, %v6289
    %v6524 = vpack.c.b16 %v6292, %v6290
    %v6525 = vpack.c.b16 %v6295, %v6293
    %v6526 = vpack.c.b16 %v6296, %v6294
    %v6527 = vpack.c.b16 %v6299, %v6297
    %v6528 = vpack.c.b16 %v6300, %v6298
    %v6529 = vpack.c.b16 %v6303, %v6301
    %v6530 = vpack.c.b16 %v6304, %v6302
    %v6531 = vpack.c.b16 %v6307, %v6305
    %v6532 = vpack.c.b16 %v6308, %v6306
    %v6533 = vpack.c.b16 %v6311, %v6309
    %v6534 = vpack.c.b16 %v6312, %v6310
    %v6535 = vpack.c.b16 %v6315, %v6313
    %v6536 = vpack.c.b16 %v6316, %v6314
    %v6537 = vpack.c.b16 %v6319, %v6317
    %v6538 = vpack.c.b16 %v6320, %v6318
    %v6539 = vpack.c.b16 %v6323, %v6321
    %v6540 = vpack.c.b16 %v6324, %v6322
    %v6541 = vpack.c.b16 %v6327, %v6325
    %v6542 = vpack.c.b16 %v6328, %v6326
    %v6543 = vpack.c.b16 %v6331, %v6329
    %v6544 = vpack.c.b16 %v6332, %v6330
    %v6545 = vpack.c.b16 %v6335, %v6333
    %v6546 = vpack.c.b16 %v6336, %v6334
    %v6547 = vpack.c.b16 %v6339, %v6337
    %v6548 = vpack.c.b16 %v6340, %v6338
    %v6549 = vpack.c.b16 %v6343, %v6341
    %v6550 = vpack.c.b16 %v6344, %v6342
    %v6551 = vpack.c.b16 %v6347, %v6345
    %v6552 = vpack.c.b16 %v6348, %v6346
    %v6553 = vpack.c.b16 %v6351, %v6349
    %v6554 = vpack.c.b16 %v6352, %v6350
    %v6555 = vpack.c.b16 %v6355, %v6353
    %v6556 = vpack.c.b16 %v6356, %v6354
    %v6557 = vpack.c.b16 %v6359, %v6357
    %v6558 = vpack.c.b16 %v6360, %v6358
    %v6559 = vpack.c.b16 %v6363, %v6361
    %v6560 = vpack.c.b16 %v6364, %v6362
    %v6561 = vpack.c.b16 %v6367, %v6365
    %v6562 = vpack.c.b16 %v6368, %v6366
    %v6563 = vpack.c.b16 %v6371, %v6369
    %v6564 = vpack.c.b16 %v6372, %v6370
    %v6565 = vpack.c.b16 %v6375, %v6373
    %v6566 = vpack.c.b16 %v6376, %v6374
    %v6567 = vpack.c.b16 %v6379, %v6377
    %v6568 = vpack.c.b16 %v6380, %v6378
    %v6569 = vpack.c.b16 %v6383, %v6381
    %v6570 = vpack.c.b16 %v6384, %v6382
    %v6571 = vpack.c.b16 %v6387, %v6385
    %v6572 = vpack.c.b16 %v6388, %v6386
    %v6573 = vpack.c.b16 %v6391, %v6389
    %v6574 = vpack.c.b16 %v6392, %v6390
    %v6575 = vpack.c.b16 %v6395, %v6393
    %v6576 = vpack.c.b16 %v6396, %v6394
    %v6577 = vpack.c.b16 %v6399, %v6397
    %v6578 = vpack.c.b16 %v6400, %v6398
    %v6579 = vpack.c.b16 %v6403, %v6401
    %v6580 = vpack.c.b16 %v6404, %v6402
    %v6581 = vpack.c.b16 %v6407, %v6405
    %v6582 = vpack.c.b16 %v6408, %v6406
    %v6583 = vpack.c.b16 %v6411, %v6409
    %v6584 = vpack.c.b16 %v6412, %v6410
    %v6585 = vpack.c.b16 %v6415, %v6413
    %v6586 = vpack.c.b16 %v6416, %v6414
    %v6587 = vpack.c.b16 %v6419, %v6417
    %v6588 = vpack.c.b16 %v6420, %v6418
    %v6589 = vpack.c.b16 %v6423, %v6421
    %v6590 = vpack.c.b16 %v6424, %v6422
    %v6591 = vpack.c.b16 %v6427, %v6425
    %v6592 = vpack.c.b16 %v6428, %v6426
    %v6593 = vpack.c.b16 %v6431, %v6429
    %v6594 = vpack.c.b16 %v6432, %v6430
    %v6595 = vpack.c.b16 %v6435, %v6433
    %v6596 = vpack.c.b16 %v6436, %v6434
    %v6597 = vpack.c.b16 %v6439, %v6437
    %v6598 = vpack.c.b16 %v6440, %v6438
    %v6599 = vpack.c.b16 %v6443, %v6441
    %v6600 = vpack.c.b16 %v6444, %v6442
    %v6601 = vpack.c.b16 %v6447, %v6445
    %v6602 = vpack.c.b16 %v6448, %v6446
    %v6603 = vpack.c.b16 %v6451, %v6449
    %v6604 = vpack.c.b16 %v6452, %v6450
    %v6605 = vpack.c.b16 %v6455, %v6453
    %v6606 = vpack.c.b16 %v6456, %v6454
    %v6607 = vpack.c.b16 %v6459, %v6457
    %v6608 = vpack.c.b16 %v6460, %v6458
    %v6609 = vpack.c.b16 %v6463, %v6461
    %v6610 = vpack.c.b16 %v6464, %v6462
    %v6611 = vpack.c.b16 %v6467, %v6465
    %v6612 = vpack.c.b16 %v6468, %v6466
    %v6613 = vpack.c.b16 %v6471, %v6469
    %v6614 = vpack.c.b16 %v6472, %v6470
    %v6615 = vpack.c.b16 %v6475, %v6473
    %v6616 = vpack.c.b16 %v6476, %v6474
    %v6617 = vpack.c.b16 %v6479, %v6477
    %v6618 = vpack.c.b16 %v6480, %v6478
    %v6619 = vpack.c.b16 %v6483, %v6481
    %v6620 = vpack.c.b16 %v6484, %v6482
    %v6621 = vpack.c.b16 %v6487, %v6485
    %v6622 = vpack.c.b16 %v6488, %v6486
    %v6623 = vpack.c.b16 %v6491, %v6489
    %v6624 = vpack.c.b16 %v6492, %v6490
    %v6625 = vpack.c.b16 %v6495, %v6493
    %v6626 = vpack.c.b16 %v6496, %v6494
    %v6627 = vpack.c.b16 %v6499, %v6497
    %v6628 = vpack.c.b16 %v6500, %v6498
    %6757 = vmatprep.subr.bf16.mxu0 %v6516
    %6758 = vmatpush1.bf16.msra.mxu0 %v6515
    %6759 = vmatprep.subr.bf16.mxu0 %v6514
    %6760 = vmatpush1.bf16.msra.mxu0 %v6513
    %6761 = vmatprep.subr.bf16.mxu0 %v6512
    %6762 = vmatpush1.bf16.msra.mxu0 %v6511
    %6763 = vmatprep.subr.bf16.mxu0 %v6510
    %6764 = vmatpush1.bf16.msra.mxu0 %v6509
    %6765 = vmatprep.subr.bf16.mxu0 %v6508
    %6766 = vmatpush1.bf16.msra.mxu0 %v6507
    %6767 = vmatprep.subr.bf16.mxu0 %v6506
    %6768 = vmatpush1.bf16.msra.mxu0 %v6505
    %6769 = vmatprep.subr.bf16.mxu0 %v6504
    %6770 = vmatpush1.bf16.msra.mxu0 %v6503
    %6771 = vmatprep.subr.bf16.mxu0 %v6502
    %6772 = vmatpush1.bf16.msra.mxu0 %v6501
    %6773 = vmatprep.subr.bf16.mxu0 %v6532
    %6774 = vmatpush2.bf16.msra.mxu0 %v6531
    %6775 = vmatprep.subr.bf16.mxu0 %v6530
    %6776 = vmatpush2.bf16.msra.mxu0 %v6529
    %6777 = vmatprep.subr.bf16.mxu0 %v6528
    %6778 = vmatpush2.bf16.msra.mxu0 %v6527
    %6779 = vmatprep.subr.bf16.mxu0 %v6526
    %6780 = vmatpush2.bf16.msra.mxu0 %v6525
    %6781 = vmatprep.subr.bf16.mxu0 %v6524
    %6782 = vmatpush2.bf16.msra.mxu0 %v6523
    %6783 = vmatprep.subr.bf16.mxu0 %v6522
    %6784 = vmatpush2.bf16.msra.mxu0 %v6521
    %6785 = vmatprep.subr.bf16.mxu0 %v6520
    %6786 = vmatpush2.bf16.msra.mxu0 %v6519
    %6787 = vmatprep.subr.bf16.mxu0 %v6518
    %6788 = vmatpush2.bf16.msra.mxu0 %v6517
    %6789 = vmatprep.mubr.bf16.mxu0 %v5970
    %6790 = vmatmul.mubr.bf16.gmra.mxu0 %v5969
    %v6791 = vpop.f32.mrf.mxu0
    %v6792 = vadd.f32 %v6110, %v6791
    %v6793 = vpop.f32.mrf.mxu0
    %v6794 = vadd.f32 %v6114, %v6793
    %v6795 = vpop.f32.mrf.mxu0
    %v6796 = vpop.f32.mrf.mxu0
    %6797 = vdwg.mxu0
    %6798 = vmatprep.subr.bf16.mxu0 %v6548
    %6799 = vmatpush1.bf16.msra.mxu0 %v6547
    %6800 = vmatprep.subr.bf16.mxu0 %v6546
    %6801 = vmatpush1.bf16.msra.mxu0 %v6545
    %6802 = vmatprep.subr.bf16.mxu0 %v6544
    %6803 = vmatpush1.bf16.msra.mxu0 %v6543
    %6804 = vmatprep.subr.bf16.mxu0 %v6542
    %6805 = vmatpush1.bf16.msra.mxu0 %v6541
    %6806 = vmatprep.subr.bf16.mxu0 %v6540
    %6807 = vmatpush1.bf16.msra.mxu0 %v6539
    %6808 = vmatprep.subr.bf16.mxu0 %v6538
    %6809 = vmatpush1.bf16.msra.mxu0 %v6537
    %6810 = vmatprep.subr.bf16.mxu0 %v6536
    %6811 = vmatpush1.bf16.msra.mxu0 %v6535
    %6812 = vmatprep.subr.bf16.mxu0 %v6534
    %6813 = vmatpush1.bf16.msra.mxu0 %v6533
    %6814 = vmatprep.subr.bf16.mxu0 %v6564
    %6815 = vmatpush2.bf16.msra.mxu0 %v6563
    %6816 = vmatprep.subr.bf16.mxu0 %v6562
    %6817 = vmatpush2.bf16.msra.mxu0 %v6561
    %6818 = vmatprep.subr.bf16.mxu0 %v6560
    %6819 = vmatpush2.bf16.msra.mxu0 %v6559
    %6820 = vmatprep.subr.bf16.mxu0 %v6558
    %6821 = vmatpush2.bf16.msra.mxu0 %v6557
    %6822 = vmatprep.subr.bf16.mxu0 %v6556
    %6823 = vmatpush2.bf16.msra.mxu0 %v6555
    %6824 = vmatprep.subr.bf16.mxu0 %v6554
    %6825 = vmatpush2.bf16.msra.mxu0 %v6553
    %6826 = vmatprep.subr.bf16.mxu0 %v6552
    %6827 = vmatpush2.bf16.msra.mxu0 %v6551
    %6828 = vmatprep.subr.bf16.mxu0 %v6550
    %6829 = vmatpush2.bf16.msra.mxu0 %v6549
    %6830 = vmatprep.mubr.bf16.mxu0 %v5972
    %6831 = vmatmul.mubr.bf16.gmra.mxu0 %v5971
    %v6832 = vpop.f32.mrf.mxu0
    %v6833 = vadd.f32 %v6792, %v6832
    %v6834 = vpop.f32.mrf.mxu0
    %v6835 = vadd.f32 %v6794, %v6834
    %v6836 = vpop.f32.mrf.mxu0
    %v6837 = vpop.f32.mrf.mxu0
    %6838 = vdwg.mxu0
    %6839 = vmatprep.subr.bf16.mxu0 %v6580
    %6840 = vmatpush1.bf16.msra.mxu0 %v6579
    %6841 = vmatprep.subr.bf16.mxu0 %v6578
    %6842 = vmatpush1.bf16.msra.mxu0 %v6577
    %6843 = vmatprep.subr.bf16.mxu0 %v6576
    %6844 = vmatpush1.bf16.msra.mxu0 %v6575
    %6845 = vmatprep.subr.bf16.mxu0 %v6574
    %6846 = vmatpush1.bf16.msra.mxu0 %v6573
    %6847 = vmatprep.subr.bf16.mxu0 %v6572
    %6848 = vmatpush1.bf16.msra.mxu0 %v6571
    %6849 = vmatprep.subr.bf16.mxu0 %v6570
    %6850 = vmatpush1.bf16.msra.mxu0 %v6569
    %6851 = vmatprep.subr.bf16.mxu0 %v6568
    %6852 = vmatpush1.bf16.msra.mxu0 %v6567
    %6853 = vmatprep.subr.bf16.mxu0 %v6566
    %6854 = vmatpush1.bf16.msra.mxu0 %v6565
    %6855 = vmatprep.subr.bf16.mxu0 %v6596
    %6856 = vmatpush2.bf16.msra.mxu0 %v6595
    %6857 = vmatprep.subr.bf16.mxu0 %v6594
    %6858 = vmatpush2.bf16.msra.mxu0 %v6593
    %6859 = vmatprep.subr.bf16.mxu0 %v6592
    %6860 = vmatpush2.bf16.msra.mxu0 %v6591
    %6861 = vmatprep.subr.bf16.mxu0 %v6590
    %6862 = vmatpush2.bf16.msra.mxu0 %v6589
    %6863 = vmatprep.subr.bf16.mxu0 %v6588
    %6864 = vmatpush2.bf16.msra.mxu0 %v6587
    %6865 = vmatprep.subr.bf16.mxu0 %v6586
    %6866 = vmatpush2.bf16.msra.mxu0 %v6585
    %6867 = vmatprep.subr.bf16.mxu0 %v6584
    %6868 = vmatpush2.bf16.msra.mxu0 %v6583
    %6869 = vmatprep.subr.bf16.mxu0 %v6582
    %6870 = vmatpush2.bf16.msra.mxu0 %v6581
    %6871 = vmatprep.mubr.bf16.mxu0 %v5974
    %6872 = vmatmul.mubr.bf16.gmra.mxu0 %v5973
    %v6873 = vpop.f32.mrf.mxu0
    %v6874 = vadd.f32 %v6833, %v6873
    %v6875 = vpop.f32.mrf.mxu0
    %v6876 = vadd.f32 %v6835, %v6875
    %v6877 = vpop.f32.mrf.mxu0
    %v6878 = vpop.f32.mrf.mxu0
    %6879 = vdwg.mxu0
    %6880 = vmatprep.subr.bf16.mxu0 %v6612
    %6881 = vmatpush1.bf16.msra.mxu0 %v6611
    %6882 = vmatprep.subr.bf16.mxu0 %v6610
    %6883 = vmatpush1.bf16.msra.mxu0 %v6609
    %6884 = vmatprep.subr.bf16.mxu0 %v6608
    %6885 = vmatpush1.bf16.msra.mxu0 %v6607
    %6886 = vmatprep.subr.bf16.mxu0 %v6606
    %6887 = vmatpush1.bf16.msra.mxu0 %v6605
    %6888 = vmatprep.subr.bf16.mxu0 %v6604
    %6889 = vmatpush1.bf16.msra.mxu0 %v6603
    %6890 = vmatprep.subr.bf16.mxu0 %v6602
    %6891 = vmatpush1.bf16.msra.mxu0 %v6601
    %6892 = vmatprep.subr.bf16.mxu0 %v6600
    %6893 = vmatpush1.bf16.msra.mxu0 %v6599
    %6894 = vmatprep.subr.bf16.mxu0 %v6598
    %6895 = vmatpush1.bf16.msra.mxu0 %v6597
    %6896 = vmatprep.subr.bf16.mxu0 %v6628
    %6897 = vmatpush2.bf16.msra.mxu0 %v6627
    %6898 = vmatprep.subr.bf16.mxu0 %v6626
    %6899 = vmatpush2.bf16.msra.mxu0 %v6625
    %6900 = vmatprep.subr.bf16.mxu0 %v6624
    %6901 = vmatpush2.bf16.msra.mxu0 %v6623
    %6902 = vmatprep.subr.bf16.mxu0 %v6622
    %6903 = vmatpush2.bf16.msra.mxu0 %v6621
    %6904 = vmatprep.subr.bf16.mxu0 %v6620
    %6905 = vmatpush2.bf16.msra.mxu0 %v6619
    %6906 = vmatprep.subr.bf16.mxu0 %v6618
    %6907 = vmatpush2.bf16.msra.mxu0 %v6617
    %6908 = vmatprep.subr.bf16.mxu0 %v6616
    %6909 = vmatpush2.bf16.msra.mxu0 %v6615
    %6910 = vmatprep.subr.bf16.mxu0 %v6614
    %6911 = vmatpush2.bf16.msra.mxu0 %v6613
    %6912 = vmatprep.mubr.bf16.mxu0 %v5976
    %6913 = vmatmul.mubr.bf16.gmra.mxu0 %v5975
    %v6914 = vpop.f32.mrf.mxu0
    %v6915 = vadd.f32 %v6874, %v6914
    %v6916 = vpop.f32.mrf.mxu0
    %v6917 = vadd.f32 %v6876, %v6916
    %v6918 = vpop.f32.mrf.mxu0
    %v6919 = vpop.f32.mrf.mxu0
    %6920 = vdwg.mxu0
    %v6921 = vmax.f32 %v6915, 0.0
    %v6922 = vmax.f32 %v6917, 0.0
    %v6923 = vld [vmem:[#allocation13] sm:$0x3]
    %v6925 = vlaneseq
    %v6926 = vshrl.u32 %v6925, 7
    %v6927 = vsub.s32 0, %v6926
    %v6928 = vrot.slane %v6923, %v6927
    %v6929 = vlaneseq
    %v6930 = vshrl.u32 %v6929, 7
    %v6931 = vsub.s32 1, %v6930
    %v6932 = vrot.slane %v6923, %v6931
    %v6935 = vmul.f32 %v6921, %v6928
    %v6936 = vmul.f32 %v6922, %v6932
    %v6937 = vadd.f32 %v6935, %v6936
    %6938 = vadd.xlane.f32.xlu0 %v6937
    %v6939 = vpop.xlane.xlu0 %6938
    %v6940 = vld [vmem:[#allocation2] sm:$0x1]
    %v6942 = vlaneseq
    %v6943 = vshrl.u32 %v6942, 7
    %v6944 = vsub.s32 0, %v6943
    %v6945 = vrot.slane %v6940, %v6944
    %v6947 = vadd.f32 %v6939, %v6945
    %vm6948 = vcmask 7168
    %6949 = vst.msk [vmem:[%s10] sm:$0xff] %vm6948, %v6947
    // Predicated region
    $region70: #{user_preference_estimator_forward.1} parent=1 // pred_check
      _
    $region71: #{user_preference_estimator_forward.1} parent=1 // pred_check_branch
      %6951 = sbr.rel (0) target = $region73
    $region72: #{user_preference_estimator_forward.1} parent=1 // pred_region
      _
    $region73: #{user_preference_estimator_forward.1} parent=1 // pred_fallthru
      _
    // Predicated region
    $region74: #{user_preference_estimator_forward.1} parent=1 // pred_check
      _
    $region75: #{user_preference_estimator_forward.1} parent=1 // pred_check_branch
      %6953 = sbr.rel (0) target = $region77
    $region76: #{user_preference_estimator_forward.1} parent=1 // pred_region
      _
    $region77: #{user_preference_estimator_forward.1} parent=1 // pred_fallthru
      _
    %6954 = vsyncpa [#allocation4], 1
    %6955 = vsyncpa [#allocation6], 1
    %6956 = vsyncpa [#allocation9], 1
    %6957 = vsyncpa [#allocation12], 1

</llo_original>
